<compile_context>
chip_gen: v7x
topology: tpu7x:2x2x1
jax: 0.10.0
libtpu: 0.0.40
codegen_flags: <defaults>
</compile_context>

<pallas_src>
import functools

import jax
import jax.numpy as jnp
from jax.experimental import pallas as pl
from jax.experimental.pallas import tpu as pltpu

_SUBLANE = 8


# ----------------------------------------------------------------------------
# Fused Pallas kernel: all LSTM layers (wavefront) + FC + sigmoid in one call
# ----------------------------------------------------------------------------
def _make_fused_kernel(Bp, T, D, H, num_layers, predict_steps):
    """Build the fused kernel for fixed static shapes.

    Kernel ref layout (inputs, outputs, scratch):
      refs[0]                  : x_tm     (T*Bp, D)   time-major, batch padded
      refs[1+3l .. 3+3l]       : wih_t (D_in,4H), whh_t (H,4H), bias (1,4H)
      refs[1+3L], refs[2+3L]   : fc_w_t (H,2), fc_b (1,2)
      refs[3+3L]               : out      (P*Bp, 2)   time-major rows
      refs[4+3L]               : last_h   (P*Bp, H)   VMEM scratch
    """
    P = predict_steps
    G = 4 * H

    def kernel(*refs):
        x_ref = refs[0]
        layer_refs = [(refs[1 + 3 * l], refs[2 + 3 * l], refs[3 + 3 * l])
                      for l in range(num_layers)]
        fcw_ref = refs[1 + 3 * num_layers]
        fcb_ref = refs[2 + 3 * num_layers]
        out_ref = refs[3 + 3 * num_layers]
        last_h = refs[4 + 3 * num_layers]          # VMEM scratch (P*Bp, H)

        # Weights loaded once; VMEM-resident and loop-invariant.
        wih = [layer_refs[l][0][...] for l in range(num_layers)]
        whh = [layer_refs[l][1][...] for l in range(num_layers)]
        bias = [layer_refs[l][2][...] for l in range(num_layers)]

        # Hoisted layer-0 input projection: one matmul for the whole sequence.
        gates_x0 = jnp.dot(x_ref[...], wih[0],
                           preferred_element_type=jnp.float32) + bias[0]

        # Constant lane mask selecting the cell-candidate ("g") gate lanes.
        lane = jax.lax.broadcasted_iota(jnp.int32, (Bp, G), 1)
        is_g = (lane >= 2 * H) & (lane < 3 * H)

        def lstm_cell(g, c_old):
            # Single sigmoid pass over all 4 gates; tanh(x) = 2*sigmoid(2x)-1.
            g_pre = jnp.where(is_g, 2.0 * g, g)          # VPU
            s = jax.nn.sigmoid(g_pre)                    # EUP pass #1
            acts = jnp.where(is_g, 2.0 * s - 1.0, s)     # VPU fixup
            i_g = acts[:, 0 * H:1 * H]
            f_g = acts[:, 1 * H:2 * H]
            g_g = acts[:, 2 * H:3 * H]
            o_g = acts[:, 3 * H:4 * H]
            c_new = f_g * c_old + i_g * g_g
            h_new = o_g * jnp.tanh(c_new)                # EUP pass #2
            return h_new, c_new

        h = [jnp.zeros((Bp, H), jnp.float32) for _ in range(num_layers)]
        c = [jnp.zeros((Bp, H), jnp.float32) for _ in range(num_layers)]

        # Wavefront over (layer, time): wave s runs layer l at t = s - l.
        # Layer l reads h[l-1] produced on wave s-1 (== layer l-1 at time t),
        # so all cells inside one wave are independent -> co-issuable.
        for s in range(T + num_layers - 1):
            new_h = list(h)
            new_c = list(c)
            for l in range(num_layers):
                t = s - l
                if t < 0 or t >= T:
                    continue
                if l == 0:
                    g = (gates_x0[t * Bp:(t + 1) * Bp, :]
                         + jnp.dot(h[0], whh[0],
                                   preferred_element_type=jnp.float32))
                else:
                    # Two independent tiny MXU pushes (no lane-concat needed).
                    g = (jnp.dot(h[l - 1], wih[l],
                                 preferred_element_type=jnp.float32)
                         + jnp.dot(h[l], whh[l],
                                   preferred_element_type=jnp.float32)
                         + bias[l])
                hn, cn = lstm_cell(g, c[l])
                new_h[l] = hn
                new_c[l] = cn
                # Last layer's h for the final P steps -> VMEM scratch
                # (value dies immediately; no long live ranges / concat).
                if l == num_layers - 1 and t >= T - P:
                    last_h[pl.ds((t - (T - P)) * Bp, Bp), :] = hn
            h, c = new_h, new_c

        # FC + sigmoid only on the last P timesteps (time-major rows).
        y = jax.nn.sigmoid(
            jnp.dot(last_h[...], fcw_ref[...],
                    preferred_element_type=jnp.float32) + fcb_ref[...])
        out_ref[...] = y.astype(out_ref.dtype)

    return kernel


# ----------------------------------------------------------------------------
# Forward wrapper
# ----------------------------------------------------------------------------
@functools.partial(jax.jit, static_argnames=("predict_steps",))
def model_lstm_forward(x, lstm_params, fc_w_t, fc_b, *, predict_steps):
    """x: (B, T, D) batch_first. Returns (B, predict_steps, 2)."""
    B, T, D = x.shape
    H = lstm_params[0][1].shape[0]
    num_layers = len(lstm_params)
    P = predict_steps

    # Pad batch to a full sublane group: every per-step slice / matmul LHS is
    # an (8, K) sublane-aligned tile.  Padded rows never mix with real rows
    # (all ops are row-wise in batch) and are stripped on return.
    Bp = max(_SUBLANE, ((B + _SUBLANE - 1) // _SUBLANE) * _SUBLANE)
    x_p = jnp.zeros((Bp, T, D), jnp.float32).at[:B].set(x)
    # Time-major layout plumbing done here on a tiny tensor, not in-kernel.
    x_tm = jnp.transpose(x_p, (1, 0, 2)).reshape(T * Bp, D)

    flat_args = [x_tm]
    for (wih_t, whh_t, b) in lstm_params:
        flat_args += [wih_t, whh_t, b.reshape(1, -1)]
    flat_args += [fc_w_t, fc_b.reshape(1, -1)]

    kernel = _make_fused_kernel(Bp, T, D, H, num_layers, P)
    vmem = pl.BlockSpec(memory_space=pltpu.MemorySpace.VMEM)
    # Grid-free call: whole <100 KiB working set is VMEM-resident for the call.
    y = pl.pallas_call(
        kernel,
        out_shape=jax.ShapeDtypeStruct((P * Bp, 2), jnp.float32),
        in_specs=[vmem] * len(flat_args),
        out_specs=vmem,
        scratch_shapes=[pltpu.VMEM((P * Bp, H), jnp.float32)],
    )(*flat_args)

    # Kernel emits time-major rows [(t, b)]; tiny reorder + pad-strip outside.
    return jnp.transpose(y.reshape(P, Bp, 2)[:, :B, :], (1, 0, 2))


# ----------------------------------------------------------------------------
# Pure-JAX reference (mirrors nn.LSTM eval-mode semantics) for correctness
# ----------------------------------------------------------------------------
def reference_forward(x, lstm_params, fc_w_t, fc_b, predict_steps):
    B, T, _ = x.shape
    h_seq = x
    for (wih_t, whh_t, b) in lstm_params:
        H = whh_t.shape[0]
        h0 = jnp.zeros((B, H), jnp.float32)
        c0 = jnp.zeros((B, H), jnp.float32)

        def step(carry, x_t):
            h, c = carry
            gates = x_t @ wih_t + h @ whh_t + b
            i = jax.nn.sigmoid(gates[:, 0 * H:1 * H])
            f = jax.nn.sigmoid(gates[:, 1 * H:2 * H])
            g = jnp.tanh(gates[:, 2 * H:3 * H])
            o = jax.nn.sigmoid(gates[:, 3 * H:4 * H])
            c = f * c + i * g
            h = o * jnp.tanh(c)
            return (h, c), h

        _, outs = jax.lax.scan(step, (h0, c0), jnp.transpose(h_seq, (1, 0, 2)))
        h_seq = jnp.transpose(outs, (1, 0, 2))
    flat = h_seq.reshape(B * T, -1)
    y = jax.nn.sigmoid(flat @ fc_w_t + fc_b)
    return y.reshape(B, T, 2)[:, -predict_steps:, :]


# ----------------------------------------------------------------------------
# Main
# ----------------------------------------------------------------------------
if __name__ == "__main__":
    # Model hyper-params implied by the PyTorch module.
    B, T, D = 2, 8, 4          # batch, sequence length, input_size
    H = 32                     # hidden_size
    NUM_LAYERS = 2
    PREDICT_STEPS = 4

    key = jax.random.PRNGKey(0)
    keys = jax.random.split(key, 4 * NUM_LAYERS + 3)

    # Deterministic init (PyTorch nn.LSTM default: U(-1/sqrt(H), 1/sqrt(H))).
    k = 1.0 / jnp.sqrt(jnp.float32(H))
    lstm_params = []
    for layer in range(NUM_LAYERS):
        d_in = D if layer == 0 else H
        w_ih = jax.random.uniform(keys[4 * layer + 0], (4 * H, d_in), jnp.float32, -k, k)
        w_hh = jax.random.uniform(keys[4 * layer + 1], (4 * H, H), jnp.float32, -k, k)
        b_ih = jax.random.uniform(keys[4 * layer + 2], (4 * H,), jnp.float32, -k, k)
        b_hh = jax.random.uniform(keys[4 * layer + 3], (4 * H,), jnp.float32, -k, k)
        # Transposed for right-multiplication in the kernel; biases folded.
        lstm_params.append((w_ih.T, w_hh.T, b_ih + b_hh))

    fc_w = jax.random.uniform(keys[-3], (2, H), jnp.float32, -k, k)
    fc_b = jax.random.uniform(keys[-2], (2,), jnp.float32, -k, k)
    fc_w_t = fc_w.T

    # Example input (B, T, D) batch_first, matching the PyTorch layout.
    x = jax.random.normal(keys[-1], (B, T, D), jnp.float32)

    out = model_lstm_forward(x, lstm_params, fc_w_t, fc_b,
                             predict_steps=PREDICT_STEPS)
    out = jax.block_until_ready(out)

    ref = reference_forward(x, lstm_params, fc_w_t, fc_b, PREDICT_STEPS)
    assert out.shape == (B, PREDICT_STEPS, 2), out.shape
    assert jnp.allclose(out, ref, atol=1e-5, rtol=1e-5), "mismatch vs reference"

    print("KERNEL_OK")
</pallas_src>

<mosaic_0001>
module attributes {stable_mosaic.version = 11 : i64} {
  func.func @kernel(%arg0: memref<64x4xf32, #tpu.memory_space<vmem>>, %arg1: memref<4x128xf32, #tpu.memory_space<vmem>>, %arg2: memref<32x128xf32, #tpu.memory_space<vmem>>, %arg3: memref<1x128xf32, #tpu.memory_space<vmem>>, %arg4: memref<32x128xf32, #tpu.memory_space<vmem>>, %arg5: memref<32x128xf32, #tpu.memory_space<vmem>>, %arg6: memref<1x128xf32, #tpu.memory_space<vmem>>, %arg7: memref<32x2xf32, #tpu.memory_space<vmem>>, %arg8: memref<1x2xf32, #tpu.memory_space<vmem>>, %arg9: memref<32x2xf32, #tpu.memory_space<vmem>>, %arg10: memref<32x32xf32, #tpu.memory_space<vmem>>) attributes {dimension_semantics = [], scalar_prefetch = 0 : i64, scratch_operands = 1 : i64, tpu.core_type = #tpu.core_type<tc>} {
    %c0 = arith.constant 0 : index
    %c0_0 = arith.constant 0 : index
    %0 = vector.load %arg1[%c0, %c0_0] : memref<4x128xf32, #tpu.memory_space<vmem>>, vector<4x128xf32>
    %c0_1 = arith.constant 0 : index
    %c0_2 = arith.constant 0 : index
    %1 = vector.load %arg4[%c0_1, %c0_2] : memref<32x128xf32, #tpu.memory_space<vmem>>, vector<32x128xf32>
    %c0_3 = arith.constant 0 : index
    %c0_4 = arith.constant 0 : index
    %2 = vector.load %arg2[%c0_3, %c0_4] : memref<32x128xf32, #tpu.memory_space<vmem>>, vector<32x128xf32>
    %c0_5 = arith.constant 0 : index
    %c0_6 = arith.constant 0 : index
    %3 = vector.load %arg5[%c0_5, %c0_6] : memref<32x128xf32, #tpu.memory_space<vmem>>, vector<32x128xf32>
    %c0_7 = arith.constant 0 : index
    %c0_8 = arith.constant 0 : index
    %4 = vector.load %arg3[%c0_7, %c0_8] : memref<1x128xf32, #tpu.memory_space<vmem>>, vector<1x128xf32>
    %c0_9 = arith.constant 0 : index
    %c0_10 = arith.constant 0 : index
    %5 = vector.load %arg6[%c0_9, %c0_10] : memref<1x128xf32, #tpu.memory_space<vmem>>, vector<1x128xf32>
    %c0_11 = arith.constant 0 : index
    %c0_12 = arith.constant 0 : index
    %6 = vector.load %arg0[%c0_11, %c0_12] : memref<64x4xf32, #tpu.memory_space<vmem>>, vector<64x4xf32>
    %cst = arith.constant dense<0.000000e+00> : vector<64x128xf32>
    %7 = tpu.matmul %6, %0, %cst {dimension_numbers = #tpu.dot_dimension_numbers<[1], [0], [0], [1], [0, 0, 1, 1], [], []>} : vector<64x4xf32>, vector<4x128xf32>, vector<64x128xf32> -> vector<64x128xf32>
    %8 = vector.broadcast %4 : vector<1x128xf32> to vector<64x128xf32>
    %9 = arith.addf %7, %8 : vector<64x128xf32>
    %10 = tpu.iota {dimensions = array<i32: 1>} : vector<8x128xi32>
    %c64_i32 = arith.constant 64 : i32
    %11 = vector.broadcast %c64_i32 : i32 to vector<8x128xi32>
    %12 = arith.cmpi sge, %10, %11 : vector<8x128xi32>
    %c96_i32 = arith.constant 96 : i32
    %13 = vector.broadcast %c96_i32 : i32 to vector<8x128xi32>
    %14 = arith.cmpi slt, %10, %13 : vector<8x128xi32>
    %15 = arith.andi %12, %14 : vector<8x128xi1>
    %cst_13 = arith.constant 0.000000e+00 : f32
    %16 = vector.broadcast %cst_13 : f32 to vector<8x32xf32>
    %cst_14 = arith.constant 0.000000e+00 : f32
    %17 = vector.broadcast %cst_14 : f32 to vector<8x32xf32>
    %cst_15 = arith.constant 0.000000e+00 : f32
    %18 = vector.broadcast %cst_15 : f32 to vector<8x32xf32>
    %cst_16 = arith.constant 0.000000e+00 : f32
    %19 = vector.broadcast %cst_16 : f32 to vector<8x32xf32>
    %20 = vector.extract_strided_slice %9 {offsets = [0, 0], sizes = [8, 128], strides = [1, 1]} : vector<64x128xf32> to vector<8x128xf32>
    %cst_17 = arith.constant dense<0.000000e+00> : vector<8x128xf32>
    %21 = tpu.matmul %16, %2, %cst_17 {dimension_numbers = #tpu.dot_dimension_numbers<[1], [0], [0], [1], [0, 0, 1, 1], [], []>} : vector<8x32xf32>, vector<32x128xf32>, vector<8x128xf32> -> vector<8x128xf32>
    %22 = arith.addf %20, %21 : vector<8x128xf32>
    %cst_18 = arith.constant 2.000000e+00 : f32
    %23 = vector.broadcast %cst_18 : f32 to vector<8x128xf32>
    %24 = arith.mulf %23, %22 : vector<8x128xf32>
    %25 = arith.select %15, %24, %22 : vector<8x128xi1>, vector<8x128xf32>
    %26 = arith.negf %25 : vector<8x128xf32>
    %27 = math.exp %26 : vector<8x128xf32>
    %cst_19 = arith.constant 1.000000e+00 : f32
    %28 = vector.broadcast %cst_19 : f32 to vector<8x128xf32>
    %29 = arith.addf %28, %27 : vector<8x128xf32>
    %30 = arith.divf %28, %29 : vector<8x128xf32>
    %cst_20 = arith.constant 2.000000e+00 : f32
    %31 = vector.broadcast %cst_20 : f32 to vector<8x128xf32>
    %32 = arith.mulf %31, %30 : vector<8x128xf32>
    %cst_21 = arith.constant 1.000000e+00 : f32
    %33 = vector.broadcast %cst_21 : f32 to vector<8x128xf32>
    %34 = arith.subf %32, %33 : vector<8x128xf32>
    %35 = arith.select %15, %34, %30 : vector<8x128xi1>, vector<8x128xf32>
    %36 = vector.extract_strided_slice %35 {offsets = [0, 0], sizes = [8, 32], strides = [1, 1]} : vector<8x128xf32> to vector<8x32xf32>
    %37 = vector.extract_strided_slice %35 {offsets = [0, 32], sizes = [8, 32], strides = [1, 1]} : vector<8x128xf32> to vector<8x32xf32>
    %38 = vector.extract_strided_slice %35 {offsets = [0, 64], sizes = [8, 32], strides = [1, 1]} : vector<8x128xf32> to vector<8x32xf32>
    %39 = vector.extract_strided_slice %35 {offsets = [0, 96], sizes = [8, 32], strides = [1, 1]} : vector<8x128xf32> to vector<8x32xf32>
    %40 = arith.mulf %37, %18 : vector<8x32xf32>
    %41 = arith.mulf %36, %38 : vector<8x32xf32>
    %42 = arith.addf %40, %41 : vector<8x32xf32>
    %43 = math.tanh %42 : vector<8x32xf32>
    %44 = arith.mulf %39, %43 : vector<8x32xf32>
    %45 = vector.extract_strided_slice %9 {offsets = [8, 0], sizes = [8, 128], strides = [1, 1]} : vector<64x128xf32> to vector<8x128xf32>
    %cst_22 = arith.constant dense<0.000000e+00> : vector<8x128xf32>
    %46 = tpu.matmul %44, %2, %cst_22 {dimension_numbers = #tpu.dot_dimension_numbers<[1], [0], [0], [1], [0, 0, 1, 1], [], []>} : vector<8x32xf32>, vector<32x128xf32>, vector<8x128xf32> -> vector<8x128xf32>
    %47 = arith.addf %45, %46 : vector<8x128xf32>
    %cst_23 = arith.constant 2.000000e+00 : f32
    %48 = vector.broadcast %cst_23 : f32 to vector<8x128xf32>
    %49 = arith.mulf %48, %47 : vector<8x128xf32>
    %50 = arith.select %15, %49, %47 : vector<8x128xi1>, vector<8x128xf32>
    %51 = arith.negf %50 : vector<8x128xf32>
    %52 = math.exp %51 : vector<8x128xf32>
    %cst_24 = arith.constant 1.000000e+00 : f32
    %53 = vector.broadcast %cst_24 : f32 to vector<8x128xf32>
    %54 = arith.addf %53, %52 : vector<8x128xf32>
    %55 = arith.divf %53, %54 : vector<8x128xf32>
    %cst_25 = arith.constant 2.000000e+00 : f32
    %56 = vector.broadcast %cst_25 : f32 to vector<8x128xf32>
    %57 = arith.mulf %56, %55 : vector<8x128xf32>
    %cst_26 = arith.constant 1.000000e+00 : f32
    %58 = vector.broadcast %cst_26 : f32 to vector<8x128xf32>
    %59 = arith.subf %57, %58 : vector<8x128xf32>
    %60 = arith.select %15, %59, %55 : vector<8x128xi1>, vector<8x128xf32>
    %61 = vector.extract_strided_slice %60 {offsets = [0, 0], sizes = [8, 32], strides = [1, 1]} : vector<8x128xf32> to vector<8x32xf32>
    %62 = vector.extract_strided_slice %60 {offsets = [0, 32], sizes = [8, 32], strides = [1, 1]} : vector<8x128xf32> to vector<8x32xf32>
    %63 = vector.extract_strided_slice %60 {offsets = [0, 64], sizes = [8, 32], strides = [1, 1]} : vector<8x128xf32> to vector<8x32xf32>
    %64 = vector.extract_strided_slice %60 {offsets = [0, 96], sizes = [8, 32], strides = [1, 1]} : vector<8x128xf32> to vector<8x32xf32>
    %65 = arith.mulf %62, %42 : vector<8x32xf32>
    %66 = arith.mulf %61, %63 : vector<8x32xf32>
    %67 = arith.addf %65, %66 : vector<8x32xf32>
    %68 = math.tanh %67 : vector<8x32xf32>
    %69 = arith.mulf %64, %68 : vector<8x32xf32>
    %cst_27 = arith.constant dense<0.000000e+00> : vector<8x128xf32>
    %70 = tpu.matmul %44, %1, %cst_27 {dimension_numbers = #tpu.dot_dimension_numbers<[1], [0], [0], [1], [0, 0, 1, 1], [], []>} : vector<8x32xf32>, vector<32x128xf32>, vector<8x128xf32> -> vector<8x128xf32>
    %cst_28 = arith.constant dense<0.000000e+00> : vector<8x128xf32>
    %71 = tpu.matmul %17, %3, %cst_28 {dimension_numbers = #tpu.dot_dimension_numbers<[1], [0], [0], [1], [0, 0, 1, 1], [], []>} : vector<8x32xf32>, vector<32x128xf32>, vector<8x128xf32> -> vector<8x128xf32>
    %72 = arith.addf %70, %71 : vector<8x128xf32>
    %73 = vector.broadcast %5 : vector<1x128xf32> to vector<8x128xf32>
    %74 = arith.addf %72, %73 : vector<8x128xf32>
    %cst_29 = arith.constant 2.000000e+00 : f32
    %75 = vector.broadcast %cst_29 : f32 to vector<8x128xf32>
    %76 = arith.mulf %75, %74 : vector<8x128xf32>
    %77 = arith.select %15, %76, %74 : vector<8x128xi1>, vector<8x128xf32>
    %78 = arith.negf %77 : vector<8x128xf32>
    %79 = math.exp %78 : vector<8x128xf32>
    %cst_30 = arith.constant 1.000000e+00 : f32
    %80 = vector.broadcast %cst_30 : f32 to vector<8x128xf32>
    %81 = arith.addf %80, %79 : vector<8x128xf32>
    %82 = arith.divf %80, %81 : vector<8x128xf32>
    %cst_31 = arith.constant 2.000000e+00 : f32
    %83 = vector.broadcast %cst_31 : f32 to vector<8x128xf32>
    %84 = arith.mulf %83, %82 : vector<8x128xf32>
    %cst_32 = arith.constant 1.000000e+00 : f32
    %85 = vector.broadcast %cst_32 : f32 to vector<8x128xf32>
    %86 = arith.subf %84, %85 : vector<8x128xf32>
    %87 = arith.select %15, %86, %82 : vector<8x128xi1>, vector<8x128xf32>
    %88 = vector.extract_strided_slice %87 {offsets = [0, 0], sizes = [8, 32], strides = [1, 1]} : vector<8x128xf32> to vector<8x32xf32>
    %89 = vector.extract_strided_slice %87 {offsets = [0, 32], sizes = [8, 32], strides = [1, 1]} : vector<8x128xf32> to vector<8x32xf32>
    %90 = vector.extract_strided_slice %87 {offsets = [0, 64], sizes = [8, 32], strides = [1, 1]} : vector<8x128xf32> to vector<8x32xf32>
    %91 = vector.extract_strided_slice %87 {offsets = [0, 96], sizes = [8, 32], strides = [1, 1]} : vector<8x128xf32> to vector<8x32xf32>
    %92 = arith.mulf %89, %19 : vector<8x32xf32>
    %93 = arith.mulf %88, %90 : vector<8x32xf32>
    %94 = arith.addf %92, %93 : vector<8x32xf32>
    %95 = math.tanh %94 : vector<8x32xf32>
    %96 = arith.mulf %91, %95 : vector<8x32xf32>
    %97 = vector.extract_strided_slice %9 {offsets = [16, 0], sizes = [8, 128], strides = [1, 1]} : vector<64x128xf32> to vector<8x128xf32>
    %cst_33 = arith.constant dense<0.000000e+00> : vector<8x128xf32>
    %98 = tpu.matmul %69, %2, %cst_33 {dimension_numbers = #tpu.dot_dimension_numbers<[1], [0], [0], [1], [0, 0, 1, 1], [], []>} : vector<8x32xf32>, vector<32x128xf32>, vector<8x128xf32> -> vector<8x128xf32>
    %99 = arith.addf %97, %98 : vector<8x128xf32>
    %cst_34 = arith.constant 2.000000e+00 : f32
    %100 = vector.broadcast %cst_34 : f32 to vector<8x128xf32>
    %101 = arith.mulf %100, %99 : vector<8x128xf32>
    %102 = arith.select %15, %101, %99 : vector<8x128xi1>, vector<8x128xf32>
    %103 = arith.negf %102 : vector<8x128xf32>
    %104 = math.exp %103 : vector<8x128xf32>
    %cst_35 = arith.constant 1.000000e+00 : f32
    %105 = vector.broadcast %cst_35 : f32 to vector<8x128xf32>
    %106 = arith.addf %105, %104 : vector<8x128xf32>
    %107 = arith.divf %105, %106 : vector<8x128xf32>
    %cst_36 = arith.constant 2.000000e+00 : f32
    %108 = vector.broadcast %cst_36 : f32 to vector<8x128xf32>
    %109 = arith.mulf %108, %107 : vector<8x128xf32>
    %cst_37 = arith.constant 1.000000e+00 : f32
    %110 = vector.broadcast %cst_37 : f32 to vector<8x128xf32>
    %111 = arith.subf %109, %110 : vector<8x128xf32>
    %112 = arith.select %15, %111, %107 : vector<8x128xi1>, vector<8x128xf32>
    %113 = vector.extract_strided_slice %112 {offsets = [0, 0], sizes = [8, 32], strides = [1, 1]} : vector<8x128xf32> to vector<8x32xf32>
    %114 = vector.extract_strided_slice %112 {offsets = [0, 32], sizes = [8, 32], strides = [1, 1]} : vector<8x128xf32> to vector<8x32xf32>
    %115 = vector.extract_strided_slice %112 {offsets = [0, 64], sizes = [8, 32], strides = [1, 1]} : vector<8x128xf32> to vector<8x32xf32>
    %116 = vector.extract_strided_slice %112 {offsets = [0, 96], sizes = [8, 32], strides = [1, 1]} : vector<8x128xf32> to vector<8x32xf32>
    %117 = arith.mulf %114, %67 : vector<8x32xf32>
    %118 = arith.mulf %113, %115 : vector<8x32xf32>
    %119 = arith.addf %117, %118 : vector<8x32xf32>
    %120 = math.tanh %119 : vector<8x32xf32>
    %121 = arith.mulf %116, %120 : vector<8x32xf32>
    %cst_38 = arith.constant dense<0.000000e+00> : vector<8x128xf32>
    %122 = tpu.matmul %69, %1, %cst_38 {dimension_numbers = #tpu.dot_dimension_numbers<[1], [0], [0], [1], [0, 0, 1, 1], [], []>} : vector<8x32xf32>, vector<32x128xf32>, vector<8x128xf32> -> vector<8x128xf32>
    %cst_39 = arith.constant dense<0.000000e+00> : vector<8x128xf32>
    %123 = tpu.matmul %96, %3, %cst_39 {dimension_numbers = #tpu.dot_dimension_numbers<[1], [0], [0], [1], [0, 0, 1, 1], [], []>} : vector<8x32xf32>, vector<32x128xf32>, vector<8x128xf32> -> vector<8x128xf32>
    %124 = arith.addf %122, %123 : vector<8x128xf32>
    %125 = vector.broadcast %5 : vector<1x128xf32> to vector<8x128xf32>
    %126 = arith.addf %124, %125 : vector<8x128xf32>
    %cst_40 = arith.constant 2.000000e+00 : f32
    %127 = vector.broadcast %cst_40 : f32 to vector<8x128xf32>
    %128 = arith.mulf %127, %126 : vector<8x128xf32>
    %129 = arith.select %15, %128, %126 : vector<8x128xi1>, vector<8x128xf32>
    %130 = arith.negf %129 : vector<8x128xf32>
    %131 = math.exp %130 : vector<8x128xf32>
    %cst_41 = arith.constant 1.000000e+00 : f32
    %132 = vector.broadcast %cst_41 : f32 to vector<8x128xf32>
    %133 = arith.addf %132, %131 : vector<8x128xf32>
    %134 = arith.divf %132, %133 : vector<8x128xf32>
    %cst_42 = arith.constant 2.000000e+00 : f32
    %135 = vector.broadcast %cst_42 : f32 to vector<8x128xf32>
    %136 = arith.mulf %135, %134 : vector<8x128xf32>
    %cst_43 = arith.constant 1.000000e+00 : f32
    %137 = vector.broadcast %cst_43 : f32 to vector<8x128xf32>
    %138 = arith.subf %136, %137 : vector<8x128xf32>
    %139 = arith.select %15, %138, %134 : vector<8x128xi1>, vector<8x128xf32>
    %140 = vector.extract_strided_slice %139 {offsets = [0, 0], sizes = [8, 32], strides = [1, 1]} : vector<8x128xf32> to vector<8x32xf32>
    %141 = vector.extract_strided_slice %139 {offsets = [0, 32], sizes = [8, 32], strides = [1, 1]} : vector<8x128xf32> to vector<8x32xf32>
    %142 = vector.extract_strided_slice %139 {offsets = [0, 64], sizes = [8, 32], strides = [1, 1]} : vector<8x128xf32> to vector<8x32xf32>
    %143 = vector.extract_strided_slice %139 {offsets = [0, 96], sizes = [8, 32], strides = [1, 1]} : vector<8x128xf32> to vector<8x32xf32>
    %144 = arith.mulf %141, %94 : vector<8x32xf32>
    %145 = arith.mulf %140, %142 : vector<8x32xf32>
    %146 = arith.addf %144, %145 : vector<8x32xf32>
    %147 = math.tanh %146 : vector<8x32xf32>
    %148 = arith.mulf %143, %147 : vector<8x32xf32>
    %149 = vector.extract_strided_slice %9 {offsets = [24, 0], sizes = [8, 128], strides = [1, 1]} : vector<64x128xf32> to vector<8x128xf32>
    %cst_44 = arith.constant dense<0.000000e+00> : vector<8x128xf32>
    %150 = tpu.matmul %121, %2, %cst_44 {dimension_numbers = #tpu.dot_dimension_numbers<[1], [0], [0], [1], [0, 0, 1, 1], [], []>} : vector<8x32xf32>, vector<32x128xf32>, vector<8x128xf32> -> vector<8x128xf32>
    %151 = arith.addf %149, %150 : vector<8x128xf32>
    %cst_45 = arith.constant 2.000000e+00 : f32
    %152 = vector.broadcast %cst_45 : f32 to vector<8x128xf32>
    %153 = arith.mulf %152, %151 : vector<8x128xf32>
    %154 = arith.select %15, %153, %151 : vector<8x128xi1>, vector<8x128xf32>
    %155 = arith.negf %154 : vector<8x128xf32>
    %156 = math.exp %155 : vector<8x128xf32>
    %cst_46 = arith.constant 1.000000e+00 : f32
    %157 = vector.broadcast %cst_46 : f32 to vector<8x128xf32>
    %158 = arith.addf %157, %156 : vector<8x128xf32>
    %159 = arith.divf %157, %158 : vector<8x128xf32>
    %cst_47 = arith.constant 2.000000e+00 : f32
    %160 = vector.broadcast %cst_47 : f32 to vector<8x128xf32>
    %161 = arith.mulf %160, %159 : vector<8x128xf32>
    %cst_48 = arith.constant 1.000000e+00 : f32
    %162 = vector.broadcast %cst_48 : f32 to vector<8x128xf32>
    %163 = arith.subf %161, %162 : vector<8x128xf32>
    %164 = arith.select %15, %163, %159 : vector<8x128xi1>, vector<8x128xf32>
    %165 = vector.extract_strided_slice %164 {offsets = [0, 0], sizes = [8, 32], strides = [1, 1]} : vector<8x128xf32> to vector<8x32xf32>
    %166 = vector.extract_strided_slice %164 {offsets = [0, 32], sizes = [8, 32], strides = [1, 1]} : vector<8x128xf32> to vector<8x32xf32>
    %167 = vector.extract_strided_slice %164 {offsets = [0, 64], sizes = [8, 32], strides = [1, 1]} : vector<8x128xf32> to vector<8x32xf32>
    %168 = vector.extract_strided_slice %164 {offsets = [0, 96], sizes = [8, 32], strides = [1, 1]} : vector<8x128xf32> to vector<8x32xf32>
    %169 = arith.mulf %166, %119 : vector<8x32xf32>
    %170 = arith.mulf %165, %167 : vector<8x32xf32>
    %171 = arith.addf %169, %170 : vector<8x32xf32>
    %172 = math.tanh %171 : vector<8x32xf32>
    %173 = arith.mulf %168, %172 : vector<8x32xf32>
    %cst_49 = arith.constant dense<0.000000e+00> : vector<8x128xf32>
    %174 = tpu.matmul %121, %1, %cst_49 {dimension_numbers = #tpu.dot_dimension_numbers<[1], [0], [0], [1], [0, 0, 1, 1], [], []>} : vector<8x32xf32>, vector<32x128xf32>, vector<8x128xf32> -> vector<8x128xf32>
    %cst_50 = arith.constant dense<0.000000e+00> : vector<8x128xf32>
    %175 = tpu.matmul %148, %3, %cst_50 {dimension_numbers = #tpu.dot_dimension_numbers<[1], [0], [0], [1], [0, 0, 1, 1], [], []>} : vector<8x32xf32>, vector<32x128xf32>, vector<8x128xf32> -> vector<8x128xf32>
    %176 = arith.addf %174, %175 : vector<8x128xf32>
    %177 = vector.broadcast %5 : vector<1x128xf32> to vector<8x128xf32>
    %178 = arith.addf %176, %177 : vector<8x128xf32>
    %cst_51 = arith.constant 2.000000e+00 : f32
    %179 = vector.broadcast %cst_51 : f32 to vector<8x128xf32>
    %180 = arith.mulf %179, %178 : vector<8x128xf32>
    %181 = arith.select %15, %180, %178 : vector<8x128xi1>, vector<8x128xf32>
    %182 = arith.negf %181 : vector<8x128xf32>
    %183 = math.exp %182 : vector<8x128xf32>
    %cst_52 = arith.constant 1.000000e+00 : f32
    %184 = vector.broadcast %cst_52 : f32 to vector<8x128xf32>
    %185 = arith.addf %184, %183 : vector<8x128xf32>
    %186 = arith.divf %184, %185 : vector<8x128xf32>
    %cst_53 = arith.constant 2.000000e+00 : f32
    %187 = vector.broadcast %cst_53 : f32 to vector<8x128xf32>
    %188 = arith.mulf %187, %186 : vector<8x128xf32>
    %cst_54 = arith.constant 1.000000e+00 : f32
    %189 = vector.broadcast %cst_54 : f32 to vector<8x128xf32>
    %190 = arith.subf %188, %189 : vector<8x128xf32>
    %191 = arith.select %15, %190, %186 : vector<8x128xi1>, vector<8x128xf32>
    %192 = vector.extract_strided_slice %191 {offsets = [0, 0], sizes = [8, 32], strides = [1, 1]} : vector<8x128xf32> to vector<8x32xf32>
    %193 = vector.extract_strided_slice %191 {offsets = [0, 32], sizes = [8, 32], strides = [1, 1]} : vector<8x128xf32> to vector<8x32xf32>
    %194 = vector.extract_strided_slice %191 {offsets = [0, 64], sizes = [8, 32], strides = [1, 1]} : vector<8x128xf32> to vector<8x32xf32>
    %195 = vector.extract_strided_slice %191 {offsets = [0, 96], sizes = [8, 32], strides = [1, 1]} : vector<8x128xf32> to vector<8x32xf32>
    %196 = arith.mulf %193, %146 : vector<8x32xf32>
    %197 = arith.mulf %192, %194 : vector<8x32xf32>
    %198 = arith.addf %196, %197 : vector<8x32xf32>
    %199 = math.tanh %198 : vector<8x32xf32>
    %200 = arith.mulf %195, %199 : vector<8x32xf32>
    %201 = vector.extract_strided_slice %9 {offsets = [32, 0], sizes = [8, 128], strides = [1, 1]} : vector<64x128xf32> to vector<8x128xf32>
    %cst_55 = arith.constant dense<0.000000e+00> : vector<8x128xf32>
    %202 = tpu.matmul %173, %2, %cst_55 {dimension_numbers = #tpu.dot_dimension_numbers<[1], [0], [0], [1], [0, 0, 1, 1], [], []>} : vector<8x32xf32>, vector<32x128xf32>, vector<8x128xf32> -> vector<8x128xf32>
    %203 = arith.addf %201, %202 : vector<8x128xf32>
    %cst_56 = arith.constant 2.000000e+00 : f32
    %204 = vector.broadcast %cst_56 : f32 to vector<8x128xf32>
    %205 = arith.mulf %204, %203 : vector<8x128xf32>
    %206 = arith.select %15, %205, %203 : vector<8x128xi1>, vector<8x128xf32>
    %207 = arith.negf %206 : vector<8x128xf32>
    %208 = math.exp %207 : vector<8x128xf32>
    %cst_57 = arith.constant 1.000000e+00 : f32
    %209 = vector.broadcast %cst_57 : f32 to vector<8x128xf32>
    %210 = arith.addf %209, %208 : vector<8x128xf32>
    %211 = arith.divf %209, %210 : vector<8x128xf32>
    %cst_58 = arith.constant 2.000000e+00 : f32
    %212 = vector.broadcast %cst_58 : f32 to vector<8x128xf32>
    %213 = arith.mulf %212, %211 : vector<8x128xf32>
    %cst_59 = arith.constant 1.000000e+00 : f32
    %214 = vector.broadcast %cst_59 : f32 to vector<8x128xf32>
    %215 = arith.subf %213, %214 : vector<8x128xf32>
    %216 = arith.select %15, %215, %211 : vector<8x128xi1>, vector<8x128xf32>
    %217 = vector.extract_strided_slice %216 {offsets = [0, 0], sizes = [8, 32], strides = [1, 1]} : vector<8x128xf32> to vector<8x32xf32>
    %218 = vector.extract_strided_slice %216 {offsets = [0, 32], sizes = [8, 32], strides = [1, 1]} : vector<8x128xf32> to vector<8x32xf32>
    %219 = vector.extract_strided_slice %216 {offsets = [0, 64], sizes = [8, 32], strides = [1, 1]} : vector<8x128xf32> to vector<8x32xf32>
    %220 = vector.extract_strided_slice %216 {offsets = [0, 96], sizes = [8, 32], strides = [1, 1]} : vector<8x128xf32> to vector<8x32xf32>
    %221 = arith.mulf %218, %171 : vector<8x32xf32>
    %222 = arith.mulf %217, %219 : vector<8x32xf32>
    %223 = arith.addf %221, %222 : vector<8x32xf32>
    %224 = math.tanh %223 : vector<8x32xf32>
    %225 = arith.mulf %220, %224 : vector<8x32xf32>
    %cst_60 = arith.constant dense<0.000000e+00> : vector<8x128xf32>
    %226 = tpu.matmul %173, %1, %cst_60 {dimension_numbers = #tpu.dot_dimension_numbers<[1], [0], [0], [1], [0, 0, 1, 1], [], []>} : vector<8x32xf32>, vector<32x128xf32>, vector<8x128xf32> -> vector<8x128xf32>
    %cst_61 = arith.constant dense<0.000000e+00> : vector<8x128xf32>
    %227 = tpu.matmul %200, %3, %cst_61 {dimension_numbers = #tpu.dot_dimension_numbers<[1], [0], [0], [1], [0, 0, 1, 1], [], []>} : vector<8x32xf32>, vector<32x128xf32>, vector<8x128xf32> -> vector<8x128xf32>
    %228 = arith.addf %226, %227 : vector<8x128xf32>
    %229 = vector.broadcast %5 : vector<1x128xf32> to vector<8x128xf32>
    %230 = arith.addf %228, %229 : vector<8x128xf32>
    %cst_62 = arith.constant 2.000000e+00 : f32
    %231 = vector.broadcast %cst_62 : f32 to vector<8x128xf32>
    %232 = arith.mulf %231, %230 : vector<8x128xf32>
    %233 = arith.select %15, %232, %230 : vector<8x128xi1>, vector<8x128xf32>
    %234 = arith.negf %233 : vector<8x128xf32>
    %235 = math.exp %234 : vector<8x128xf32>
    %cst_63 = arith.constant 1.000000e+00 : f32
    %236 = vector.broadcast %cst_63 : f32 to vector<8x128xf32>
    %237 = arith.addf %236, %235 : vector<8x128xf32>
    %238 = arith.divf %236, %237 : vector<8x128xf32>
    %cst_64 = arith.constant 2.000000e+00 : f32
    %239 = vector.broadcast %cst_64 : f32 to vector<8x128xf32>
    %240 = arith.mulf %239, %238 : vector<8x128xf32>
    %cst_65 = arith.constant 1.000000e+00 : f32
    %241 = vector.broadcast %cst_65 : f32 to vector<8x128xf32>
    %242 = arith.subf %240, %241 : vector<8x128xf32>
    %243 = arith.select %15, %242, %238 : vector<8x128xi1>, vector<8x128xf32>
    %244 = vector.extract_strided_slice %243 {offsets = [0, 0], sizes = [8, 32], strides = [1, 1]} : vector<8x128xf32> to vector<8x32xf32>
    %245 = vector.extract_strided_slice %243 {offsets = [0, 32], sizes = [8, 32], strides = [1, 1]} : vector<8x128xf32> to vector<8x32xf32>
    %246 = vector.extract_strided_slice %243 {offsets = [0, 64], sizes = [8, 32], strides = [1, 1]} : vector<8x128xf32> to vector<8x32xf32>
    %247 = vector.extract_strided_slice %243 {offsets = [0, 96], sizes = [8, 32], strides = [1, 1]} : vector<8x128xf32> to vector<8x32xf32>
    %248 = arith.mulf %245, %198 : vector<8x32xf32>
    %249 = arith.mulf %244, %246 : vector<8x32xf32>
    %250 = arith.addf %248, %249 : vector<8x32xf32>
    %251 = math.tanh %250 : vector<8x32xf32>
    %252 = arith.mulf %247, %251 : vector<8x32xf32>
    %253 = vector.extract_strided_slice %9 {offsets = [40, 0], sizes = [8, 128], strides = [1, 1]} : vector<64x128xf32> to vector<8x128xf32>
    %cst_66 = arith.constant dense<0.000000e+00> : vector<8x128xf32>
    %254 = tpu.matmul %225, %2, %cst_66 {dimension_numbers = #tpu.dot_dimension_numbers<[1], [0], [0], [1], [0, 0, 1, 1], [], []>} : vector<8x32xf32>, vector<32x128xf32>, vector<8x128xf32> -> vector<8x128xf32>
    %255 = arith.addf %253, %254 : vector<8x128xf32>
    %cst_67 = arith.constant 2.000000e+00 : f32
    %256 = vector.broadcast %cst_67 : f32 to vector<8x128xf32>
    %257 = arith.mulf %256, %255 : vector<8x128xf32>
    %258 = arith.select %15, %257, %255 : vector<8x128xi1>, vector<8x128xf32>
    %259 = arith.negf %258 : vector<8x128xf32>
    %260 = math.exp %259 : vector<8x128xf32>
    %cst_68 = arith.constant 1.000000e+00 : f32
    %261 = vector.broadcast %cst_68 : f32 to vector<8x128xf32>
    %262 = arith.addf %261, %260 : vector<8x128xf32>
    %263 = arith.divf %261, %262 : vector<8x128xf32>
    %cst_69 = arith.constant 2.000000e+00 : f32
    %264 = vector.broadcast %cst_69 : f32 to vector<8x128xf32>
    %265 = arith.mulf %264, %263 : vector<8x128xf32>
    %cst_70 = arith.constant 1.000000e+00 : f32
    %266 = vector.broadcast %cst_70 : f32 to vector<8x128xf32>
    %267 = arith.subf %265, %266 : vector<8x128xf32>
    %268 = arith.select %15, %267, %263 : vector<8x128xi1>, vector<8x128xf32>
    %269 = vector.extract_strided_slice %268 {offsets = [0, 0], sizes = [8, 32], strides = [1, 1]} : vector<8x128xf32> to vector<8x32xf32>
    %270 = vector.extract_strided_slice %268 {offsets = [0, 32], sizes = [8, 32], strides = [1, 1]} : vector<8x128xf32> to vector<8x32xf32>
    %271 = vector.extract_strided_slice %268 {offsets = [0, 64], sizes = [8, 32], strides = [1, 1]} : vector<8x128xf32> to vector<8x32xf32>
    %272 = vector.extract_strided_slice %268 {offsets = [0, 96], sizes = [8, 32], strides = [1, 1]} : vector<8x128xf32> to vector<8x32xf32>
    %273 = arith.mulf %270, %223 : vector<8x32xf32>
    %274 = arith.mulf %269, %271 : vector<8x32xf32>
    %275 = arith.addf %273, %274 : vector<8x32xf32>
    %276 = math.tanh %275 : vector<8x32xf32>
    %277 = arith.mulf %272, %276 : vector<8x32xf32>
    %cst_71 = arith.constant dense<0.000000e+00> : vector<8x128xf32>
    %278 = tpu.matmul %225, %1, %cst_71 {dimension_numbers = #tpu.dot_dimension_numbers<[1], [0], [0], [1], [0, 0, 1, 1], [], []>} : vector<8x32xf32>, vector<32x128xf32>, vector<8x128xf32> -> vector<8x128xf32>
    %cst_72 = arith.constant dense<0.000000e+00> : vector<8x128xf32>
    %279 = tpu.matmul %252, %3, %cst_72 {dimension_numbers = #tpu.dot_dimension_numbers<[1], [0], [0], [1], [0, 0, 1, 1], [], []>} : vector<8x32xf32>, vector<32x128xf32>, vector<8x128xf32> -> vector<8x128xf32>
    %280 = arith.addf %278, %279 : vector<8x128xf32>
    %281 = vector.broadcast %5 : vector<1x128xf32> to vector<8x128xf32>
    %282 = arith.addf %280, %281 : vector<8x128xf32>
    %cst_73 = arith.constant 2.000000e+00 : f32
    %283 = vector.broadcast %cst_73 : f32 to vector<8x128xf32>
    %284 = arith.mulf %283, %282 : vector<8x128xf32>
    %285 = arith.select %15, %284, %282 : vector<8x128xi1>, vector<8x128xf32>
    %286 = arith.negf %285 : vector<8x128xf32>
    %287 = math.exp %286 : vector<8x128xf32>
    %cst_74 = arith.constant 1.000000e+00 : f32
    %288 = vector.broadcast %cst_74 : f32 to vector<8x128xf32>
    %289 = arith.addf %288, %287 : vector<8x128xf32>
    %290 = arith.divf %288, %289 : vector<8x128xf32>
    %cst_75 = arith.constant 2.000000e+00 : f32
    %291 = vector.broadcast %cst_75 : f32 to vector<8x128xf32>
    %292 = arith.mulf %291, %290 : vector<8x128xf32>
    %cst_76 = arith.constant 1.000000e+00 : f32
    %293 = vector.broadcast %cst_76 : f32 to vector<8x128xf32>
    %294 = arith.subf %292, %293 : vector<8x128xf32>
    %295 = arith.select %15, %294, %290 : vector<8x128xi1>, vector<8x128xf32>
    %296 = vector.extract_strided_slice %295 {offsets = [0, 0], sizes = [8, 32], strides = [1, 1]} : vector<8x128xf32> to vector<8x32xf32>
    %297 = vector.extract_strided_slice %295 {offsets = [0, 32], sizes = [8, 32], strides = [1, 1]} : vector<8x128xf32> to vector<8x32xf32>
    %298 = vector.extract_strided_slice %295 {offsets = [0, 64], sizes = [8, 32], strides = [1, 1]} : vector<8x128xf32> to vector<8x32xf32>
    %299 = vector.extract_strided_slice %295 {offsets = [0, 96], sizes = [8, 32], strides = [1, 1]} : vector<8x128xf32> to vector<8x32xf32>
    %300 = arith.mulf %297, %250 : vector<8x32xf32>
    %301 = arith.mulf %296, %298 : vector<8x32xf32>
    %302 = arith.addf %300, %301 : vector<8x32xf32>
    %303 = math.tanh %302 : vector<8x32xf32>
    %304 = arith.mulf %299, %303 : vector<8x32xf32>
    %c0_77 = arith.constant 0 : index
    %c0_78 = arith.constant 0 : index
    %305 = vector.load %arg10[%c0_77, %c0_78] : memref<32x32xf32, #tpu.memory_space<vmem>>, vector<8x32xf32>
    tpu.vector_store %arg10[%c0_77, %c0_78], %304 {strides = array<i32>} : memref<32x32xf32, #tpu.memory_space<vmem>>, vector<8x32xf32>,
    %306 = vector.extract_strided_slice %9 {offsets = [48, 0], sizes = [8, 128], strides = [1, 1]} : vector<64x128xf32> to vector<8x128xf32>
    %cst_79 = arith.constant dense<0.000000e+00> : vector<8x128xf32>
    %307 = tpu.matmul %277, %2, %cst_79 {dimension_numbers = #tpu.dot_dimension_numbers<[1], [0], [0], [1], [0, 0, 1, 1], [], []>} : vector<8x32xf32>, vector<32x128xf32>, vector<8x128xf32> -> vector<8x128xf32>
    %308 = arith.addf %306, %307 : vector<8x128xf32>
    %cst_80 = arith.constant 2.000000e+00 : f32
    %309 = vector.broadcast %cst_80 : f32 to vector<8x128xf32>
    %310 = arith.mulf %309, %308 : vector<8x128xf32>
    %311 = arith.select %15, %310, %308 : vector<8x128xi1>, vector<8x128xf32>
    %312 = arith.negf %311 : vector<8x128xf32>
    %313 = math.exp %312 : vector<8x128xf32>
    %cst_81 = arith.constant 1.000000e+00 : f32
    %314 = vector.broadcast %cst_81 : f32 to vector<8x128xf32>
    %315 = arith.addf %314, %313 : vector<8x128xf32>
    %316 = arith.divf %314, %315 : vector<8x128xf32>
    %cst_82 = arith.constant 2.000000e+00 : f32
    %317 = vector.broadcast %cst_82 : f32 to vector<8x128xf32>
    %318 = arith.mulf %317, %316 : vector<8x128xf32>
    %cst_83 = arith.constant 1.000000e+00 : f32
    %319 = vector.broadcast %cst_83 : f32 to vector<8x128xf32>
    %320 = arith.subf %318, %319 : vector<8x128xf32>
    %321 = arith.select %15, %320, %316 : vector<8x128xi1>, vector<8x128xf32>
    %322 = vector.extract_strided_slice %321 {offsets = [0, 0], sizes = [8, 32], strides = [1, 1]} : vector<8x128xf32> to vector<8x32xf32>
    %323 = vector.extract_strided_slice %321 {offsets = [0, 32], sizes = [8, 32], strides = [1, 1]} : vector<8x128xf32> to vector<8x32xf32>
    %324 = vector.extract_strided_slice %321 {offsets = [0, 64], sizes = [8, 32], strides = [1, 1]} : vector<8x128xf32> to vector<8x32xf32>
    %325 = vector.extract_strided_slice %321 {offsets = [0, 96], sizes = [8, 32], strides = [1, 1]} : vector<8x128xf32> to vector<8x32xf32>
    %326 = arith.mulf %323, %275 : vector<8x32xf32>
    %327 = arith.mulf %322, %324 : vector<8x32xf32>
    %328 = arith.addf %326, %327 : vector<8x32xf32>
    %329 = math.tanh %328 : vector<8x32xf32>
    %330 = arith.mulf %325, %329 : vector<8x32xf32>
    %cst_84 = arith.constant dense<0.000000e+00> : vector<8x128xf32>
    %331 = tpu.matmul %277, %1, %cst_84 {dimension_numbers = #tpu.dot_dimension_numbers<[1], [0], [0], [1], [0, 0, 1, 1], [], []>} : vector<8x32xf32>, vector<32x128xf32>, vector<8x128xf32> -> vector<8x128xf32>
    %cst_85 = arith.constant dense<0.000000e+00> : vector<8x128xf32>
    %332 = tpu.matmul %304, %3, %cst_85 {dimension_numbers = #tpu.dot_dimension_numbers<[1], [0], [0], [1], [0, 0, 1, 1], [], []>} : vector<8x32xf32>, vector<32x128xf32>, vector<8x128xf32> -> vector<8x128xf32>
    %333 = arith.addf %331, %332 : vector<8x128xf32>
    %334 = vector.broadcast %5 : vector<1x128xf32> to vector<8x128xf32>
    %335 = arith.addf %333, %334 : vector<8x128xf32>
    %cst_86 = arith.constant 2.000000e+00 : f32
    %336 = vector.broadcast %cst_86 : f32 to vector<8x128xf32>
    %337 = arith.mulf %336, %335 : vector<8x128xf32>
    %338 = arith.select %15, %337, %335 : vector<8x128xi1>, vector<8x128xf32>
    %339 = arith.negf %338 : vector<8x128xf32>
    %340 = math.exp %339 : vector<8x128xf32>
    %cst_87 = arith.constant 1.000000e+00 : f32
    %341 = vector.broadcast %cst_87 : f32 to vector<8x128xf32>
    %342 = arith.addf %341, %340 : vector<8x128xf32>
    %343 = arith.divf %341, %342 : vector<8x128xf32>
    %cst_88 = arith.constant 2.000000e+00 : f32
    %344 = vector.broadcast %cst_88 : f32 to vector<8x128xf32>
    %345 = arith.mulf %344, %343 : vector<8x128xf32>
    %cst_89 = arith.constant 1.000000e+00 : f32
    %346 = vector.broadcast %cst_89 : f32 to vector<8x128xf32>
    %347 = arith.subf %345, %346 : vector<8x128xf32>
    %348 = arith.select %15, %347, %343 : vector<8x128xi1>, vector<8x128xf32>
    %349 = vector.extract_strided_slice %348 {offsets = [0, 0], sizes = [8, 32], strides = [1, 1]} : vector<8x128xf32> to vector<8x32xf32>
    %350 = vector.extract_strided_slice %348 {offsets = [0, 32], sizes = [8, 32], strides = [1, 1]} : vector<8x128xf32> to vector<8x32xf32>
    %351 = vector.extract_strided_slice %348 {offsets = [0, 64], sizes = [8, 32], strides = [1, 1]} : vector<8x128xf32> to vector<8x32xf32>
    %352 = vector.extract_strided_slice %348 {offsets = [0, 96], sizes = [8, 32], strides = [1, 1]} : vector<8x128xf32> to vector<8x32xf32>
    %353 = arith.mulf %350, %302 : vector<8x32xf32>
    %354 = arith.mulf %349, %351 : vector<8x32xf32>
    %355 = arith.addf %353, %354 : vector<8x32xf32>
    %356 = math.tanh %355 : vector<8x32xf32>
    %357 = arith.mulf %352, %356 : vector<8x32xf32>
    %c8 = arith.constant 8 : index
    %c0_90 = arith.constant 0 : index
    %358 = vector.load %arg10[%c8, %c0_90] : memref<32x32xf32, #tpu.memory_space<vmem>>, vector<8x32xf32>
    tpu.vector_store %arg10[%c8, %c0_90], %357 {strides = array<i32>} : memref<32x32xf32, #tpu.memory_space<vmem>>, vector<8x32xf32>,
    %359 = vector.extract_strided_slice %9 {offsets = [56, 0], sizes = [8, 128], strides = [1, 1]} : vector<64x128xf32> to vector<8x128xf32>
    %cst_91 = arith.constant dense<0.000000e+00> : vector<8x128xf32>
    %360 = tpu.matmul %330, %2, %cst_91 {dimension_numbers = #tpu.dot_dimension_numbers<[1], [0], [0], [1], [0, 0, 1, 1], [], []>} : vector<8x32xf32>, vector<32x128xf32>, vector<8x128xf32> -> vector<8x128xf32>
    %361 = arith.addf %359, %360 : vector<8x128xf32>
    %cst_92 = arith.constant 2.000000e+00 : f32
    %362 = vector.broadcast %cst_92 : f32 to vector<8x128xf32>
    %363 = arith.mulf %362, %361 : vector<8x128xf32>
    %364 = arith.select %15, %363, %361 : vector<8x128xi1>, vector<8x128xf32>
    %365 = arith.negf %364 : vector<8x128xf32>
    %366 = math.exp %365 : vector<8x128xf32>
    %cst_93 = arith.constant 1.000000e+00 : f32
    %367 = vector.broadcast %cst_93 : f32 to vector<8x128xf32>
    %368 = arith.addf %367, %366 : vector<8x128xf32>
    %369 = arith.divf %367, %368 : vector<8x128xf32>
    %cst_94 = arith.constant 2.000000e+00 : f32
    %370 = vector.broadcast %cst_94 : f32 to vector<8x128xf32>
    %371 = arith.mulf %370, %369 : vector<8x128xf32>
    %cst_95 = arith.constant 1.000000e+00 : f32
    %372 = vector.broadcast %cst_95 : f32 to vector<8x128xf32>
    %373 = arith.subf %371, %372 : vector<8x128xf32>
    %374 = arith.select %15, %373, %369 : vector<8x128xi1>, vector<8x128xf32>
    %375 = vector.extract_strided_slice %374 {offsets = [0, 0], sizes = [8, 32], strides = [1, 1]} : vector<8x128xf32> to vector<8x32xf32>
    %376 = vector.extract_strided_slice %374 {offsets = [0, 32], sizes = [8, 32], strides = [1, 1]} : vector<8x128xf32> to vector<8x32xf32>
    %377 = vector.extract_strided_slice %374 {offsets = [0, 64], sizes = [8, 32], strides = [1, 1]} : vector<8x128xf32> to vector<8x32xf32>
    %378 = vector.extract_strided_slice %374 {offsets = [0, 96], sizes = [8, 32], strides = [1, 1]} : vector<8x128xf32> to vector<8x32xf32>
    %379 = arith.mulf %376, %328 : vector<8x32xf32>
    %380 = arith.mulf %375, %377 : vector<8x32xf32>
    %381 = arith.addf %379, %380 : vector<8x32xf32>
    %382 = math.tanh %381 : vector<8x32xf32>
    %383 = arith.mulf %378, %382 : vector<8x32xf32>
    %cst_96 = arith.constant dense<0.000000e+00> : vector<8x128xf32>
    %384 = tpu.matmul %330, %1, %cst_96 {dimension_numbers = #tpu.dot_dimension_numbers<[1], [0], [0], [1], [0, 0, 1, 1], [], []>} : vector<8x32xf32>, vector<32x128xf32>, vector<8x128xf32> -> vector<8x128xf32>
    %cst_97 = arith.constant dense<0.000000e+00> : vector<8x128xf32>
    %385 = tpu.matmul %357, %3, %cst_97 {dimension_numbers = #tpu.dot_dimension_numbers<[1], [0], [0], [1], [0, 0, 1, 1], [], []>} : vector<8x32xf32>, vector<32x128xf32>, vector<8x128xf32> -> vector<8x128xf32>
    %386 = arith.addf %384, %385 : vector<8x128xf32>
    %387 = vector.broadcast %5 : vector<1x128xf32> to vector<8x128xf32>
    %388 = arith.addf %386, %387 : vector<8x128xf32>
    %cst_98 = arith.constant 2.000000e+00 : f32
    %389 = vector.broadcast %cst_98 : f32 to vector<8x128xf32>
    %390 = arith.mulf %389, %388 : vector<8x128xf32>
    %391 = arith.select %15, %390, %388 : vector<8x128xi1>, vector<8x128xf32>
    %392 = arith.negf %391 : vector<8x128xf32>
    %393 = math.exp %392 : vector<8x128xf32>
    %cst_99 = arith.constant 1.000000e+00 : f32
    %394 = vector.broadcast %cst_99 : f32 to vector<8x128xf32>
    %395 = arith.addf %394, %393 : vector<8x128xf32>
    %396 = arith.divf %394, %395 : vector<8x128xf32>
    %cst_100 = arith.constant 2.000000e+00 : f32
    %397 = vector.broadcast %cst_100 : f32 to vector<8x128xf32>
    %398 = arith.mulf %397, %396 : vector<8x128xf32>
    %cst_101 = arith.constant 1.000000e+00 : f32
    %399 = vector.broadcast %cst_101 : f32 to vector<8x128xf32>
    %400 = arith.subf %398, %399 : vector<8x128xf32>
    %401 = arith.select %15, %400, %396 : vector<8x128xi1>, vector<8x128xf32>
    %402 = vector.extract_strided_slice %401 {offsets = [0, 0], sizes = [8, 32], strides = [1, 1]} : vector<8x128xf32> to vector<8x32xf32>
    %403 = vector.extract_strided_slice %401 {offsets = [0, 32], sizes = [8, 32], strides = [1, 1]} : vector<8x128xf32> to vector<8x32xf32>
    %404 = vector.extract_strided_slice %401 {offsets = [0, 64], sizes = [8, 32], strides = [1, 1]} : vector<8x128xf32> to vector<8x32xf32>
    %405 = vector.extract_strided_slice %401 {offsets = [0, 96], sizes = [8, 32], strides = [1, 1]} : vector<8x128xf32> to vector<8x32xf32>
    %406 = arith.mulf %403, %355 : vector<8x32xf32>
    %407 = arith.mulf %402, %404 : vector<8x32xf32>
    %408 = arith.addf %406, %407 : vector<8x32xf32>
    %409 = math.tanh %408 : vector<8x32xf32>
    %410 = arith.mulf %405, %409 : vector<8x32xf32>
    %c16 = arith.constant 16 : index
    %c0_102 = arith.constant 0 : index
    %411 = vector.load %arg10[%c16, %c0_102] : memref<32x32xf32, #tpu.memory_space<vmem>>, vector<8x32xf32>
    tpu.vector_store %arg10[%c16, %c0_102], %410 {strides = array<i32>} : memref<32x32xf32, #tpu.memory_space<vmem>>, vector<8x32xf32>,
    %cst_103 = arith.constant dense<0.000000e+00> : vector<8x128xf32>
    %412 = tpu.matmul %383, %1, %cst_103 {dimension_numbers = #tpu.dot_dimension_numbers<[1], [0], [0], [1], [0, 0, 1, 1], [], []>} : vector<8x32xf32>, vector<32x128xf32>, vector<8x128xf32> -> vector<8x128xf32>
    %cst_104 = arith.constant dense<0.000000e+00> : vector<8x128xf32>
    %413 = tpu.matmul %410, %3, %cst_104 {dimension_numbers = #tpu.dot_dimension_numbers<[1], [0], [0], [1], [0, 0, 1, 1], [], []>} : vector<8x32xf32>, vector<32x128xf32>, vector<8x128xf32> -> vector<8x128xf32>
    %414 = arith.addf %412, %413 : vector<8x128xf32>
    %415 = vector.broadcast %5 : vector<1x128xf32> to vector<8x128xf32>
    %416 = arith.addf %414, %415 : vector<8x128xf32>
    %cst_105 = arith.constant 2.000000e+00 : f32
    %417 = vector.broadcast %cst_105 : f32 to vector<8x128xf32>
    %418 = arith.mulf %417, %416 : vector<8x128xf32>
    %419 = arith.select %15, %418, %416 : vector<8x128xi1>, vector<8x128xf32>
    %420 = arith.negf %419 : vector<8x128xf32>
    %421 = math.exp %420 : vector<8x128xf32>
    %cst_106 = arith.constant 1.000000e+00 : f32
    %422 = vector.broadcast %cst_106 : f32 to vector<8x128xf32>
    %423 = arith.addf %422, %421 : vector<8x128xf32>
    %424 = arith.divf %422, %423 : vector<8x128xf32>
    %cst_107 = arith.constant 2.000000e+00 : f32
    %425 = vector.broadcast %cst_107 : f32 to vector<8x128xf32>
    %426 = arith.mulf %425, %424 : vector<8x128xf32>
    %cst_108 = arith.constant 1.000000e+00 : f32
    %427 = vector.broadcast %cst_108 : f32 to vector<8x128xf32>
    %428 = arith.subf %426, %427 : vector<8x128xf32>
    %429 = arith.select %15, %428, %424 : vector<8x128xi1>, vector<8x128xf32>
    %430 = vector.extract_strided_slice %429 {offsets = [0, 0], sizes = [8, 32], strides = [1, 1]} : vector<8x128xf32> to vector<8x32xf32>
    %431 = vector.extract_strided_slice %429 {offsets = [0, 32], sizes = [8, 32], strides = [1, 1]} : vector<8x128xf32> to vector<8x32xf32>
    %432 = vector.extract_strided_slice %429 {offsets = [0, 64], sizes = [8, 32], strides = [1, 1]} : vector<8x128xf32> to vector<8x32xf32>
    %433 = vector.extract_strided_slice %429 {offsets = [0, 96], sizes = [8, 32], strides = [1, 1]} : vector<8x128xf32> to vector<8x32xf32>
    %434 = arith.mulf %431, %408 : vector<8x32xf32>
    %435 = arith.mulf %430, %432 : vector<8x32xf32>
    %436 = arith.addf %434, %435 : vector<8x32xf32>
    %437 = math.tanh %436 : vector<8x32xf32>
    %438 = arith.mulf %433, %437 : vector<8x32xf32>
    %c24 = arith.constant 24 : index
    %c0_109 = arith.constant 0 : index
    %439 = vector.load %arg10[%c24, %c0_109] : memref<32x32xf32, #tpu.memory_space<vmem>>, vector<8x32xf32>
    tpu.vector_store %arg10[%c24, %c0_109], %438 {strides = array<i32>} : memref<32x32xf32, #tpu.memory_space<vmem>>, vector<8x32xf32>,
    %c0_110 = arith.constant 0 : index
    %c0_111 = arith.constant 0 : index
    %440 = vector.load %arg10[%c0_110, %c0_111] : memref<32x32xf32, #tpu.memory_space<vmem>>, vector<32x32xf32>
    %c0_112 = arith.constant 0 : index
    %c0_113 = arith.constant 0 : index
    %441 = vector.load %arg7[%c0_112, %c0_113] : memref<32x2xf32, #tpu.memory_space<vmem>>, vector<32x2xf32>
    %cst_114 = arith.constant dense<0.000000e+00> : vector<32x2xf32>
    %442 = tpu.matmul %440, %441, %cst_114 {dimension_numbers = #tpu.dot_dimension_numbers<[1], [0], [0], [1], [0, 0, 1, 1], [], []>} : vector<32x32xf32>, vector<32x2xf32>, vector<32x2xf32> -> vector<32x2xf32>
    %c0_115 = arith.constant 0 : index
    %c0_116 = arith.constant 0 : index
    %443 = vector.load %arg8[%c0_115, %c0_116] : memref<1x2xf32, #tpu.memory_space<vmem>>, vector<1x2xf32>
    %444 = vector.broadcast %443 : vector<1x2xf32> to vector<32x2xf32>
    %445 = arith.addf %442, %444 : vector<32x2xf32>
    %446 = arith.negf %445 : vector<32x2xf32>
    %447 = math.exp %446 : vector<32x2xf32>
    %cst_117 = arith.constant 1.000000e+00 : f32
    %448 = vector.broadcast %cst_117 : f32 to vector<32x2xf32>
    %449 = arith.addf %448, %447 : vector<32x2xf32>
    %450 = arith.divf %448, %449 : vector<32x2xf32>
    %c0_118 = arith.constant 0 : index
    %c0_119 = arith.constant 0 : index
    %451 = vector.load %arg9[%c0_118, %c0_119] : memref<32x2xf32, #tpu.memory_space<vmem>>, vector<32x2xf32>
    tpu.vector_store %arg9[%c0_118, %c0_119], %450 {strides = array<i32>} : memref<32x2xf32, #tpu.memory_space<vmem>>, vector<32x2xf32>,
    return
  }
}

</mosaic_0001>

<llo_original>
// kernel: model_lstm_forward.1
$region0: #{model_lstm_forward.1}
  #allocation0 [shape = 'u32[]', space=smem, size = 0x4, offset = 0x4, fixed_abs, tag = 'smem constant byte address 0x4 - core index']
  #allocation1 [shape = 'u32[144,128]{1,0:T(1,128)}', space=vmem, size = 0x12000, scoped, tag = 'internal scratch']
  #allocation2 [shape = 'f32[32,32]{1,0:T(8,128)}', space=vmem, size = 0x4000, scoped, tag = 'scratch operand']
  %s0 = inlined_call_operand.vmem [shape: f32[64,4], index: 0, kind: input, shape index: {}]
  %s1 = inlined_call_operand.vmem [shape: f32[4,128], index: 1, kind: input, shape index: {}]
  %s2 = inlined_call_operand.vmem [shape: f32[32,128], index: 2, kind: input, shape index: {}]
  %s3 = inlined_call_operand.vmem [shape: f32[1,128], index: 3, kind: input, shape index: {}]
  %s4 = inlined_call_operand.vmem [shape: f32[32,128], index: 4, kind: input, shape index: {}]
  %s5 = inlined_call_operand.vmem [shape: f32[32,128], index: 5, kind: input, shape index: {}]
  %s6 = inlined_call_operand.vmem [shape: f32[1,128], index: 6, kind: input, shape index: {}]
  %s7 = inlined_call_operand.vmem [shape: f32[32,2], index: 7, kind: input, shape index: {}]
  %s8 = inlined_call_operand.vmem [shape: f32[1,2], index: 8, kind: input, shape index: {}]
  %s9 = inlined_call_operand.vmem [shape: f32[32,2], index: 9, kind: output, shape index: {}]
  %s10 = sld [smem:[#allocation0]]
  $region46: #{model_lstm_forward.1} parent=0
    _
  %s12 = ssub.s32 1, %s10
  %s13 = scalar_select 0, %s12, %s10
  // Predicated region
  $region2: #{model_lstm_forward.1} parent=0 // pred_check
    _
  $region3: #{model_lstm_forward.1} parent=0 // pred_check_branch
    %15 = sbr.rel (0) target = $region5
  $region4: #{model_lstm_forward.1} parent=0 // pred_region
    _
  $region5: #{model_lstm_forward.1} parent=0 // pred_fallthru
    _
  // Predicated region
  $region6: #{model_lstm_forward.1} parent=0 // pred_check
    _
  $region7: #{model_lstm_forward.1} parent=0 // pred_check_branch
    %17 = sbr.rel (0) target = $region9
  $region8: #{model_lstm_forward.1} parent=0 // pred_region
    _
  $region9: #{model_lstm_forward.1} parent=0 // pred_fallthru
    _
  // Predicated region
  $region10: #{model_lstm_forward.1} parent=0 // pred_check
    _
  $region11: #{model_lstm_forward.1} parent=0 // pred_check_branch
    %19 = sbr.rel (0) target = $region13
  $region12: #{model_lstm_forward.1} parent=0 // pred_region
    _
  $region13: #{model_lstm_forward.1} parent=0 // pred_fallthru
    _
  // Predicated region
  $region14: #{model_lstm_forward.1} parent=0 // pred_check
    _
  $region15: #{model_lstm_forward.1} parent=0 // pred_check_branch
    %21 = sbr.rel (0) target = $region17
  $region16: #{model_lstm_forward.1} parent=0 // pred_region
    _
  $region17: #{model_lstm_forward.1} parent=0 // pred_fallthru
    _
  // Predicated region
  $region18: #{model_lstm_forward.1} parent=0 // pred_check
    _
  $region19: #{model_lstm_forward.1} parent=0 // pred_check_branch
    %23 = sbr.rel (0) target = $region21
  $region20: #{model_lstm_forward.1} parent=0 // pred_region
    _
  $region21: #{model_lstm_forward.1} parent=0 // pred_fallthru
    _
  // Predicated region
  $region22: #{model_lstm_forward.1} parent=0 // pred_check
    _
  $region23: #{model_lstm_forward.1} parent=0 // pred_check_branch
    %25 = sbr.rel (0) target = $region25
  $region24: #{model_lstm_forward.1} parent=0 // pred_region
    _
  $region25: #{model_lstm_forward.1} parent=0 // pred_fallthru
    _
  // Predicated region
  $region26: #{model_lstm_forward.1} parent=0 // pred_check
    _
  $region27: #{model_lstm_forward.1} parent=0 // pred_check_branch
    %27 = sbr.rel (0) target = $region29
  $region28: #{model_lstm_forward.1} parent=0 // pred_region
    _
  $region29: #{model_lstm_forward.1} parent=0 // pred_fallthru
    _
  // Predicated region
  $region30: #{model_lstm_forward.1} parent=0 // pred_check
    _
  $region31: #{model_lstm_forward.1} parent=0 // pred_check_branch
    %29 = sbr.rel (0) target = $region33
  $region32: #{model_lstm_forward.1} parent=0 // pred_region
    _
  $region33: #{model_lstm_forward.1} parent=0 // pred_fallthru
    _
  // Predicated region
  $region34: #{model_lstm_forward.1} parent=0 // pred_check
    _
  $region35: #{model_lstm_forward.1} parent=0 // pred_check_branch
    %31 = sbr.rel (0) target = $region37
  $region36: #{model_lstm_forward.1} parent=0 // pred_region
    _
  $region37: #{model_lstm_forward.1} parent=0 // pred_fallthru
    _
  %v32 = vld [vmem:[%s1] sm:$0xf]
  %v33 = vld [vmem:[%s4] sm:$0xff]
  %v34 = vld [vmem:[%s4 + $0x8] sm:$0xff]
  %v35 = vld [vmem:[%s4 + $0x10] sm:$0xff]
  %v36 = vld [vmem:[%s4 + $0x18] sm:$0xff]
  %v37 = vld [vmem:[%s2] sm:$0xff]
  %v38 = vld [vmem:[%s2 + $0x8] sm:$0xff]
  %v39 = vld [vmem:[%s2 + $0x10] sm:$0xff]
  %v40 = vld [vmem:[%s2 + $0x18] sm:$0xff]
  %v41 = vld [vmem:[%s5] sm:$0xff]
  %v42 = vld [vmem:[%s5 + $0x8] sm:$0xff]
  %v43 = vld [vmem:[%s5 + $0x10] sm:$0xff]
  %v44 = vld [vmem:[%s5 + $0x18] sm:$0xff]
  %v45 = vld [vmem:[%s3] sm:$0x1]
  %v46 = vld [vmem:[%s6] sm:$0x1]
  %v47 = vld [vmem:[%s0] sm:$0xff]
  %v48 = vld [vmem:[%s0 + $0x8] sm:$0xff]
  %v49 = vld [vmem:[%s0 + $0x10] sm:$0xff]
  %v50 = vld [vmem:[%s0 + $0x18] sm:$0xff]
  %v51 = vld [vmem:[%s0 + $0x20] sm:$0xff]
  %v52 = vld [vmem:[%s0 + $0x28] sm:$0xff]
  %v53 = vld [vmem:[%s0 + $0x30] sm:$0xff]
  %v54 = vld [vmem:[%s0 + $0x38] sm:$0xff]
  %v56 = vlaneseq
  %v57 = vshrl.u32 %v56, 7
  %v58 = vsub.s32 0, %v57
  %v59 = vrot.slane %v45, %v58
  %vm61 = vcmask 31744
  %v63 = vsel %vm61, %v47, 0
  %v66 = vsel %vm61, %v48, 0
  %v69 = vsel %vm61, %v49, 0
  %v72 = vsel %vm61, %v50, 0
  %v75 = vsel %vm61, %v51, 0
  %v78 = vsel %vm61, %v52, 0
  %v81 = vsel %vm61, %v53, 0
  %v84 = vsel %vm61, %v54, 0
  %vm86 = vcmask 1043456
  %v88 = vsel %vm86, %v32, 0
  %90 = vmatprep.subr.mxu0 0.0
  %91 = vmatpush1.msra.mxu0 %v88
  %92 = vmatprep.subr.mxu0 0.0
  %93 = vmatpush1.msra.mxu0 0.0
  %94 = vmatprep.subr.mxu0 0.0
  %95 = vmatpush1.msra.mxu0 0.0
  %96 = vmatprep.subr.mxu0 0.0
  %97 = vmatpush1.msra.mxu0 0.0
  %98 = vmatprep.subr.mxu0 0.0
  %99 = vmatpush1.msra.mxu0 0.0
  %100 = vmatprep.subr.mxu0 0.0
  %101 = vmatpush1.msra.mxu0 0.0
  %102 = vmatprep.subr.mxu0 0.0
  %103 = vmatpush1.msra.mxu0 0.0
  %104 = vmatprep.subr.mxu0 0.0
  %105 = vmatpush1.msra.mxu0 0.0
  %106 = vmatprep.subr.mxu0 0.0
  %107 = vmatpush1.msra.mxu0 0.0
  %108 = vmatprep.subr.mxu0 0.0
  %109 = vmatpush1.msra.mxu0 0.0
  %110 = vmatprep.subr.mxu0 0.0
  %111 = vmatpush1.msra.mxu0 0.0
  %112 = vmatprep.subr.mxu0 0.0
  %113 = vmatpush1.msra.mxu0 0.0
  %114 = vmatprep.subr.mxu0 0.0
  %115 = vmatpush1.msra.mxu0 0.0
  %116 = vmatprep.subr.mxu0 0.0
  %117 = vmatpush1.msra.mxu0 0.0
  %118 = vmatprep.subr.mxu0 0.0
  %119 = vmatpush1.msra.mxu0 0.0
  %120 = vmatprep.subr.mxu0 0.0
  %121 = vmatpush1.msra.mxu0 0.0
  %122 = vmatprep.subr.mxu0 0.0
  %123 = vmatpush1.msra.mxu0 0.0
  %124 = vmatprep.subr.mxu0 0.0
  %125 = vmatpush1.msra.mxu0 0.0
  %126 = vmatprep.subr.mxu0 0.0
  %127 = vmatpush1.msra.mxu0 0.0
  %128 = vmatprep.subr.mxu0 0.0
  %129 = vmatpush1.msra.mxu0 0.0
  %130 = vmatprep.subr.mxu0 0.0
  %131 = vmatpush1.msra.mxu0 0.0
  %132 = vmatprep.subr.mxu0 0.0
  %133 = vmatpush1.msra.mxu0 0.0
  %134 = vmatprep.subr.mxu0 0.0
  %135 = vmatpush1.msra.mxu0 0.0
  %136 = vmatprep.subr.mxu0 0.0
  %137 = vmatpush1.msra.mxu0 0.0
  %138 = vmatprep.subr.mxu0 0.0
  %139 = vmatpush1.msra.mxu0 0.0
  %140 = vmatprep.subr.mxu0 0.0
  %141 = vmatpush1.msra.mxu0 0.0
  %142 = vmatprep.subr.mxu0 0.0
  %143 = vmatpush1.msra.mxu0 0.0
  %144 = vmatprep.subr.mxu0 0.0
  %145 = vmatpush1.msra.mxu0 0.0
  %146 = vmatprep.subr.mxu0 0.0
  %147 = vmatpush1.msra.mxu0 0.0
  %148 = vmatprep.subr.mxu0 0.0
  %149 = vmatpush1.msra.mxu0 0.0
  %150 = vmatprep.subr.mxu0 0.0
  %151 = vmatpush1.msra.mxu0 0.0
  %152 = vmatprep.subr.mxu0 0.0
  %153 = vmatpush1.msra.mxu0 0.0
  %154 = vmatprep.mubr.f32.mxu0 0.0
  %155 = vmatmul.mubr.f32.gmra.mrb[0].mxu0 %v63
  %v156 = vpop.f32.mrb[0].mxu0
  %v157 = vadd.f32 %v59, %v156
  %v158 = vpop.f32.mrb[0].mxu0
  %159 = vmatprep.mubr.f32.mxu0 0.0
  %160 = vmatmul.mubr.f32.gmra.mrb[0].mxu0 %v66
  %v161 = vpop.f32.mrb[0].mxu0
  %v162 = vadd.f32 %v59, %v161
  %v163 = vpop.f32.mrb[0].mxu0
  %164 = vmatprep.mubr.f32.mxu0 0.0
  %165 = vmatmul.mubr.f32.gmra.mrb[0].mxu0 %v69
  %v166 = vpop.f32.mrb[0].mxu0
  %v167 = vadd.f32 %v59, %v166
  %v168 = vpop.f32.mrb[0].mxu0
  %169 = vmatprep.mubr.f32.mxu0 0.0
  %170 = vmatmul.mubr.f32.gmra.mrb[0].mxu0 %v72
  %v171 = vpop.f32.mrb[0].mxu0
  %v172 = vadd.f32 %v59, %v171
  %v173 = vpop.f32.mrb[0].mxu0
  %174 = vmatprep.mubr.f32.mxu0 0.0
  %175 = vmatmul.mubr.f32.gmra.mrb[0].mxu0 %v75
  %v176 = vpop.f32.mrb[0].mxu0
  %v177 = vadd.f32 %v59, %v176
  %v178 = vpop.f32.mrb[0].mxu0
  %179 = vmatprep.mubr.f32.mxu0 0.0
  %180 = vmatmul.mubr.f32.gmra.mrb[0].mxu0 %v78
  %v181 = vpop.f32.mrb[0].mxu0
  %v182 = vadd.f32 %v59, %v181
  %v183 = vpop.f32.mrb[0].mxu0
  %184 = vmatprep.mubr.f32.mxu0 0.0
  %185 = vmatmul.mubr.f32.gmra.mrb[0].mxu0 %v81
  %v186 = vpop.f32.mrb[0].mxu0
  %v187 = vadd.f32 %v59, %v186
  %v188 = vpop.f32.mrb[0].mxu0
  %189 = vmatprep.mubr.f32.mxu0 0.0
  %190 = vmatmul.mubr.f32.gmra.mrb[0].mxu0 %v84
  %v191 = vpop.f32.mrb[0].mxu0
  %v192 = vadd.f32 %v59, %v191
  %v193 = vpop.f32.mrb[0].mxu0
  %194 = vdwg.mxu0
  %v195 = vlaneseq
  %v196 = vand.u32 %v195, 127
  %vm197 = vcmp.ge.s32.totalorder %v196, 64
  %vm198 = vcmp.lt.s32.totalorder %v196, 96
  %vm199 = vmand %vm197, %vm198
  %vm200 = vcmask 261120
  %v202 = vsel %vm200, 0.0, 0
  %204 = vmatprep.subr.mxu0 0.0
  %205 = vmatpush1.msra.mxu0 %v37
  %206 = vmatprep.subr.mxu0 0.0
  %207 = vmatpush1.msra.mxu0 %v38
  %208 = vmatprep.subr.mxu0 0.0
  %209 = vmatpush1.msra.mxu0 %v39
  %210 = vmatprep.subr.mxu0 0.0
  %211 = vmatpush1.msra.mxu0 %v40
  %212 = vmatprep.subr.mxu0 0.0
  %213 = vmatpush1.msra.mxu0 0.0
  %214 = vmatprep.subr.mxu0 0.0
  %215 = vmatpush1.msra.mxu0 0.0
  %216 = vmatprep.subr.mxu0 0.0
  %217 = vmatpush1.msra.mxu0 0.0
  %218 = vmatprep.subr.mxu0 0.0
  %219 = vmatpush1.msra.mxu0 0.0
  %220 = vmatprep.subr.mxu0 0.0
  %221 = vmatpush1.msra.mxu0 0.0
  %222 = vmatprep.subr.mxu0 0.0
  %223 = vmatpush1.msra.mxu0 0.0
  %224 = vmatprep.subr.mxu0 0.0
  %225 = vmatpush1.msra.mxu0 0.0
  %226 = vmatprep.subr.mxu0 0.0
  %227 = vmatpush1.msra.mxu0 0.0
  %228 = vmatprep.subr.mxu0 0.0
  %229 = vmatpush1.msra.mxu0 0.0
  %230 = vmatprep.subr.mxu0 0.0
  %231 = vmatpush1.msra.mxu0 0.0
  %232 = vmatprep.subr.mxu0 0.0
  %233 = vmatpush1.msra.mxu0 0.0
  %234 = vmatprep.subr.mxu0 0.0
  %235 = vmatpush1.msra.mxu0 0.0
  %236 = vmatprep.subr.mxu0 0.0
  %237 = vmatpush1.msra.mxu0 0.0
  %238 = vmatprep.subr.mxu0 0.0
  %239 = vmatpush1.msra.mxu0 0.0
  %240 = vmatprep.subr.mxu0 0.0
  %241 = vmatpush1.msra.mxu0 0.0
  %242 = vmatprep.subr.mxu0 0.0
  %243 = vmatpush1.msra.mxu0 0.0
  %244 = vmatprep.subr.mxu0 0.0
  %245 = vmatpush1.msra.mxu0 0.0
  %246 = vmatprep.subr.mxu0 0.0
  %247 = vmatpush1.msra.mxu0 0.0
  %248 = vmatprep.subr.mxu0 0.0
  %249 = vmatpush1.msra.mxu0 0.0
  %250 = vmatprep.subr.mxu0 0.0
  %251 = vmatpush1.msra.mxu0 0.0
  %252 = vmatprep.subr.mxu0 0.0
  %253 = vmatpush1.msra.mxu0 0.0
  %254 = vmatprep.subr.mxu0 0.0
  %255 = vmatpush1.msra.mxu0 0.0
  %256 = vmatprep.subr.mxu0 0.0
  %257 = vmatpush1.msra.mxu0 0.0
  %258 = vmatprep.subr.mxu0 0.0
  %259 = vmatpush1.msra.mxu0 0.0
  %260 = vmatprep.subr.mxu0 0.0
  %261 = vmatpush1.msra.mxu0 0.0
  %262 = vmatprep.subr.mxu0 0.0
  %263 = vmatpush1.msra.mxu0 0.0
  %264 = vmatprep.subr.mxu0 0.0
  %265 = vmatpush1.msra.mxu0 0.0
  %266 = vmatprep.subr.mxu0 0.0
  %267 = vmatpush1.msra.mxu0 0.0
  %268 = vmatprep.mubr.f32.mxu0 0.0
  %269 = vmatmul.mubr.f32.gmra.mrb[0].mxu0 %v202
  %v270 = vpop.f32.mrb[0].mxu0
  %v271 = vadd.f32 0.0, %v270
  %v272 = vpop.f32.mrb[0].mxu0
  %273 = vdwg.mxu0
  %v274 = vadd.f32 %v157, %v271
  %v275 = vmul.f32 %v274, 2.0
  %v276 = vsel %vm199, %v275, %v274
  %v277 = vxor.u32 %v276, 2147483648
  %v278 = vmul.f32 %v277, 1.442695
  %v279 = vpow.pop %v278
  %v280 = vadd.f32 %v279, 1.0
  %v281 = vrcp.pop %v280
  %v282 = vmul.f32 1.0, %v281
  %v283 = vmul.f32 %v282, 2.0
  %v284 = vsub.f32 %v283, 1.0
  %v285 = vsel %vm199, %v284, %v282
  %v286 = vmul.f32 %v285, 0.0
  %288 = vrot.lane.b32.xlu0 %v285, 64
  %v289 = vpop.permute.xlu0 %288
  %v291 = vmul.f32 %v285, %v289
  %293 = vrot.lane.b32.xlu0 %v291, 32
  %v294 = vpop.permute.xlu0 %293
  %v296 = vadd.f32 %v286, %v294
  %v297 = vtanh.pop %v296
  %299 = vrot.lane.b32.xlu0 %v297, 64
  %v300 = vpop.permute.xlu0 %299
  %v302 = vmul.f32 %v285, %v300
  %304 = vrot.lane.b32.xlu0 %v302, 32
  %v305 = vpop.permute.xlu0 %304
  %v306 = vsel %vm200, %v305, 0
  %308 = vmatprep.subr.mxu0 0.0
  %309 = vmatpush1.msra.mxu0 %v37
  %310 = vmatprep.subr.mxu0 0.0
  %311 = vmatpush1.msra.mxu0 %v38
  %312 = vmatprep.subr.mxu0 0.0
  %313 = vmatpush1.msra.mxu0 %v39
  %314 = vmatprep.subr.mxu0 0.0
  %315 = vmatpush1.msra.mxu0 %v40
  %316 = vmatprep.subr.mxu0 0.0
  %317 = vmatpush1.msra.mxu0 0.0
  %318 = vmatprep.subr.mxu0 0.0
  %319 = vmatpush1.msra.mxu0 0.0
  %320 = vmatprep.subr.mxu0 0.0
  %321 = vmatpush1.msra.mxu0 0.0
  %322 = vmatprep.subr.mxu0 0.0
  %323 = vmatpush1.msra.mxu0 0.0
  %324 = vmatprep.subr.mxu0 0.0
  %325 = vmatpush1.msra.mxu0 0.0
  %326 = vmatprep.subr.mxu0 0.0
  %327 = vmatpush1.msra.mxu0 0.0
  %328 = vmatprep.subr.mxu0 0.0
  %329 = vmatpush1.msra.mxu0 0.0
  %330 = vmatprep.subr.mxu0 0.0
  %331 = vmatpush1.msra.mxu0 0.0
  %332 = vmatprep.subr.mxu0 0.0
  %333 = vmatpush1.msra.mxu0 0.0
  %334 = vmatprep.subr.mxu0 0.0
  %335 = vmatpush1.msra.mxu0 0.0
  %336 = vmatprep.subr.mxu0 0.0
  %337 = vmatpush1.msra.mxu0 0.0
  %338 = vmatprep.subr.mxu0 0.0
  %339 = vmatpush1.msra.mxu0 0.0
  %340 = vmatprep.subr.mxu0 0.0
  %341 = vmatpush1.msra.mxu0 0.0
  %342 = vmatprep.subr.mxu0 0.0
  %343 = vmatpush1.msra.mxu0 0.0
  %344 = vmatprep.subr.mxu0 0.0
  %345 = vmatpush1.msra.mxu0 0.0
  %346 = vmatprep.subr.mxu0 0.0
  %347 = vmatpush1.msra.mxu0 0.0
  %348 = vmatprep.subr.mxu0 0.0
  %349 = vmatpush1.msra.mxu0 0.0
  %350 = vmatprep.subr.mxu0 0.0
  %351 = vmatpush1.msra.mxu0 0.0
  %352 = vmatprep.subr.mxu0 0.0
  %353 = vmatpush1.msra.mxu0 0.0
  %354 = vmatprep.subr.mxu0 0.0
  %355 = vmatpush1.msra.mxu0 0.0
  %356 = vmatprep.subr.mxu0 0.0
  %357 = vmatpush1.msra.mxu0 0.0
  %358 = vmatprep.subr.mxu0 0.0
  %359 = vmatpush1.msra.mxu0 0.0
  %360 = vmatprep.subr.mxu0 0.0
  %361 = vmatpush1.msra.mxu0 0.0
  %362 = vmatprep.subr.mxu0 0.0
  %363 = vmatpush1.msra.mxu0 0.0
  %364 = vmatprep.subr.mxu0 0.0
  %365 = vmatpush1.msra.mxu0 0.0
  %366 = vmatprep.subr.mxu0 0.0
  %367 = vmatpush1.msra.mxu0 0.0
  %368 = vmatprep.subr.mxu0 0.0
  %369 = vmatpush1.msra.mxu0 0.0
  %370 = vmatprep.subr.mxu0 0.0
  %371 = vmatpush1.msra.mxu0 0.0
  %372 = vmatprep.mubr.f32.mxu0 0.0
  %373 = vmatmul.mubr.f32.gmra.mrb[0].mxu0 %v306
  %v374 = vpop.f32.mrb[0].mxu0
  %v375 = vadd.f32 0.0, %v374
  %v376 = vpop.f32.mrb[0].mxu0
  %377 = vdwg.mxu0
  %v378 = vadd.f32 %v162, %v375
  %v379 = vmul.f32 %v378, 2.0
  %v380 = vsel %vm199, %v379, %v378
  %v381 = vxor.u32 %v380, 2147483648
  %v382 = vmul.f32 %v381, 1.442695
  %v383 = vpow.pop %v382
  %v384 = vadd.f32 %v383, 1.0
  %v385 = vrcp.pop %v384
  %v386 = vmul.f32 1.0, %v385
  %v387 = vmul.f32 %v386, 2.0
  %v388 = vsub.f32 %v387, 1.0
  %v389 = vsel %vm199, %v388, %v386
  %v390 = vmul.f32 %v389, %v296
  %392 = vrot.lane.b32.xlu0 %v389, 64
  %v393 = vpop.permute.xlu0 %392
  %v395 = vmul.f32 %v389, %v393
  %397 = vrot.lane.b32.xlu0 %v395, 32
  %v398 = vpop.permute.xlu0 %397
  %v400 = vadd.f32 %v390, %v398
  %v401 = vtanh.pop %v400
  %403 = vrot.lane.b32.xlu0 %v401, 64
  %v404 = vpop.permute.xlu0 %403
  %v406 = vmul.f32 %v389, %v404
  %407 = vmatprep.subr.mxu0 0.0
  %408 = vmatpush1.msra.mxu0 %v41
  %409 = vmatprep.subr.mxu0 0.0
  %410 = vmatpush1.msra.mxu0 %v42
  %411 = vmatprep.subr.mxu0 0.0
  %412 = vmatpush1.msra.mxu0 %v43
  %413 = vmatprep.subr.mxu0 0.0
  %414 = vmatpush1.msra.mxu0 %v44
  %415 = vmatprep.subr.mxu0 0.0
  %416 = vmatpush1.msra.mxu0 0.0
  %417 = vmatprep.subr.mxu0 0.0
  %418 = vmatpush1.msra.mxu0 0.0
  %419 = vmatprep.subr.mxu0 0.0
  %420 = vmatpush1.msra.mxu0 0.0
  %421 = vmatprep.subr.mxu0 0.0
  %422 = vmatpush1.msra.mxu0 0.0
  %423 = vmatprep.subr.mxu0 0.0
  %424 = vmatpush1.msra.mxu0 0.0
  %425 = vmatprep.subr.mxu0 0.0
  %426 = vmatpush1.msra.mxu0 0.0
  %427 = vmatprep.subr.mxu0 0.0
  %428 = vmatpush1.msra.mxu0 0.0
  %429 = vmatprep.subr.mxu0 0.0
  %430 = vmatpush1.msra.mxu0 0.0
  %431 = vmatprep.subr.mxu0 0.0
  %432 = vmatpush1.msra.mxu0 0.0
  %433 = vmatprep.subr.mxu0 0.0
  %434 = vmatpush1.msra.mxu0 0.0
  %435 = vmatprep.subr.mxu0 0.0
  %436 = vmatpush1.msra.mxu0 0.0
  %437 = vmatprep.subr.mxu0 0.0
  %438 = vmatpush1.msra.mxu0 0.0
  %439 = vmatprep.subr.mxu0 0.0
  %440 = vmatpush1.msra.mxu0 0.0
  %441 = vmatprep.subr.mxu0 0.0
  %442 = vmatpush1.msra.mxu0 0.0
  %443 = vmatprep.subr.mxu0 0.0
  %444 = vmatpush1.msra.mxu0 0.0
  %445 = vmatprep.subr.mxu0 0.0
  %446 = vmatpush1.msra.mxu0 0.0
  %447 = vmatprep.subr.mxu0 0.0
  %448 = vmatpush1.msra.mxu0 0.0
  %449 = vmatprep.subr.mxu0 0.0
  %450 = vmatpush1.msra.mxu0 0.0
  %451 = vmatprep.subr.mxu0 0.0
  %452 = vmatpush1.msra.mxu0 0.0
  %453 = vmatprep.subr.mxu0 0.0
  %454 = vmatpush1.msra.mxu0 0.0
  %455 = vmatprep.subr.mxu0 0.0
  %456 = vmatpush1.msra.mxu0 0.0
  %457 = vmatprep.subr.mxu0 0.0
  %458 = vmatpush1.msra.mxu0 0.0
  %459 = vmatprep.subr.mxu0 0.0
  %460 = vmatpush1.msra.mxu0 0.0
  %461 = vmatprep.subr.mxu0 0.0
  %462 = vmatpush1.msra.mxu0 0.0
  %463 = vmatprep.subr.mxu0 0.0
  %464 = vmatpush1.msra.mxu0 0.0
  %465 = vmatprep.subr.mxu0 0.0
  %466 = vmatpush1.msra.mxu0 0.0
  %467 = vmatprep.subr.mxu0 0.0
  %468 = vmatpush1.msra.mxu0 0.0
  %469 = vmatprep.subr.mxu0 0.0
  %470 = vmatpush1.msra.mxu0 0.0
  %471 = vmatprep.mubr.f32.mxu0 0.0
  %472 = vmatmul.mubr.f32.gmra.mrb[0].mxu0 %v202
  %v473 = vpop.f32.mrb[0].mxu0
  %v474 = vadd.f32 0.0, %v473
  %v475 = vpop.f32.mrb[0].mxu0
  %476 = vdwg.mxu0
  %477 = vmatprep.subr.mxu0 0.0
  %478 = vmatpush1.msra.mxu0 %v33
  %479 = vmatprep.subr.mxu0 0.0
  %480 = vmatpush1.msra.mxu0 %v34
  %481 = vmatprep.subr.mxu0 0.0
  %482 = vmatpush1.msra.mxu0 %v35
  %483 = vmatprep.subr.mxu0 0.0
  %484 = vmatpush1.msra.mxu0 %v36
  %485 = vmatprep.subr.mxu0 0.0
  %486 = vmatpush1.msra.mxu0 0.0
  %487 = vmatprep.subr.mxu0 0.0
  %488 = vmatpush1.msra.mxu0 0.0
  %489 = vmatprep.subr.mxu0 0.0
  %490 = vmatpush1.msra.mxu0 0.0
  %491 = vmatprep.subr.mxu0 0.0
  %492 = vmatpush1.msra.mxu0 0.0
  %493 = vmatprep.subr.mxu0 0.0
  %494 = vmatpush1.msra.mxu0 0.0
  %495 = vmatprep.subr.mxu0 0.0
  %496 = vmatpush1.msra.mxu0 0.0
  %497 = vmatprep.subr.mxu0 0.0
  %498 = vmatpush1.msra.mxu0 0.0
  %499 = vmatprep.subr.mxu0 0.0
  %500 = vmatpush1.msra.mxu0 0.0
  %501 = vmatprep.subr.mxu0 0.0
  %502 = vmatpush1.msra.mxu0 0.0
  %503 = vmatprep.subr.mxu0 0.0
  %504 = vmatpush1.msra.mxu0 0.0
  %505 = vmatprep.subr.mxu0 0.0
  %506 = vmatpush1.msra.mxu0 0.0
  %507 = vmatprep.subr.mxu0 0.0
  %508 = vmatpush1.msra.mxu0 0.0
  %509 = vmatprep.subr.mxu0 0.0
  %510 = vmatpush1.msra.mxu0 0.0
  %511 = vmatprep.subr.mxu0 0.0
  %512 = vmatpush1.msra.mxu0 0.0
  %513 = vmatprep.subr.mxu0 0.0
  %514 = vmatpush1.msra.mxu0 0.0
  %515 = vmatprep.subr.mxu0 0.0
  %516 = vmatpush1.msra.mxu0 0.0
  %517 = vmatprep.subr.mxu0 0.0
  %518 = vmatpush1.msra.mxu0 0.0
  %519 = vmatprep.subr.mxu0 0.0
  %520 = vmatpush1.msra.mxu0 0.0
  %521 = vmatprep.subr.mxu0 0.0
  %522 = vmatpush1.msra.mxu0 0.0
  %523 = vmatprep.subr.mxu0 0.0
  %524 = vmatpush1.msra.mxu0 0.0
  %525 = vmatprep.subr.mxu0 0.0
  %526 = vmatpush1.msra.mxu0 0.0
  %527 = vmatprep.subr.mxu0 0.0
  %528 = vmatpush1.msra.mxu0 0.0
  %529 = vmatprep.subr.mxu0 0.0
  %530 = vmatpush1.msra.mxu0 0.0
  %531 = vmatprep.subr.mxu0 0.0
  %532 = vmatpush1.msra.mxu0 0.0
  %533 = vmatprep.subr.mxu0 0.0
  %534 = vmatpush1.msra.mxu0 0.0
  %535 = vmatprep.subr.mxu0 0.0
  %536 = vmatpush1.msra.mxu0 0.0
  %537 = vmatprep.subr.mxu0 0.0
  %538 = vmatpush1.msra.mxu0 0.0
  %539 = vmatprep.subr.mxu0 0.0
  %540 = vmatpush1.msra.mxu0 0.0
  %541 = vmatprep.mubr.f32.mxu0 0.0
  %542 = vmatmul.mubr.f32.gmra.mrb[0].mxu0 %v306
  %v543 = vpop.f32.mrb[0].mxu0
  %v544 = vadd.f32 %v474, %v543
  %v545 = vpop.f32.mrb[0].mxu0
  %546 = vdwg.mxu0
  %v548 = vlaneseq
  %v549 = vshrl.u32 %v548, 7
  %v550 = vsub.s32 0, %v549
  %v551 = vrot.slane %v46, %v550
  %v553 = vadd.f32 %v544, %v551
  %v554 = vmul.f32 %v553, 2.0
  %v555 = vsel %vm199, %v554, %v553
  %v556 = vxor.u32 %v555, 2147483648
  %v557 = vmul.f32 %v556, 1.442695
  %v558 = vpow.pop %v557
  %v559 = vadd.f32 %v558, 1.0
  %v560 = vrcp.pop %v559
  %v561 = vmul.f32 1.0, %v560
  %v562 = vmul.f32 %v561, 2.0
  %v563 = vsub.f32 %v562, 1.0
  %v564 = vsel %vm199, %v563, %v561
  %v565 = vmul.f32 %v564, 0.0
  %567 = vrot.lane.b32.xlu0 %v564, 64
  %v568 = vpop.permute.xlu0 %567
  %v570 = vmul.f32 %v564, %v568
  %572 = vrot.lane.b32.xlu0 %v570, 32
  %v573 = vpop.permute.xlu0 %572
  %v575 = vadd.f32 %v565, %v573
  %v576 = vtanh.pop %v575
  %578 = vrot.lane.b32.xlu0 %v576, 64
  %v579 = vpop.permute.xlu0 %578
  %v581 = vmul.f32 %v564, %v579
  %583 = vrot.lane.b32.xlu0 %v406, 32
  %v584 = vpop.permute.xlu0 %583
  %v585 = vsel %vm200, %v584, 0
  %587 = vmatprep.subr.mxu0 0.0
  %588 = vmatpush1.msra.mxu0 %v37
  %589 = vmatprep.subr.mxu0 0.0
  %590 = vmatpush1.msra.mxu0 %v38
  %591 = vmatprep.subr.mxu0 0.0
  %592 = vmatpush1.msra.mxu0 %v39
  %593 = vmatprep.subr.mxu0 0.0
  %594 = vmatpush1.msra.mxu0 %v40
  %595 = vmatprep.subr.mxu0 0.0
  %596 = vmatpush1.msra.mxu0 0.0
  %597 = vmatprep.subr.mxu0 0.0
  %598 = vmatpush1.msra.mxu0 0.0
  %599 = vmatprep.subr.mxu0 0.0
  %600 = vmatpush1.msra.mxu0 0.0
  %601 = vmatprep.subr.mxu0 0.0
  %602 = vmatpush1.msra.mxu0 0.0
  %603 = vmatprep.subr.mxu0 0.0
  %604 = vmatpush1.msra.mxu0 0.0
  %605 = vmatprep.subr.mxu0 0.0
  %606 = vmatpush1.msra.mxu0 0.0
  %607 = vmatprep.subr.mxu0 0.0
  %608 = vmatpush1.msra.mxu0 0.0
  %609 = vmatprep.subr.mxu0 0.0
  %610 = vmatpush1.msra.mxu0 0.0
  %611 = vmatprep.subr.mxu0 0.0
  %612 = vmatpush1.msra.mxu0 0.0
  %613 = vmatprep.subr.mxu0 0.0
  %614 = vmatpush1.msra.mxu0 0.0
  %615 = vmatprep.subr.mxu0 0.0
  %616 = vmatpush1.msra.mxu0 0.0
  %617 = vmatprep.subr.mxu0 0.0
  %618 = vmatpush1.msra.mxu0 0.0
  %619 = vmatprep.subr.mxu0 0.0
  %620 = vmatpush1.msra.mxu0 0.0
  %621 = vmatprep.subr.mxu0 0.0
  %622 = vmatpush1.msra.mxu0 0.0
  %623 = vmatprep.subr.mxu0 0.0
  %624 = vmatpush1.msra.mxu0 0.0
  %625 = vmatprep.subr.mxu0 0.0
  %626 = vmatpush1.msra.mxu0 0.0
  %627 = vmatprep.subr.mxu0 0.0
  %628 = vmatpush1.msra.mxu0 0.0
  %629 = vmatprep.subr.mxu0 0.0
  %630 = vmatpush1.msra.mxu0 0.0
  %631 = vmatprep.subr.mxu0 0.0
  %632 = vmatpush1.msra.mxu0 0.0
  %633 = vmatprep.subr.mxu0 0.0
  %634 = vmatpush1.msra.mxu0 0.0
  %635 = vmatprep.subr.mxu0 0.0
  %636 = vmatpush1.msra.mxu0 0.0
  %637 = vmatprep.subr.mxu0 0.0
  %638 = vmatpush1.msra.mxu0 0.0
  %639 = vmatprep.subr.mxu0 0.0
  %640 = vmatpush1.msra.mxu0 0.0
  %641 = vmatprep.subr.mxu0 0.0
  %642 = vmatpush1.msra.mxu0 0.0
  %643 = vmatprep.subr.mxu0 0.0
  %644 = vmatpush1.msra.mxu0 0.0
  %645 = vmatprep.subr.mxu0 0.0
  %646 = vmatpush1.msra.mxu0 0.0
  %647 = vmatprep.subr.mxu0 0.0
  %648 = vmatpush1.msra.mxu0 0.0
  %649 = vmatprep.subr.mxu0 0.0
  %650 = vmatpush1.msra.mxu0 0.0
  %651 = vmatprep.mubr.f32.mxu0 0.0
  %652 = vmatmul.mubr.f32.gmra.mrb[0].mxu0 %v585
  %v653 = vpop.f32.mrb[0].mxu0
  %v654 = vadd.f32 0.0, %v653
  %v655 = vpop.f32.mrb[0].mxu0
  %656 = vdwg.mxu0
  %v657 = vadd.f32 %v167, %v654
  %v658 = vmul.f32 %v657, 2.0
  %v659 = vsel %vm199, %v658, %v657
  %v660 = vxor.u32 %v659, 2147483648
  %v661 = vmul.f32 %v660, 1.442695
  %v662 = vpow.pop %v661
  %v663 = vadd.f32 %v662, 1.0
  %v664 = vrcp.pop %v663
  %v665 = vmul.f32 1.0, %v664
  %v666 = vmul.f32 %v665, 2.0
  %v667 = vsub.f32 %v666, 1.0
  %v668 = vsel %vm199, %v667, %v665
  %v669 = vmul.f32 %v668, %v400
  %671 = vrot.lane.b32.xlu0 %v668, 64
  %v672 = vpop.permute.xlu0 %671
  %v674 = vmul.f32 %v668, %v672
  %676 = vrot.lane.b32.xlu0 %v674, 32
  %v677 = vpop.permute.xlu0 %676
  %v679 = vadd.f32 %v669, %v677
  %v680 = vtanh.pop %v679
  %682 = vrot.lane.b32.xlu0 %v680, 64
  %v683 = vpop.permute.xlu0 %682
  %v685 = vmul.f32 %v668, %v683
  %687 = vrot.lane.b32.xlu0 %v581, 32
  %v688 = vpop.permute.xlu0 %687
  %v689 = vsel %vm200, %v688, 0
  %691 = vmatprep.subr.mxu0 0.0
  %692 = vmatpush1.msra.mxu0 %v41
  %693 = vmatprep.subr.mxu0 0.0
  %694 = vmatpush1.msra.mxu0 %v42
  %695 = vmatprep.subr.mxu0 0.0
  %696 = vmatpush1.msra.mxu0 %v43
  %697 = vmatprep.subr.mxu0 0.0
  %698 = vmatpush1.msra.mxu0 %v44
  %699 = vmatprep.subr.mxu0 0.0
  %700 = vmatpush1.msra.mxu0 0.0
  %701 = vmatprep.subr.mxu0 0.0
  %702 = vmatpush1.msra.mxu0 0.0
  %703 = vmatprep.subr.mxu0 0.0
  %704 = vmatpush1.msra.mxu0 0.0
  %705 = vmatprep.subr.mxu0 0.0
  %706 = vmatpush1.msra.mxu0 0.0
  %707 = vmatprep.subr.mxu0 0.0
  %708 = vmatpush1.msra.mxu0 0.0
  %709 = vmatprep.subr.mxu0 0.0
  %710 = vmatpush1.msra.mxu0 0.0
  %711 = vmatprep.subr.mxu0 0.0
  %712 = vmatpush1.msra.mxu0 0.0
  %713 = vmatprep.subr.mxu0 0.0
  %714 = vmatpush1.msra.mxu0 0.0
  %715 = vmatprep.subr.mxu0 0.0
  %716 = vmatpush1.msra.mxu0 0.0
  %717 = vmatprep.subr.mxu0 0.0
  %718 = vmatpush1.msra.mxu0 0.0
  %719 = vmatprep.subr.mxu0 0.0
  %720 = vmatpush1.msra.mxu0 0.0
  %721 = vmatprep.subr.mxu0 0.0
  %722 = vmatpush1.msra.mxu0 0.0
  %723 = vmatprep.subr.mxu0 0.0
  %724 = vmatpush1.msra.mxu0 0.0
  %725 = vmatprep.subr.mxu0 0.0
  %726 = vmatpush1.msra.mxu0 0.0
  %727 = vmatprep.subr.mxu0 0.0
  %728 = vmatpush1.msra.mxu0 0.0
  %729 = vmatprep.subr.mxu0 0.0
  %730 = vmatpush1.msra.mxu0 0.0
  %731 = vmatprep.subr.mxu0 0.0
  %732 = vmatpush1.msra.mxu0 0.0
  %733 = vmatprep.subr.mxu0 0.0
  %734 = vmatpush1.msra.mxu0 0.0
  %735 = vmatprep.subr.mxu0 0.0
  %736 = vmatpush1.msra.mxu0 0.0
  %737 = vmatprep.subr.mxu0 0.0
  %738 = vmatpush1.msra.mxu0 0.0
  %739 = vmatprep.subr.mxu0 0.0
  %740 = vmatpush1.msra.mxu0 0.0
  %741 = vmatprep.subr.mxu0 0.0
  %742 = vmatpush1.msra.mxu0 0.0
  %743 = vmatprep.subr.mxu0 0.0
  %744 = vmatpush1.msra.mxu0 0.0
  %745 = vmatprep.subr.mxu0 0.0
  %746 = vmatpush1.msra.mxu0 0.0
  %747 = vmatprep.subr.mxu0 0.0
  %748 = vmatpush1.msra.mxu0 0.0
  %749 = vmatprep.subr.mxu0 0.0
  %750 = vmatpush1.msra.mxu0 0.0
  %751 = vmatprep.subr.mxu0 0.0
  %752 = vmatpush1.msra.mxu0 0.0
  %753 = vmatprep.subr.mxu0 0.0
  %754 = vmatpush1.msra.mxu0 0.0
  %755 = vmatprep.mubr.f32.mxu0 0.0
  %756 = vmatmul.mubr.f32.gmra.mrb[0].mxu0 %v689
  %v757 = vpop.f32.mrb[0].mxu0
  %v758 = vadd.f32 0.0, %v757
  %v759 = vpop.f32.mrb[0].mxu0
  %760 = vdwg.mxu0
  %761 = vmatprep.subr.mxu0 0.0
  %762 = vmatpush1.msra.mxu0 %v33
  %763 = vmatprep.subr.mxu0 0.0
  %764 = vmatpush1.msra.mxu0 %v34
  %765 = vmatprep.subr.mxu0 0.0
  %766 = vmatpush1.msra.mxu0 %v35
  %767 = vmatprep.subr.mxu0 0.0
  %768 = vmatpush1.msra.mxu0 %v36
  %769 = vmatprep.subr.mxu0 0.0
  %770 = vmatpush1.msra.mxu0 0.0
  %771 = vmatprep.subr.mxu0 0.0
  %772 = vmatpush1.msra.mxu0 0.0
  %773 = vmatprep.subr.mxu0 0.0
  %774 = vmatpush1.msra.mxu0 0.0
  %775 = vmatprep.subr.mxu0 0.0
  %776 = vmatpush1.msra.mxu0 0.0
  %777 = vmatprep.subr.mxu0 0.0
  %778 = vmatpush1.msra.mxu0 0.0
  %779 = vmatprep.subr.mxu0 0.0
  %780 = vmatpush1.msra.mxu0 0.0
  %781 = vmatprep.subr.mxu0 0.0
  %782 = vmatpush1.msra.mxu0 0.0
  %783 = vmatprep.subr.mxu0 0.0
  %784 = vmatpush1.msra.mxu0 0.0
  %785 = vmatprep.subr.mxu0 0.0
  %786 = vmatpush1.msra.mxu0 0.0
  %787 = vmatprep.subr.mxu0 0.0
  %788 = vmatpush1.msra.mxu0 0.0
  %789 = vmatprep.subr.mxu0 0.0
  %790 = vmatpush1.msra.mxu0 0.0
  %791 = vmatprep.subr.mxu0 0.0
  %792 = vmatpush1.msra.mxu0 0.0
  %793 = vmatprep.subr.mxu0 0.0
  %794 = vmatpush1.msra.mxu0 0.0
  %795 = vmatprep.subr.mxu0 0.0
  %796 = vmatpush1.msra.mxu0 0.0
  %797 = vmatprep.subr.mxu0 0.0
  %798 = vmatpush1.msra.mxu0 0.0
  %799 = vmatprep.subr.mxu0 0.0
  %800 = vmatpush1.msra.mxu0 0.0
  %801 = vmatprep.subr.mxu0 0.0
  %802 = vmatpush1.msra.mxu0 0.0
  %803 = vmatprep.subr.mxu0 0.0
  %804 = vmatpush1.msra.mxu0 0.0
  %805 = vmatprep.subr.mxu0 0.0
  %806 = vmatpush1.msra.mxu0 0.0
  %807 = vmatprep.subr.mxu0 0.0
  %808 = vmatpush1.msra.mxu0 0.0
  %809 = vmatprep.subr.mxu0 0.0
  %810 = vmatpush1.msra.mxu0 0.0
  %811 = vmatprep.subr.mxu0 0.0
  %812 = vmatpush1.msra.mxu0 0.0
  %813 = vmatprep.subr.mxu0 0.0
  %814 = vmatpush1.msra.mxu0 0.0
  %815 = vmatprep.subr.mxu0 0.0
  %816 = vmatpush1.msra.mxu0 0.0
  %817 = vmatprep.subr.mxu0 0.0
  %818 = vmatpush1.msra.mxu0 0.0
  %819 = vmatprep.subr.mxu0 0.0
  %820 = vmatpush1.msra.mxu0 0.0
  %821 = vmatprep.subr.mxu0 0.0
  %822 = vmatpush1.msra.mxu0 0.0
  %823 = vmatprep.subr.mxu0 0.0
  %824 = vmatpush1.msra.mxu0 0.0
  %825 = vmatprep.mubr.f32.mxu0 0.0
  %826 = vmatmul.mubr.f32.gmra.mrb[0].mxu0 %v585
  %v827 = vpop.f32.mrb[0].mxu0
  %v828 = vadd.f32 %v758, %v827
  %v829 = vpop.f32.mrb[0].mxu0
  %830 = vdwg.mxu0
  %v831 = vadd.f32 %v828, %v551
  %v832 = vmul.f32 %v831, 2.0
  %v833 = vsel %vm199, %v832, %v831
  %v834 = vxor.u32 %v833, 2147483648
  %v835 = vmul.f32 %v834, 1.442695
  %v836 = vpow.pop %v835
  %v837 = vadd.f32 %v836, 1.0
  %v838 = vrcp.pop %v837
  %v839 = vmul.f32 1.0, %v838
  %v840 = vmul.f32 %v839, 2.0
  %v841 = vsub.f32 %v840, 1.0
  %v842 = vsel %vm199, %v841, %v839
  %v843 = vmul.f32 %v842, %v575
  %845 = vrot.lane.b32.xlu0 %v842, 64
  %v846 = vpop.permute.xlu0 %845
  %v848 = vmul.f32 %v842, %v846
  %850 = vrot.lane.b32.xlu0 %v848, 32
  %v851 = vpop.permute.xlu0 %850
  %v853 = vadd.f32 %v843, %v851
  %v854 = vtanh.pop %v853
  %856 = vrot.lane.b32.xlu0 %v854, 64
  %v857 = vpop.permute.xlu0 %856
  %v859 = vmul.f32 %v842, %v857
  %861 = vrot.lane.b32.xlu0 %v685, 32
  %v862 = vpop.permute.xlu0 %861
  %v863 = vsel %vm200, %v862, 0
  %865 = vmatprep.subr.mxu0 0.0
  %866 = vmatpush1.msra.mxu0 %v37
  %867 = vmatprep.subr.mxu0 0.0
  %868 = vmatpush1.msra.mxu0 %v38
  %869 = vmatprep.subr.mxu0 0.0
  %870 = vmatpush1.msra.mxu0 %v39
  %871 = vmatprep.subr.mxu0 0.0
  %872 = vmatpush1.msra.mxu0 %v40
  %873 = vmatprep.subr.mxu0 0.0
  %874 = vmatpush1.msra.mxu0 0.0
  %875 = vmatprep.subr.mxu0 0.0
  %876 = vmatpush1.msra.mxu0 0.0
  %877 = vmatprep.subr.mxu0 0.0
  %878 = vmatpush1.msra.mxu0 0.0
  %879 = vmatprep.subr.mxu0 0.0
  %880 = vmatpush1.msra.mxu0 0.0
  %881 = vmatprep.subr.mxu0 0.0
  %882 = vmatpush1.msra.mxu0 0.0
  %883 = vmatprep.subr.mxu0 0.0
  %884 = vmatpush1.msra.mxu0 0.0
  %885 = vmatprep.subr.mxu0 0.0
  %886 = vmatpush1.msra.mxu0 0.0
  %887 = vmatprep.subr.mxu0 0.0
  %888 = vmatpush1.msra.mxu0 0.0
  %889 = vmatprep.subr.mxu0 0.0
  %890 = vmatpush1.msra.mxu0 0.0
  %891 = vmatprep.subr.mxu0 0.0
  %892 = vmatpush1.msra.mxu0 0.0
  %893 = vmatprep.subr.mxu0 0.0
  %894 = vmatpush1.msra.mxu0 0.0
  %895 = vmatprep.subr.mxu0 0.0
  %896 = vmatpush1.msra.mxu0 0.0
  %897 = vmatprep.subr.mxu0 0.0
  %898 = vmatpush1.msra.mxu0 0.0
  %899 = vmatprep.subr.mxu0 0.0
  %900 = vmatpush1.msra.mxu0 0.0
  %901 = vmatprep.subr.mxu0 0.0
  %902 = vmatpush1.msra.mxu0 0.0
  %903 = vmatprep.subr.mxu0 0.0
  %904 = vmatpush1.msra.mxu0 0.0
  %905 = vmatprep.subr.mxu0 0.0
  %906 = vmatpush1.msra.mxu0 0.0
  %907 = vmatprep.subr.mxu0 0.0
  %908 = vmatpush1.msra.mxu0 0.0
  %909 = vmatprep.subr.mxu0 0.0
  %910 = vmatpush1.msra.mxu0 0.0
  %911 = vmatprep.subr.mxu0 0.0
  %912 = vmatpush1.msra.mxu0 0.0
  %913 = vmatprep.subr.mxu0 0.0
  %914 = vmatpush1.msra.mxu0 0.0
  %915 = vmatprep.subr.mxu0 0.0
  %916 = vmatpush1.msra.mxu0 0.0
  %917 = vmatprep.subr.mxu0 0.0
  %918 = vmatpush1.msra.mxu0 0.0
  %919 = vmatprep.subr.mxu0 0.0
  %920 = vmatpush1.msra.mxu0 0.0
  %921 = vmatprep.subr.mxu0 0.0
  %922 = vmatpush1.msra.mxu0 0.0
  %923 = vmatprep.subr.mxu0 0.0
  %924 = vmatpush1.msra.mxu0 0.0
  %925 = vmatprep.subr.mxu0 0.0
  %926 = vmatpush1.msra.mxu0 0.0
  %927 = vmatprep.subr.mxu0 0.0
  %928 = vmatpush1.msra.mxu0 0.0
  %929 = vmatprep.mubr.f32.mxu0 0.0
  %930 = vmatmul.mubr.f32.gmra.mrb[0].mxu0 %v863
  %v931 = vpop.f32.mrb[0].mxu0
  %v932 = vadd.f32 0.0, %v931
  %v933 = vpop.f32.mrb[0].mxu0
  %934 = vdwg.mxu0
  %v935 = vadd.f32 %v172, %v932
  %v936 = vmul.f32 %v935, 2.0
  %v937 = vsel %vm199, %v936, %v935
  %v938 = vxor.u32 %v937, 2147483648
  %v939 = vmul.f32 %v938, 1.442695
  %v940 = vpow.pop %v939
  %v941 = vadd.f32 %v940, 1.0
  %v942 = vrcp.pop %v941
  %v943 = vmul.f32 1.0, %v942
  %v944 = vmul.f32 %v943, 2.0
  %v945 = vsub.f32 %v944, 1.0
  %v946 = vsel %vm199, %v945, %v943
  %v947 = vmul.f32 %v946, %v679
  %949 = vrot.lane.b32.xlu0 %v946, 64
  %v950 = vpop.permute.xlu0 %949
  %v952 = vmul.f32 %v946, %v950
  %954 = vrot.lane.b32.xlu0 %v952, 32
  %v955 = vpop.permute.xlu0 %954
  %v957 = vadd.f32 %v947, %v955
  %v958 = vtanh.pop %v957
  %960 = vrot.lane.b32.xlu0 %v958, 64
  %v961 = vpop.permute.xlu0 %960
  %v963 = vmul.f32 %v946, %v961
  %965 = vrot.lane.b32.xlu0 %v859, 32
  %v966 = vpop.permute.xlu0 %965
  %v967 = vsel %vm200, %v966, 0
  %969 = vmatprep.subr.mxu0 0.0
  %970 = vmatpush1.msra.mxu0 %v41
  %971 = vmatprep.subr.mxu0 0.0
  %972 = vmatpush1.msra.mxu0 %v42
  %973 = vmatprep.subr.mxu0 0.0
  %974 = vmatpush1.msra.mxu0 %v43
  %975 = vmatprep.subr.mxu0 0.0
  %976 = vmatpush1.msra.mxu0 %v44
  %977 = vmatprep.subr.mxu0 0.0
  %978 = vmatpush1.msra.mxu0 0.0
  %979 = vmatprep.subr.mxu0 0.0
  %980 = vmatpush1.msra.mxu0 0.0
  %981 = vmatprep.subr.mxu0 0.0
  %982 = vmatpush1.msra.mxu0 0.0
  %983 = vmatprep.subr.mxu0 0.0
  %984 = vmatpush1.msra.mxu0 0.0
  %985 = vmatprep.subr.mxu0 0.0
  %986 = vmatpush1.msra.mxu0 0.0
  %987 = vmatprep.subr.mxu0 0.0
  %988 = vmatpush1.msra.mxu0 0.0
  %989 = vmatprep.subr.mxu0 0.0
  %990 = vmatpush1.msra.mxu0 0.0
  %991 = vmatprep.subr.mxu0 0.0
  %992 = vmatpush1.msra.mxu0 0.0
  %993 = vmatprep.subr.mxu0 0.0
  %994 = vmatpush1.msra.mxu0 0.0
  %995 = vmatprep.subr.mxu0 0.0
  %996 = vmatpush1.msra.mxu0 0.0
  %997 = vmatprep.subr.mxu0 0.0
  %998 = vmatpush1.msra.mxu0 0.0
  %999 = vmatprep.subr.mxu0 0.0
  %1000 = vmatpush1.msra.mxu0 0.0
  %1001 = vmatprep.subr.mxu0 0.0
  %1002 = vmatpush1.msra.mxu0 0.0
  %1003 = vmatprep.subr.mxu0 0.0
  %1004 = vmatpush1.msra.mxu0 0.0
  %1005 = vmatprep.subr.mxu0 0.0
  %1006 = vmatpush1.msra.mxu0 0.0
  %1007 = vmatprep.subr.mxu0 0.0
  %1008 = vmatpush1.msra.mxu0 0.0
  %1009 = vmatprep.subr.mxu0 0.0
  %1010 = vmatpush1.msra.mxu0 0.0
  %1011 = vmatprep.subr.mxu0 0.0
  %1012 = vmatpush1.msra.mxu0 0.0
  %1013 = vmatprep.subr.mxu0 0.0
  %1014 = vmatpush1.msra.mxu0 0.0
  %1015 = vmatprep.subr.mxu0 0.0
  %1016 = vmatpush1.msra.mxu0 0.0
  %1017 = vmatprep.subr.mxu0 0.0
  %1018 = vmatpush1.msra.mxu0 0.0
  %1019 = vmatprep.subr.mxu0 0.0
  %1020 = vmatpush1.msra.mxu0 0.0
  %1021 = vmatprep.subr.mxu0 0.0
  %1022 = vmatpush1.msra.mxu0 0.0
  %1023 = vmatprep.subr.mxu0 0.0
  %1024 = vmatpush1.msra.mxu0 0.0
  %1025 = vmatprep.subr.mxu0 0.0
  %1026 = vmatpush1.msra.mxu0 0.0
  %1027 = vmatprep.subr.mxu0 0.0
  %1028 = vmatpush1.msra.mxu0 0.0
  %1029 = vmatprep.subr.mxu0 0.0
  %1030 = vmatpush1.msra.mxu0 0.0
  %1031 = vmatprep.subr.mxu0 0.0
  %1032 = vmatpush1.msra.mxu0 0.0
  %1033 = vmatprep.mubr.f32.mxu0 0.0
  %1034 = vmatmul.mubr.f32.gmra.mrb[0].mxu0 %v967
  %v1035 = vpop.f32.mrb[0].mxu0
  %v1036 = vadd.f32 0.0, %v1035
  %v1037 = vpop.f32.mrb[0].mxu0
  %1038 = vdwg.mxu0
  %1039 = vmatprep.subr.mxu0 0.0
  %1040 = vmatpush1.msra.mxu0 %v33
  %1041 = vmatprep.subr.mxu0 0.0
  %1042 = vmatpush1.msra.mxu0 %v34
  %1043 = vmatprep.subr.mxu0 0.0
  %1044 = vmatpush1.msra.mxu0 %v35
  %1045 = vmatprep.subr.mxu0 0.0
  %1046 = vmatpush1.msra.mxu0 %v36
  %1047 = vmatprep.subr.mxu0 0.0
  %1048 = vmatpush1.msra.mxu0 0.0
  %1049 = vmatprep.subr.mxu0 0.0
  %1050 = vmatpush1.msra.mxu0 0.0
  %1051 = vmatprep.subr.mxu0 0.0
  %1052 = vmatpush1.msra.mxu0 0.0
  %1053 = vmatprep.subr.mxu0 0.0
  %1054 = vmatpush1.msra.mxu0 0.0
  %1055 = vmatprep.subr.mxu0 0.0
  %1056 = vmatpush1.msra.mxu0 0.0
  %1057 = vmatprep.subr.mxu0 0.0
  %1058 = vmatpush1.msra.mxu0 0.0
  %1059 = vmatprep.subr.mxu0 0.0
  %1060 = vmatpush1.msra.mxu0 0.0
  %1061 = vmatprep.subr.mxu0 0.0
  %1062 = vmatpush1.msra.mxu0 0.0
  %1063 = vmatprep.subr.mxu0 0.0
  %1064 = vmatpush1.msra.mxu0 0.0
  %1065 = vmatprep.subr.mxu0 0.0
  %1066 = vmatpush1.msra.mxu0 0.0
  %1067 = vmatprep.subr.mxu0 0.0
  %1068 = vmatpush1.msra.mxu0 0.0
  %1069 = vmatprep.subr.mxu0 0.0
  %1070 = vmatpush1.msra.mxu0 0.0
  %1071 = vmatprep.subr.mxu0 0.0
  %1072 = vmatpush1.msra.mxu0 0.0
  %1073 = vmatprep.subr.mxu0 0.0
  %1074 = vmatpush1.msra.mxu0 0.0
  %1075 = vmatprep.subr.mxu0 0.0
  %1076 = vmatpush1.msra.mxu0 0.0
  %1077 = vmatprep.subr.mxu0 0.0
  %1078 = vmatpush1.msra.mxu0 0.0
  %1079 = vmatprep.subr.mxu0 0.0
  %1080 = vmatpush1.msra.mxu0 0.0
  %1081 = vmatprep.subr.mxu0 0.0
  %1082 = vmatpush1.msra.mxu0 0.0
  %1083 = vmatprep.subr.mxu0 0.0
  %1084 = vmatpush1.msra.mxu0 0.0
  %1085 = vmatprep.subr.mxu0 0.0
  %1086 = vmatpush1.msra.mxu0 0.0
  %1087 = vmatprep.subr.mxu0 0.0
  %1088 = vmatpush1.msra.mxu0 0.0
  %1089 = vmatprep.subr.mxu0 0.0
  %1090 = vmatpush1.msra.mxu0 0.0
  %1091 = vmatprep.subr.mxu0 0.0
  %1092 = vmatpush1.msra.mxu0 0.0
  %1093 = vmatprep.subr.mxu0 0.0
  %1094 = vmatpush1.msra.mxu0 0.0
  %1095 = vmatprep.subr.mxu0 0.0
  %1096 = vmatpush1.msra.mxu0 0.0
  %1097 = vmatprep.subr.mxu0 0.0
  %1098 = vmatpush1.msra.mxu0 0.0
  %1099 = vmatprep.subr.mxu0 0.0
  %1100 = vmatpush1.msra.mxu0 0.0
  %1101 = vmatprep.subr.mxu0 0.0
  %1102 = vmatpush1.msra.mxu0 0.0
  %1103 = vmatprep.mubr.f32.mxu0 0.0
  %1104 = vmatmul.mubr.f32.gmra.mrb[0].mxu0 %v863
  %v1105 = vpop.f32.mrb[0].mxu0
  %v1106 = vadd.f32 %v1036, %v1105
  %v1107 = vpop.f32.mrb[0].mxu0
  %1108 = vdwg.mxu0
  %v1109 = vadd.f32 %v1106, %v551
  %v1110 = vmul.f32 %v1109, 2.0
  %v1111 = vsel %vm199, %v1110, %v1109
  %v1112 = vxor.u32 %v1111, 2147483648
  %v1113 = vmul.f32 %v1112, 1.442695
  %v1114 = vpow.pop %v1113
  %v1115 = vadd.f32 %v1114, 1.0
  %v1116 = vrcp.pop %v1115
  %v1117 = vmul.f32 1.0, %v1116
  %v1118 = vmul.f32 %v1117, 2.0
  %v1119 = vsub.f32 %v1118, 1.0
  %v1120 = vsel %vm199, %v1119, %v1117
  %v1121 = vmul.f32 %v1120, %v853
  %1123 = vrot.lane.b32.xlu0 %v1120, 64
  %v1124 = vpop.permute.xlu0 %1123
  %v1126 = vmul.f32 %v1120, %v1124
  %1128 = vrot.lane.b32.xlu0 %v1126, 32
  %v1129 = vpop.permute.xlu0 %1128
  %v1131 = vadd.f32 %v1121, %v1129
  %v1132 = vtanh.pop %v1131
  %1134 = vrot.lane.b32.xlu0 %v1132, 64
  %v1135 = vpop.permute.xlu0 %1134
  %v1137 = vmul.f32 %v1120, %v1135
  %1139 = vrot.lane.b32.xlu0 %v963, 32
  %v1140 = vpop.permute.xlu0 %1139
  %v1141 = vsel %vm200, %v1140, 0
  %1143 = vmatprep.subr.mxu0 0.0
  %1144 = vmatpush1.msra.mxu0 %v37
  %1145 = vmatprep.subr.mxu0 0.0
  %1146 = vmatpush1.msra.mxu0 %v38
  %1147 = vmatprep.subr.mxu0 0.0
  %1148 = vmatpush1.msra.mxu0 %v39
  %1149 = vmatprep.subr.mxu0 0.0
  %1150 = vmatpush1.msra.mxu0 %v40
  %1151 = vmatprep.subr.mxu0 0.0
  %1152 = vmatpush1.msra.mxu0 0.0
  %1153 = vmatprep.subr.mxu0 0.0
  %1154 = vmatpush1.msra.mxu0 0.0
  %1155 = vmatprep.subr.mxu0 0.0
  %1156 = vmatpush1.msra.mxu0 0.0
  %1157 = vmatprep.subr.mxu0 0.0
  %1158 = vmatpush1.msra.mxu0 0.0
  %1159 = vmatprep.subr.mxu0 0.0
  %1160 = vmatpush1.msra.mxu0 0.0
  %1161 = vmatprep.subr.mxu0 0.0
  %1162 = vmatpush1.msra.mxu0 0.0
  %1163 = vmatprep.subr.mxu0 0.0
  %1164 = vmatpush1.msra.mxu0 0.0
  %1165 = vmatprep.subr.mxu0 0.0
  %1166 = vmatpush1.msra.mxu0 0.0
  %1167 = vmatprep.subr.mxu0 0.0
  %1168 = vmatpush1.msra.mxu0 0.0
  %1169 = vmatprep.subr.mxu0 0.0
  %1170 = vmatpush1.msra.mxu0 0.0
  %1171 = vmatprep.subr.mxu0 0.0
  %1172 = vmatpush1.msra.mxu0 0.0
  %1173 = vmatprep.subr.mxu0 0.0
  %1174 = vmatpush1.msra.mxu0 0.0
  %1175 = vmatprep.subr.mxu0 0.0
  %1176 = vmatpush1.msra.mxu0 0.0
  %1177 = vmatprep.subr.mxu0 0.0
  %1178 = vmatpush1.msra.mxu0 0.0
  %1179 = vmatprep.subr.mxu0 0.0
  %1180 = vmatpush1.msra.mxu0 0.0
  %1181 = vmatprep.subr.mxu0 0.0
  %1182 = vmatpush1.msra.mxu0 0.0
  %1183 = vmatprep.subr.mxu0 0.0
  %1184 = vmatpush1.msra.mxu0 0.0
  %1185 = vmatprep.subr.mxu0 0.0
  %1186 = vmatpush1.msra.mxu0 0.0
  %1187 = vmatprep.subr.mxu0 0.0
  %1188 = vmatpush1.msra.mxu0 0.0
  %1189 = vmatprep.subr.mxu0 0.0
  %1190 = vmatpush1.msra.mxu0 0.0
  %1191 = vmatprep.subr.mxu0 0.0
  %1192 = vmatpush1.msra.mxu0 0.0
  %1193 = vmatprep.subr.mxu0 0.0
  %1194 = vmatpush1.msra.mxu0 0.0
  %1195 = vmatprep.subr.mxu0 0.0
  %1196 = vmatpush1.msra.mxu0 0.0
  %1197 = vmatprep.subr.mxu0 0.0
  %1198 = vmatpush1.msra.mxu0 0.0
  %1199 = vmatprep.subr.mxu0 0.0
  %1200 = vmatpush1.msra.mxu0 0.0
  %1201 = vmatprep.subr.mxu0 0.0
  %1202 = vmatpush1.msra.mxu0 0.0
  %1203 = vmatprep.subr.mxu0 0.0
  %1204 = vmatpush1.msra.mxu0 0.0
  %1205 = vmatprep.subr.mxu0 0.0
  %1206 = vmatpush1.msra.mxu0 0.0
  %1207 = vmatprep.mubr.f32.mxu0 0.0
  %1208 = vmatmul.mubr.f32.gmra.mrb[0].mxu0 %v1141
  %v1209 = vpop.f32.mrb[0].mxu0
  %v1210 = vadd.f32 0.0, %v1209
  %v1211 = vpop.f32.mrb[0].mxu0
  %1212 = vdwg.mxu0
  %v1213 = vadd.f32 %v177, %v1210
  %v1214 = vmul.f32 %v1213, 2.0
  %v1215 = vsel %vm199, %v1214, %v1213
  %v1216 = vxor.u32 %v1215, 2147483648
  %v1217 = vmul.f32 %v1216, 1.442695
  %v1218 = vpow.pop %v1217
  %v1219 = vadd.f32 %v1218, 1.0
  %v1220 = vrcp.pop %v1219
  %v1221 = vmul.f32 1.0, %v1220
  %v1222 = vmul.f32 %v1221, 2.0
  %v1223 = vsub.f32 %v1222, 1.0
  %v1224 = vsel %vm199, %v1223, %v1221
  %v1225 = vmul.f32 %v1224, %v957
  %1227 = vrot.lane.b32.xlu0 %v1224, 64
  %v1228 = vpop.permute.xlu0 %1227
  %v1230 = vmul.f32 %v1224, %v1228
  %1232 = vrot.lane.b32.xlu0 %v1230, 32
  %v1233 = vpop.permute.xlu0 %1232
  %v1235 = vadd.f32 %v1225, %v1233
  %v1236 = vtanh.pop %v1235
  %1238 = vrot.lane.b32.xlu0 %v1236, 64
  %v1239 = vpop.permute.xlu0 %1238
  %v1241 = vmul.f32 %v1224, %v1239
  %1243 = vrot.lane.b32.xlu0 %v1137, 32
  %v1244 = vpop.permute.xlu0 %1243
  %v1245 = vsel %vm200, %v1244, 0
  %1247 = vmatprep.subr.mxu0 0.0
  %1248 = vmatpush1.msra.mxu0 %v41
  %1249 = vmatprep.subr.mxu0 0.0
  %1250 = vmatpush1.msra.mxu0 %v42
  %1251 = vmatprep.subr.mxu0 0.0
  %1252 = vmatpush1.msra.mxu0 %v43
  %1253 = vmatprep.subr.mxu0 0.0
  %1254 = vmatpush1.msra.mxu0 %v44
  %1255 = vmatprep.subr.mxu0 0.0
  %1256 = vmatpush1.msra.mxu0 0.0
  %1257 = vmatprep.subr.mxu0 0.0
  %1258 = vmatpush1.msra.mxu0 0.0
  %1259 = vmatprep.subr.mxu0 0.0
  %1260 = vmatpush1.msra.mxu0 0.0
  %1261 = vmatprep.subr.mxu0 0.0
  %1262 = vmatpush1.msra.mxu0 0.0
  %1263 = vmatprep.subr.mxu0 0.0
  %1264 = vmatpush1.msra.mxu0 0.0
  %1265 = vmatprep.subr.mxu0 0.0
  %1266 = vmatpush1.msra.mxu0 0.0
  %1267 = vmatprep.subr.mxu0 0.0
  %1268 = vmatpush1.msra.mxu0 0.0
  %1269 = vmatprep.subr.mxu0 0.0
  %1270 = vmatpush1.msra.mxu0 0.0
  %1271 = vmatprep.subr.mxu0 0.0
  %1272 = vmatpush1.msra.mxu0 0.0
  %1273 = vmatprep.subr.mxu0 0.0
  %1274 = vmatpush1.msra.mxu0 0.0
  %1275 = vmatprep.subr.mxu0 0.0
  %1276 = vmatpush1.msra.mxu0 0.0
  %1277 = vmatprep.subr.mxu0 0.0
  %1278 = vmatpush1.msra.mxu0 0.0
  %1279 = vmatprep.subr.mxu0 0.0
  %1280 = vmatpush1.msra.mxu0 0.0
  %1281 = vmatprep.subr.mxu0 0.0
  %1282 = vmatpush1.msra.mxu0 0.0
  %1283 = vmatprep.subr.mxu0 0.0
  %1284 = vmatpush1.msra.mxu0 0.0
  %1285 = vmatprep.subr.mxu0 0.0
  %1286 = vmatpush1.msra.mxu0 0.0
  %1287 = vmatprep.subr.mxu0 0.0
  %1288 = vmatpush1.msra.mxu0 0.0
  %1289 = vmatprep.subr.mxu0 0.0
  %1290 = vmatpush1.msra.mxu0 0.0
  %1291 = vmatprep.subr.mxu0 0.0
  %1292 = vmatpush1.msra.mxu0 0.0
  %1293 = vmatprep.subr.mxu0 0.0
  %1294 = vmatpush1.msra.mxu0 0.0
  %1295 = vmatprep.subr.mxu0 0.0
  %1296 = vmatpush1.msra.mxu0 0.0
  %1297 = vmatprep.subr.mxu0 0.0
  %1298 = vmatpush1.msra.mxu0 0.0
  %1299 = vmatprep.subr.mxu0 0.0
  %1300 = vmatpush1.msra.mxu0 0.0
  %1301 = vmatprep.subr.mxu0 0.0
  %1302 = vmatpush1.msra.mxu0 0.0
  %1303 = vmatprep.subr.mxu0 0.0
  %1304 = vmatpush1.msra.mxu0 0.0
  %1305 = vmatprep.subr.mxu0 0.0
  %1306 = vmatpush1.msra.mxu0 0.0
  %1307 = vmatprep.subr.mxu0 0.0
  %1308 = vmatpush1.msra.mxu0 0.0
  %1309 = vmatprep.subr.mxu0 0.0
  %1310 = vmatpush1.msra.mxu0 0.0
  %1311 = vmatprep.mubr.f32.mxu0 0.0
  %1312 = vmatmul.mubr.f32.gmra.mrb[0].mxu0 %v1245
  %v1313 = vpop.f32.mrb[0].mxu0
  %v1314 = vadd.f32 0.0, %v1313
  %v1315 = vpop.f32.mrb[0].mxu0
  %1316 = vdwg.mxu0
  %1317 = vmatprep.subr.mxu0 0.0
  %1318 = vmatpush1.msra.mxu0 %v33
  %1319 = vmatprep.subr.mxu0 0.0
  %1320 = vmatpush1.msra.mxu0 %v34
  %1321 = vmatprep.subr.mxu0 0.0
  %1322 = vmatpush1.msra.mxu0 %v35
  %1323 = vmatprep.subr.mxu0 0.0
  %1324 = vmatpush1.msra.mxu0 %v36
  %1325 = vmatprep.subr.mxu0 0.0
  %1326 = vmatpush1.msra.mxu0 0.0
  %1327 = vmatprep.subr.mxu0 0.0
  %1328 = vmatpush1.msra.mxu0 0.0
  %1329 = vmatprep.subr.mxu0 0.0
  %1330 = vmatpush1.msra.mxu0 0.0
  %1331 = vmatprep.subr.mxu0 0.0
  %1332 = vmatpush1.msra.mxu0 0.0
  %1333 = vmatprep.subr.mxu0 0.0
  %1334 = vmatpush1.msra.mxu0 0.0
  %1335 = vmatprep.subr.mxu0 0.0
  %1336 = vmatpush1.msra.mxu0 0.0
  %1337 = vmatprep.subr.mxu0 0.0
  %1338 = vmatpush1.msra.mxu0 0.0
  %1339 = vmatprep.subr.mxu0 0.0
  %1340 = vmatpush1.msra.mxu0 0.0
  %1341 = vmatprep.subr.mxu0 0.0
  %1342 = vmatpush1.msra.mxu0 0.0
  %1343 = vmatprep.subr.mxu0 0.0
  %1344 = vmatpush1.msra.mxu0 0.0
  %1345 = vmatprep.subr.mxu0 0.0
  %1346 = vmatpush1.msra.mxu0 0.0
  %1347 = vmatprep.subr.mxu0 0.0
  %1348 = vmatpush1.msra.mxu0 0.0
  %1349 = vmatprep.subr.mxu0 0.0
  %1350 = vmatpush1.msra.mxu0 0.0
  %1351 = vmatprep.subr.mxu0 0.0
  %1352 = vmatpush1.msra.mxu0 0.0
  %1353 = vmatprep.subr.mxu0 0.0
  %1354 = vmatpush1.msra.mxu0 0.0
  %1355 = vmatprep.subr.mxu0 0.0
  %1356 = vmatpush1.msra.mxu0 0.0
  %1357 = vmatprep.subr.mxu0 0.0
  %1358 = vmatpush1.msra.mxu0 0.0
  %1359 = vmatprep.subr.mxu0 0.0
  %1360 = vmatpush1.msra.mxu0 0.0
  %1361 = vmatprep.subr.mxu0 0.0
  %1362 = vmatpush1.msra.mxu0 0.0
  %1363 = vmatprep.subr.mxu0 0.0
  %1364 = vmatpush1.msra.mxu0 0.0
  %1365 = vmatprep.subr.mxu0 0.0
  %1366 = vmatpush1.msra.mxu0 0.0
  %1367 = vmatprep.subr.mxu0 0.0
  %1368 = vmatpush1.msra.mxu0 0.0
  %1369 = vmatprep.subr.mxu0 0.0
  %1370 = vmatpush1.msra.mxu0 0.0
  %1371 = vmatprep.subr.mxu0 0.0
  %1372 = vmatpush1.msra.mxu0 0.0
  %1373 = vmatprep.subr.mxu0 0.0
  %1374 = vmatpush1.msra.mxu0 0.0
  %1375 = vmatprep.subr.mxu0 0.0
  %1376 = vmatpush1.msra.mxu0 0.0
  %1377 = vmatprep.subr.mxu0 0.0
  %1378 = vmatpush1.msra.mxu0 0.0
  %1379 = vmatprep.subr.mxu0 0.0
  %1380 = vmatpush1.msra.mxu0 0.0
  %1381 = vmatprep.mubr.f32.mxu0 0.0
  %1382 = vmatmul.mubr.f32.gmra.mrb[0].mxu0 %v1141
  %v1383 = vpop.f32.mrb[0].mxu0
  %v1384 = vadd.f32 %v1314, %v1383
  %v1385 = vpop.f32.mrb[0].mxu0
  %1386 = vdwg.mxu0
  %v1387 = vadd.f32 %v1384, %v551
  %v1388 = vmul.f32 %v1387, 2.0
  %v1389 = vsel %vm199, %v1388, %v1387
  %v1390 = vxor.u32 %v1389, 2147483648
  %v1391 = vmul.f32 %v1390, 1.442695
  %v1392 = vpow.pop %v1391
  %v1393 = vadd.f32 %v1392, 1.0
  %v1394 = vrcp.pop %v1393
  %v1395 = vmul.f32 1.0, %v1394
  %v1396 = vmul.f32 %v1395, 2.0
  %v1397 = vsub.f32 %v1396, 1.0
  %v1398 = vsel %vm199, %v1397, %v1395
  %v1399 = vmul.f32 %v1398, %v1131
  %1401 = vrot.lane.b32.xlu0 %v1398, 64
  %v1402 = vpop.permute.xlu0 %1401
  %v1404 = vmul.f32 %v1398, %v1402
  %1406 = vrot.lane.b32.xlu0 %v1404, 32
  %v1407 = vpop.permute.xlu0 %1406
  %v1409 = vadd.f32 %v1399, %v1407
  %v1410 = vtanh.pop %v1409
  %1412 = vrot.lane.b32.xlu0 %v1410, 64
  %v1413 = vpop.permute.xlu0 %1412
  %v1415 = vmul.f32 %v1398, %v1413
  %1417 = vrot.lane.b32.xlu0 %v1241, 32
  %v1418 = vpop.permute.xlu0 %1417
  %v1419 = vsel %vm200, %v1418, 0
  %1421 = vmatprep.subr.mxu0 0.0
  %1422 = vmatpush1.msra.mxu0 %v37
  %1423 = vmatprep.subr.mxu0 0.0
  %1424 = vmatpush1.msra.mxu0 %v38
  %1425 = vmatprep.subr.mxu0 0.0
  %1426 = vmatpush1.msra.mxu0 %v39
  %1427 = vmatprep.subr.mxu0 0.0
  %1428 = vmatpush1.msra.mxu0 %v40
  %1429 = vmatprep.subr.mxu0 0.0
  %1430 = vmatpush1.msra.mxu0 0.0
  %1431 = vmatprep.subr.mxu0 0.0
  %1432 = vmatpush1.msra.mxu0 0.0
  %1433 = vmatprep.subr.mxu0 0.0
  %1434 = vmatpush1.msra.mxu0 0.0
  %1435 = vmatprep.subr.mxu0 0.0
  %1436 = vmatpush1.msra.mxu0 0.0
  %1437 = vmatprep.subr.mxu0 0.0
  %1438 = vmatpush1.msra.mxu0 0.0
  %1439 = vmatprep.subr.mxu0 0.0
  %1440 = vmatpush1.msra.mxu0 0.0
  %1441 = vmatprep.subr.mxu0 0.0
  %1442 = vmatpush1.msra.mxu0 0.0
  %1443 = vmatprep.subr.mxu0 0.0
  %1444 = vmatpush1.msra.mxu0 0.0
  %1445 = vmatprep.subr.mxu0 0.0
  %1446 = vmatpush1.msra.mxu0 0.0
  %1447 = vmatprep.subr.mxu0 0.0
  %1448 = vmatpush1.msra.mxu0 0.0
  %1449 = vmatprep.subr.mxu0 0.0
  %1450 = vmatpush1.msra.mxu0 0.0
  %1451 = vmatprep.subr.mxu0 0.0
  %1452 = vmatpush1.msra.mxu0 0.0
  %1453 = vmatprep.subr.mxu0 0.0
  %1454 = vmatpush1.msra.mxu0 0.0
  %1455 = vmatprep.subr.mxu0 0.0
  %1456 = vmatpush1.msra.mxu0 0.0
  %1457 = vmatprep.subr.mxu0 0.0
  %1458 = vmatpush1.msra.mxu0 0.0
  %1459 = vmatprep.subr.mxu0 0.0
  %1460 = vmatpush1.msra.mxu0 0.0
  %1461 = vmatprep.subr.mxu0 0.0
  %1462 = vmatpush1.msra.mxu0 0.0
  %1463 = vmatprep.subr.mxu0 0.0
  %1464 = vmatpush1.msra.mxu0 0.0
  %1465 = vmatprep.subr.mxu0 0.0
  %1466 = vmatpush1.msra.mxu0 0.0
  %1467 = vmatprep.subr.mxu0 0.0
  %1468 = vmatpush1.msra.mxu0 0.0
  %1469 = vmatprep.subr.mxu0 0.0
  %1470 = vmatpush1.msra.mxu0 0.0
  %1471 = vmatprep.subr.mxu0 0.0
  %1472 = vmatpush1.msra.mxu0 0.0
  %1473 = vmatprep.subr.mxu0 0.0
  %1474 = vmatpush1.msra.mxu0 0.0
  %1475 = vmatprep.subr.mxu0 0.0
  %1476 = vmatpush1.msra.mxu0 0.0
  %1477 = vmatprep.subr.mxu0 0.0
  %1478 = vmatpush1.msra.mxu0 0.0
  %1479 = vmatprep.subr.mxu0 0.0
  %1480 = vmatpush1.msra.mxu0 0.0
  %1481 = vmatprep.subr.mxu0 0.0
  %1482 = vmatpush1.msra.mxu0 0.0
  %1483 = vmatprep.subr.mxu0 0.0
  %1484 = vmatpush1.msra.mxu0 0.0
  %1485 = vmatprep.mubr.f32.mxu0 0.0
  %1486 = vmatmul.mubr.f32.gmra.mrb[0].mxu0 %v1419
  %v1487 = vpop.f32.mrb[0].mxu0
  %v1488 = vadd.f32 0.0, %v1487
  %v1489 = vpop.f32.mrb[0].mxu0
  %1490 = vdwg.mxu0
  %v1491 = vadd.f32 %v182, %v1488
  %v1492 = vmul.f32 %v1491, 2.0
  %v1493 = vsel %vm199, %v1492, %v1491
  %v1494 = vxor.u32 %v1493, 2147483648
  %v1495 = vmul.f32 %v1494, 1.442695
  %v1496 = vpow.pop %v1495
  %v1497 = vadd.f32 %v1496, 1.0
  %v1498 = vrcp.pop %v1497
  %v1499 = vmul.f32 1.0, %v1498
  %v1500 = vmul.f32 %v1499, 2.0
  %v1501 = vsub.f32 %v1500, 1.0
  %v1502 = vsel %vm199, %v1501, %v1499
  %v1503 = vmul.f32 %v1502, %v1235
  %1505 = vrot.lane.b32.xlu0 %v1502, 64
  %v1506 = vpop.permute.xlu0 %1505
  %v1508 = vmul.f32 %v1502, %v1506
  %1510 = vrot.lane.b32.xlu0 %v1508, 32
  %v1511 = vpop.permute.xlu0 %1510
  %v1513 = vadd.f32 %v1503, %v1511
  %v1514 = vtanh.pop %v1513
  %1516 = vrot.lane.b32.xlu0 %v1514, 64
  %v1517 = vpop.permute.xlu0 %1516
  %v1519 = vmul.f32 %v1502, %v1517
  %1521 = vrot.lane.b32.xlu0 %v1415, 32
  %v1522 = vpop.permute.xlu0 %1521
  %v1523 = vsel %vm200, %v1522, 0
  %1525 = vmatprep.subr.mxu0 0.0
  %1526 = vmatpush1.msra.mxu0 %v41
  %1527 = vmatprep.subr.mxu0 0.0
  %1528 = vmatpush1.msra.mxu0 %v42
  %1529 = vmatprep.subr.mxu0 0.0
  %1530 = vmatpush1.msra.mxu0 %v43
  %1531 = vmatprep.subr.mxu0 0.0
  %1532 = vmatpush1.msra.mxu0 %v44
  %1533 = vmatprep.subr.mxu0 0.0
  %1534 = vmatpush1.msra.mxu0 0.0
  %1535 = vmatprep.subr.mxu0 0.0
  %1536 = vmatpush1.msra.mxu0 0.0
  %1537 = vmatprep.subr.mxu0 0.0
  %1538 = vmatpush1.msra.mxu0 0.0
  %1539 = vmatprep.subr.mxu0 0.0
  %1540 = vmatpush1.msra.mxu0 0.0
  %1541 = vmatprep.subr.mxu0 0.0
  %1542 = vmatpush1.msra.mxu0 0.0
  %1543 = vmatprep.subr.mxu0 0.0
  %1544 = vmatpush1.msra.mxu0 0.0
  %1545 = vmatprep.subr.mxu0 0.0
  %1546 = vmatpush1.msra.mxu0 0.0
  %1547 = vmatprep.subr.mxu0 0.0
  %1548 = vmatpush1.msra.mxu0 0.0
  %1549 = vmatprep.subr.mxu0 0.0
  %1550 = vmatpush1.msra.mxu0 0.0
  %1551 = vmatprep.subr.mxu0 0.0
  %1552 = vmatpush1.msra.mxu0 0.0
  %1553 = vmatprep.subr.mxu0 0.0
  %1554 = vmatpush1.msra.mxu0 0.0
  %1555 = vmatprep.subr.mxu0 0.0
  %1556 = vmatpush1.msra.mxu0 0.0
  %1557 = vmatprep.subr.mxu0 0.0
  %1558 = vmatpush1.msra.mxu0 0.0
  %1559 = vmatprep.subr.mxu0 0.0
  %1560 = vmatpush1.msra.mxu0 0.0
  %1561 = vmatprep.subr.mxu0 0.0
  %1562 = vmatpush1.msra.mxu0 0.0
  %1563 = vmatprep.subr.mxu0 0.0
  %1564 = vmatpush1.msra.mxu0 0.0
  %1565 = vmatprep.subr.mxu0 0.0
  %1566 = vmatpush1.msra.mxu0 0.0
  %1567 = vmatprep.subr.mxu0 0.0
  %1568 = vmatpush1.msra.mxu0 0.0
  %1569 = vmatprep.subr.mxu0 0.0
  %1570 = vmatpush1.msra.mxu0 0.0
  %1571 = vmatprep.subr.mxu0 0.0
  %1572 = vmatpush1.msra.mxu0 0.0
  %1573 = vmatprep.subr.mxu0 0.0
  %1574 = vmatpush1.msra.mxu0 0.0
  %1575 = vmatprep.subr.mxu0 0.0
  %1576 = vmatpush1.msra.mxu0 0.0
  %1577 = vmatprep.subr.mxu0 0.0
  %1578 = vmatpush1.msra.mxu0 0.0
  %1579 = vmatprep.subr.mxu0 0.0
  %1580 = vmatpush1.msra.mxu0 0.0
  %1581 = vmatprep.subr.mxu0 0.0
  %1582 = vmatpush1.msra.mxu0 0.0
  %1583 = vmatprep.subr.mxu0 0.0
  %1584 = vmatpush1.msra.mxu0 0.0
  %1585 = vmatprep.subr.mxu0 0.0
  %1586 = vmatpush1.msra.mxu0 0.0
  %1587 = vmatprep.subr.mxu0 0.0
  %1588 = vmatpush1.msra.mxu0 0.0
  %1589 = vmatprep.mubr.f32.mxu0 0.0
  %1590 = vmatmul.mubr.f32.gmra.mrb[0].mxu0 %v1523
  %v1591 = vpop.f32.mrb[0].mxu0
  %v1592 = vadd.f32 0.0, %v1591
  %v1593 = vpop.f32.mrb[0].mxu0
  %1594 = vdwg.mxu0
  %1595 = vmatprep.subr.mxu0 0.0
  %1596 = vmatpush1.msra.mxu0 %v33
  %1597 = vmatprep.subr.mxu0 0.0
  %1598 = vmatpush1.msra.mxu0 %v34
  %1599 = vmatprep.subr.mxu0 0.0
  %1600 = vmatpush1.msra.mxu0 %v35
  %1601 = vmatprep.subr.mxu0 0.0
  %1602 = vmatpush1.msra.mxu0 %v36
  %1603 = vmatprep.subr.mxu0 0.0
  %1604 = vmatpush1.msra.mxu0 0.0
  %1605 = vmatprep.subr.mxu0 0.0
  %1606 = vmatpush1.msra.mxu0 0.0
  %1607 = vmatprep.subr.mxu0 0.0
  %1608 = vmatpush1.msra.mxu0 0.0
  %1609 = vmatprep.subr.mxu0 0.0
  %1610 = vmatpush1.msra.mxu0 0.0
  %1611 = vmatprep.subr.mxu0 0.0
  %1612 = vmatpush1.msra.mxu0 0.0
  %1613 = vmatprep.subr.mxu0 0.0
  %1614 = vmatpush1.msra.mxu0 0.0
  %1615 = vmatprep.subr.mxu0 0.0
  %1616 = vmatpush1.msra.mxu0 0.0
  %1617 = vmatprep.subr.mxu0 0.0
  %1618 = vmatpush1.msra.mxu0 0.0
  %1619 = vmatprep.subr.mxu0 0.0
  %1620 = vmatpush1.msra.mxu0 0.0
  %1621 = vmatprep.subr.mxu0 0.0
  %1622 = vmatpush1.msra.mxu0 0.0
  %1623 = vmatprep.subr.mxu0 0.0
  %1624 = vmatpush1.msra.mxu0 0.0
  %1625 = vmatprep.subr.mxu0 0.0
  %1626 = vmatpush1.msra.mxu0 0.0
  %1627 = vmatprep.subr.mxu0 0.0
  %1628 = vmatpush1.msra.mxu0 0.0
  %1629 = vmatprep.subr.mxu0 0.0
  %1630 = vmatpush1.msra.mxu0 0.0
  %1631 = vmatprep.subr.mxu0 0.0
  %1632 = vmatpush1.msra.mxu0 0.0
  %1633 = vmatprep.subr.mxu0 0.0
  %1634 = vmatpush1.msra.mxu0 0.0
  %1635 = vmatprep.subr.mxu0 0.0
  %1636 = vmatpush1.msra.mxu0 0.0
  %1637 = vmatprep.subr.mxu0 0.0
  %1638 = vmatpush1.msra.mxu0 0.0
  %1639 = vmatprep.subr.mxu0 0.0
  %1640 = vmatpush1.msra.mxu0 0.0
  %1641 = vmatprep.subr.mxu0 0.0
  %1642 = vmatpush1.msra.mxu0 0.0
  %1643 = vmatprep.subr.mxu0 0.0
  %1644 = vmatpush1.msra.mxu0 0.0
  %1645 = vmatprep.subr.mxu0 0.0
  %1646 = vmatpush1.msra.mxu0 0.0
  %1647 = vmatprep.subr.mxu0 0.0
  %1648 = vmatpush1.msra.mxu0 0.0
  %1649 = vmatprep.subr.mxu0 0.0
  %1650 = vmatpush1.msra.mxu0 0.0
  %1651 = vmatprep.subr.mxu0 0.0
  %1652 = vmatpush1.msra.mxu0 0.0
  %1653 = vmatprep.subr.mxu0 0.0
  %1654 = vmatpush1.msra.mxu0 0.0
  %1655 = vmatprep.subr.mxu0 0.0
  %1656 = vmatpush1.msra.mxu0 0.0
  %1657 = vmatprep.subr.mxu0 0.0
  %1658 = vmatpush1.msra.mxu0 0.0
  %1659 = vmatprep.mubr.f32.mxu0 0.0
  %1660 = vmatmul.mubr.f32.gmra.mrb[0].mxu0 %v1419
  %v1661 = vpop.f32.mrb[0].mxu0
  %v1662 = vadd.f32 %v1592, %v1661
  %v1663 = vpop.f32.mrb[0].mxu0
  %1664 = vdwg.mxu0
  %v1665 = vadd.f32 %v1662, %v551
  %v1666 = vmul.f32 %v1665, 2.0
  %v1667 = vsel %vm199, %v1666, %v1665
  %v1668 = vxor.u32 %v1667, 2147483648
  %v1669 = vmul.f32 %v1668, 1.442695
  %v1670 = vpow.pop %v1669
  %v1671 = vadd.f32 %v1670, 1.0
  %v1672 = vrcp.pop %v1671
  %v1673 = vmul.f32 1.0, %v1672
  %v1674 = vmul.f32 %v1673, 2.0
  %v1675 = vsub.f32 %v1674, 1.0
  %v1676 = vsel %vm199, %v1675, %v1673
  %v1677 = vmul.f32 %v1676, %v1409
  %1679 = vrot.lane.b32.xlu0 %v1676, 64
  %v1680 = vpop.permute.xlu0 %1679
  %v1682 = vmul.f32 %v1676, %v1680
  %1684 = vrot.lane.b32.xlu0 %v1682, 32
  %v1685 = vpop.permute.xlu0 %1684
  %v1687 = vadd.f32 %v1677, %v1685
  %v1688 = vtanh.pop %v1687
  %1690 = vrot.lane.b32.xlu0 %v1688, 64
  %v1691 = vpop.permute.xlu0 %1690
  %v1693 = vmul.f32 %v1676, %v1691
  %1695 = vrot.lane.b32.xlu0 %v1693, 32
  %v1696 = vpop.permute.xlu0 %1695
  %1698 = vst.msk [vmem:[#allocation2] sm:$0xff] %vm200, %v1696
  %1700 = vrot.lane.b32.xlu0 %v1519, 32
  %v1701 = vpop.permute.xlu0 %1700
  %v1702 = vsel %vm200, %v1701, 0
  %1704 = vmatprep.subr.mxu0 0.0
  %1705 = vmatpush1.msra.mxu0 %v37
  %1706 = vmatprep.subr.mxu0 0.0
  %1707 = vmatpush1.msra.mxu0 %v38
  %1708 = vmatprep.subr.mxu0 0.0
  %1709 = vmatpush1.msra.mxu0 %v39
  %1710 = vmatprep.subr.mxu0 0.0
  %1711 = vmatpush1.msra.mxu0 %v40
  %1712 = vmatprep.subr.mxu0 0.0
  %1713 = vmatpush1.msra.mxu0 0.0
  %1714 = vmatprep.subr.mxu0 0.0
  %1715 = vmatpush1.msra.mxu0 0.0
  %1716 = vmatprep.subr.mxu0 0.0
  %1717 = vmatpush1.msra.mxu0 0.0
  %1718 = vmatprep.subr.mxu0 0.0
  %1719 = vmatpush1.msra.mxu0 0.0
  %1720 = vmatprep.subr.mxu0 0.0
  %1721 = vmatpush1.msra.mxu0 0.0
  %1722 = vmatprep.subr.mxu0 0.0
  %1723 = vmatpush1.msra.mxu0 0.0
  %1724 = vmatprep.subr.mxu0 0.0
  %1725 = vmatpush1.msra.mxu0 0.0
  %1726 = vmatprep.subr.mxu0 0.0
  %1727 = vmatpush1.msra.mxu0 0.0
  %1728 = vmatprep.subr.mxu0 0.0
  %1729 = vmatpush1.msra.mxu0 0.0
  %1730 = vmatprep.subr.mxu0 0.0
  %1731 = vmatpush1.msra.mxu0 0.0
  %1732 = vmatprep.subr.mxu0 0.0
  %1733 = vmatpush1.msra.mxu0 0.0
  %1734 = vmatprep.subr.mxu0 0.0
  %1735 = vmatpush1.msra.mxu0 0.0
  %1736 = vmatprep.subr.mxu0 0.0
  %1737 = vmatpush1.msra.mxu0 0.0
  %1738 = vmatprep.subr.mxu0 0.0
  %1739 = vmatpush1.msra.mxu0 0.0
  %1740 = vmatprep.subr.mxu0 0.0
  %1741 = vmatpush1.msra.mxu0 0.0
  %1742 = vmatprep.subr.mxu0 0.0
  %1743 = vmatpush1.msra.mxu0 0.0
  %1744 = vmatprep.subr.mxu0 0.0
  %1745 = vmatpush1.msra.mxu0 0.0
  %1746 = vmatprep.subr.mxu0 0.0
  %1747 = vmatpush1.msra.mxu0 0.0
  %1748 = vmatprep.subr.mxu0 0.0
  %1749 = vmatpush1.msra.mxu0 0.0
  %1750 = vmatprep.subr.mxu0 0.0
  %1751 = vmatpush1.msra.mxu0 0.0
  %1752 = vmatprep.subr.mxu0 0.0
  %1753 = vmatpush1.msra.mxu0 0.0
  %1754 = vmatprep.subr.mxu0 0.0
  %1755 = vmatpush1.msra.mxu0 0.0
  %1756 = vmatprep.subr.mxu0 0.0
  %1757 = vmatpush1.msra.mxu0 0.0
  %1758 = vmatprep.subr.mxu0 0.0
  %1759 = vmatpush1.msra.mxu0 0.0
  %1760 = vmatprep.subr.mxu0 0.0
  %1761 = vmatpush1.msra.mxu0 0.0
  %1762 = vmatprep.subr.mxu0 0.0
  %1763 = vmatpush1.msra.mxu0 0.0
  %1764 = vmatprep.subr.mxu0 0.0
  %1765 = vmatpush1.msra.mxu0 0.0
  %1766 = vmatprep.subr.mxu0 0.0
  %1767 = vmatpush1.msra.mxu0 0.0
  %1768 = vmatprep.mubr.f32.mxu0 0.0
  %1769 = vmatmul.mubr.f32.gmra.mrb[0].mxu0 %v1702
  %v1770 = vpop.f32.mrb[0].mxu0
  %v1771 = vadd.f32 0.0, %v1770
  %v1772 = vpop.f32.mrb[0].mxu0
  %1773 = vdwg.mxu0
  %v1774 = vadd.f32 %v187, %v1771
  %v1775 = vmul.f32 %v1774, 2.0
  %v1776 = vsel %vm199, %v1775, %v1774
  %v1777 = vxor.u32 %v1776, 2147483648
  %v1778 = vmul.f32 %v1777, 1.442695
  %v1779 = vpow.pop %v1778
  %v1780 = vadd.f32 %v1779, 1.0
  %v1781 = vrcp.pop %v1780
  %v1782 = vmul.f32 1.0, %v1781
  %v1783 = vmul.f32 %v1782, 2.0
  %v1784 = vsub.f32 %v1783, 1.0
  %v1785 = vsel %vm199, %v1784, %v1782
  %v1786 = vmul.f32 %v1785, %v1513
  %1788 = vrot.lane.b32.xlu0 %v1785, 64
  %v1789 = vpop.permute.xlu0 %1788
  %v1791 = vmul.f32 %v1785, %v1789
  %1793 = vrot.lane.b32.xlu0 %v1791, 32
  %v1794 = vpop.permute.xlu0 %1793
  %v1796 = vadd.f32 %v1786, %v1794
  %v1797 = vtanh.pop %v1796
  %1799 = vrot.lane.b32.xlu0 %v1797, 64
  %v1800 = vpop.permute.xlu0 %1799
  %v1802 = vmul.f32 %v1785, %v1800
  %v1803 = vsel %vm200, %v1696, 0
  %1805 = vmatprep.subr.mxu0 0.0
  %1806 = vmatpush1.msra.mxu0 %v41
  %1807 = vmatprep.subr.mxu0 0.0
  %1808 = vmatpush1.msra.mxu0 %v42
  %1809 = vmatprep.subr.mxu0 0.0
  %1810 = vmatpush1.msra.mxu0 %v43
  %1811 = vmatprep.subr.mxu0 0.0
  %1812 = vmatpush1.msra.mxu0 %v44
  %1813 = vmatprep.subr.mxu0 0.0
  %1814 = vmatpush1.msra.mxu0 0.0
  %1815 = vmatprep.subr.mxu0 0.0
  %1816 = vmatpush1.msra.mxu0 0.0
  %1817 = vmatprep.subr.mxu0 0.0
  %1818 = vmatpush1.msra.mxu0 0.0
  %1819 = vmatprep.subr.mxu0 0.0
  %1820 = vmatpush1.msra.mxu0 0.0
  %1821 = vmatprep.subr.mxu0 0.0
  %1822 = vmatpush1.msra.mxu0 0.0
  %1823 = vmatprep.subr.mxu0 0.0
  %1824 = vmatpush1.msra.mxu0 0.0
  %1825 = vmatprep.subr.mxu0 0.0
  %1826 = vmatpush1.msra.mxu0 0.0
  %1827 = vmatprep.subr.mxu0 0.0
  %1828 = vmatpush1.msra.mxu0 0.0
  %1829 = vmatprep.subr.mxu0 0.0
  %1830 = vmatpush1.msra.mxu0 0.0
  %1831 = vmatprep.subr.mxu0 0.0
  %1832 = vmatpush1.msra.mxu0 0.0
  %1833 = vmatprep.subr.mxu0 0.0
  %1834 = vmatpush1.msra.mxu0 0.0
  %1835 = vmatprep.subr.mxu0 0.0
  %1836 = vmatpush1.msra.mxu0 0.0
  %1837 = vmatprep.subr.mxu0 0.0
  %1838 = vmatpush1.msra.mxu0 0.0
  %1839 = vmatprep.subr.mxu0 0.0
  %1840 = vmatpush1.msra.mxu0 0.0
  %1841 = vmatprep.subr.mxu0 0.0
  %1842 = vmatpush1.msra.mxu0 0.0
  %1843 = vmatprep.subr.mxu0 0.0
  %1844 = vmatpush1.msra.mxu0 0.0
  %1845 = vmatprep.subr.mxu0 0.0
  %1846 = vmatpush1.msra.mxu0 0.0
  %1847 = vmatprep.subr.mxu0 0.0
  %1848 = vmatpush1.msra.mxu0 0.0
  %1849 = vmatprep.subr.mxu0 0.0
  %1850 = vmatpush1.msra.mxu0 0.0
  %1851 = vmatprep.subr.mxu0 0.0
  %1852 = vmatpush1.msra.mxu0 0.0
  %1853 = vmatprep.subr.mxu0 0.0
  %1854 = vmatpush1.msra.mxu0 0.0
  %1855 = vmatprep.subr.mxu0 0.0
  %1856 = vmatpush1.msra.mxu0 0.0
  %1857 = vmatprep.subr.mxu0 0.0
  %1858 = vmatpush1.msra.mxu0 0.0
  %1859 = vmatprep.subr.mxu0 0.0
  %1860 = vmatpush1.msra.mxu0 0.0
  %1861 = vmatprep.subr.mxu0 0.0
  %1862 = vmatpush1.msra.mxu0 0.0
  %1863 = vmatprep.subr.mxu0 0.0
  %1864 = vmatpush1.msra.mxu0 0.0
  %1865 = vmatprep.subr.mxu0 0.0
  %1866 = vmatpush1.msra.mxu0 0.0
  %1867 = vmatprep.subr.mxu0 0.0
  %1868 = vmatpush1.msra.mxu0 0.0
  %1869 = vmatprep.mubr.f32.mxu0 0.0
  %1870 = vmatmul.mubr.f32.gmra.mrb[0].mxu0 %v1803
  %v1871 = vpop.f32.mrb[0].mxu0
  %v1872 = vadd.f32 0.0, %v1871
  %v1873 = vpop.f32.mrb[0].mxu0
  %1874 = vdwg.mxu0
  %1875 = vmatprep.subr.mxu0 0.0
  %1876 = vmatpush1.msra.mxu0 %v33
  %1877 = vmatprep.subr.mxu0 0.0
  %1878 = vmatpush1.msra.mxu0 %v34
  %1879 = vmatprep.subr.mxu0 0.0
  %1880 = vmatpush1.msra.mxu0 %v35
  %1881 = vmatprep.subr.mxu0 0.0
  %1882 = vmatpush1.msra.mxu0 %v36
  %1883 = vmatprep.subr.mxu0 0.0
  %1884 = vmatpush1.msra.mxu0 0.0
  %1885 = vmatprep.subr.mxu0 0.0
  %1886 = vmatpush1.msra.mxu0 0.0
  %1887 = vmatprep.subr.mxu0 0.0
  %1888 = vmatpush1.msra.mxu0 0.0
  %1889 = vmatprep.subr.mxu0 0.0
  %1890 = vmatpush1.msra.mxu0 0.0
  %1891 = vmatprep.subr.mxu0 0.0
  %1892 = vmatpush1.msra.mxu0 0.0
  %1893 = vmatprep.subr.mxu0 0.0
  %1894 = vmatpush1.msra.mxu0 0.0
  %1895 = vmatprep.subr.mxu0 0.0
  %1896 = vmatpush1.msra.mxu0 0.0
  %1897 = vmatprep.subr.mxu0 0.0
  %1898 = vmatpush1.msra.mxu0 0.0
  %1899 = vmatprep.subr.mxu0 0.0
  %1900 = vmatpush1.msra.mxu0 0.0
  %1901 = vmatprep.subr.mxu0 0.0
  %1902 = vmatpush1.msra.mxu0 0.0
  %1903 = vmatprep.subr.mxu0 0.0
  %1904 = vmatpush1.msra.mxu0 0.0
  %1905 = vmatprep.subr.mxu0 0.0
  %1906 = vmatpush1.msra.mxu0 0.0
  %1907 = vmatprep.subr.mxu0 0.0
  %1908 = vmatpush1.msra.mxu0 0.0
  %1909 = vmatprep.subr.mxu0 0.0
  %1910 = vmatpush1.msra.mxu0 0.0
  %1911 = vmatprep.subr.mxu0 0.0
  %1912 = vmatpush1.msra.mxu0 0.0
  %1913 = vmatprep.subr.mxu0 0.0
  %1914 = vmatpush1.msra.mxu0 0.0
  %1915 = vmatprep.subr.mxu0 0.0
  %1916 = vmatpush1.msra.mxu0 0.0
  %1917 = vmatprep.subr.mxu0 0.0
  %1918 = vmatpush1.msra.mxu0 0.0
  %1919 = vmatprep.subr.mxu0 0.0
  %1920 = vmatpush1.msra.mxu0 0.0
  %1921 = vmatprep.subr.mxu0 0.0
  %1922 = vmatpush1.msra.mxu0 0.0
  %1923 = vmatprep.subr.mxu0 0.0
  %1924 = vmatpush1.msra.mxu0 0.0
  %1925 = vmatprep.subr.mxu0 0.0
  %1926 = vmatpush1.msra.mxu0 0.0
  %1927 = vmatprep.subr.mxu0 0.0
  %1928 = vmatpush1.msra.mxu0 0.0
  %1929 = vmatprep.subr.mxu0 0.0
  %1930 = vmatpush1.msra.mxu0 0.0
  %1931 = vmatprep.subr.mxu0 0.0
  %1932 = vmatpush1.msra.mxu0 0.0
  %1933 = vmatprep.subr.mxu0 0.0
  %1934 = vmatpush1.msra.mxu0 0.0
  %1935 = vmatprep.subr.mxu0 0.0
  %1936 = vmatpush1.msra.mxu0 0.0
  %1937 = vmatprep.subr.mxu0 0.0
  %1938 = vmatpush1.msra.mxu0 0.0
  %1939 = vmatprep.mubr.f32.mxu0 0.0
  %1940 = vmatmul.mubr.f32.gmra.mrb[0].mxu0 %v1702
  %v1941 = vpop.f32.mrb[0].mxu0
  %v1942 = vadd.f32 %v1872, %v1941
  %v1943 = vpop.f32.mrb[0].mxu0
  %1944 = vdwg.mxu0
  %v1945 = vadd.f32 %v1942, %v551
  %v1946 = vmul.f32 %v1945, 2.0
  %v1947 = vsel %vm199, %v1946, %v1945
  %v1948 = vxor.u32 %v1947, 2147483648
  %v1949 = vmul.f32 %v1948, 1.442695
  %v1950 = vpow.pop %v1949
  %v1951 = vadd.f32 %v1950, 1.0
  %v1952 = vrcp.pop %v1951
  %v1953 = vmul.f32 1.0, %v1952
  %v1954 = vmul.f32 %v1953, 2.0
  %v1955 = vsub.f32 %v1954, 1.0
  %v1956 = vsel %vm199, %v1955, %v1953
  %v1957 = vmul.f32 %v1956, %v1687
  %1959 = vrot.lane.b32.xlu0 %v1956, 64
  %v1960 = vpop.permute.xlu0 %1959
  %v1962 = vmul.f32 %v1956, %v1960
  %1964 = vrot.lane.b32.xlu0 %v1962, 32
  %v1965 = vpop.permute.xlu0 %1964
  %v1967 = vadd.f32 %v1957, %v1965
  %v1968 = vtanh.pop %v1967
  %1970 = vrot.lane.b32.xlu0 %v1968, 64
  %v1971 = vpop.permute.xlu0 %1970
  %v1973 = vmul.f32 %v1956, %v1971
  %1975 = vrot.lane.b32.xlu0 %v1973, 32
  %v1976 = vpop.permute.xlu0 %1975
  %1978 = vst.msk [vmem:[#allocation2 + $0x8] sm:$0xff] %vm200, %v1976
  %1980 = vrot.lane.b32.xlu0 %v1802, 32
  %v1981 = vpop.permute.xlu0 %1980
  %v1982 = vsel %vm200, %v1981, 0
  %1984 = vmatprep.subr.mxu0 0.0
  %1985 = vmatpush1.msra.mxu0 %v37
  %1986 = vmatprep.subr.mxu0 0.0
  %1987 = vmatpush1.msra.mxu0 %v38
  %1988 = vmatprep.subr.mxu0 0.0
  %1989 = vmatpush1.msra.mxu0 %v39
  %1990 = vmatprep.subr.mxu0 0.0
  %1991 = vmatpush1.msra.mxu0 %v40
  %1992 = vmatprep.subr.mxu0 0.0
  %1993 = vmatpush1.msra.mxu0 0.0
  %1994 = vmatprep.subr.mxu0 0.0
  %1995 = vmatpush1.msra.mxu0 0.0
  %1996 = vmatprep.subr.mxu0 0.0
  %1997 = vmatpush1.msra.mxu0 0.0
  %1998 = vmatprep.subr.mxu0 0.0
  %1999 = vmatpush1.msra.mxu0 0.0
  %2000 = vmatprep.subr.mxu0 0.0
  %2001 = vmatpush1.msra.mxu0 0.0
  %2002 = vmatprep.subr.mxu0 0.0
  %2003 = vmatpush1.msra.mxu0 0.0
  %2004 = vmatprep.subr.mxu0 0.0
  %2005 = vmatpush1.msra.mxu0 0.0
  %2006 = vmatprep.subr.mxu0 0.0
  %2007 = vmatpush1.msra.mxu0 0.0
  %2008 = vmatprep.subr.mxu0 0.0
  %2009 = vmatpush1.msra.mxu0 0.0
  %2010 = vmatprep.subr.mxu0 0.0
  %2011 = vmatpush1.msra.mxu0 0.0
  %2012 = vmatprep.subr.mxu0 0.0
  %2013 = vmatpush1.msra.mxu0 0.0
  %2014 = vmatprep.subr.mxu0 0.0
  %2015 = vmatpush1.msra.mxu0 0.0
  %2016 = vmatprep.subr.mxu0 0.0
  %2017 = vmatpush1.msra.mxu0 0.0
  %2018 = vmatprep.subr.mxu0 0.0
  %2019 = vmatpush1.msra.mxu0 0.0
  %2020 = vmatprep.subr.mxu0 0.0
  %2021 = vmatpush1.msra.mxu0 0.0
  %2022 = vmatprep.subr.mxu0 0.0
  %2023 = vmatpush1.msra.mxu0 0.0
  %2024 = vmatprep.subr.mxu0 0.0
  %2025 = vmatpush1.msra.mxu0 0.0
  %2026 = vmatprep.subr.mxu0 0.0
  %2027 = vmatpush1.msra.mxu0 0.0
  %2028 = vmatprep.subr.mxu0 0.0
  %2029 = vmatpush1.msra.mxu0 0.0
  %2030 = vmatprep.subr.mxu0 0.0
  %2031 = vmatpush1.msra.mxu0 0.0
  %2032 = vmatprep.subr.mxu0 0.0
  %2033 = vmatpush1.msra.mxu0 0.0
  %2034 = vmatprep.subr.mxu0 0.0
  %2035 = vmatpush1.msra.mxu0 0.0
  %2036 = vmatprep.subr.mxu0 0.0
  %2037 = vmatpush1.msra.mxu0 0.0
  %2038 = vmatprep.subr.mxu0 0.0
  %2039 = vmatpush1.msra.mxu0 0.0
  %2040 = vmatprep.subr.mxu0 0.0
  %2041 = vmatpush1.msra.mxu0 0.0
  %2042 = vmatprep.subr.mxu0 0.0
  %2043 = vmatpush1.msra.mxu0 0.0
  %2044 = vmatprep.subr.mxu0 0.0
  %2045 = vmatpush1.msra.mxu0 0.0
  %2046 = vmatprep.subr.mxu0 0.0
  %2047 = vmatpush1.msra.mxu0 0.0
  %2048 = vmatprep.mubr.f32.mxu0 0.0
  %2049 = vmatmul.mubr.f32.gmra.mrb[0].mxu0 %v1982
  %v2050 = vpop.f32.mrb[0].mxu0
  %v2051 = vadd.f32 0.0, %v2050
  %v2052 = vpop.f32.mrb[0].mxu0
  %2053 = vdwg.mxu0
  %v2054 = vadd.f32 %v192, %v2051
  %v2055 = vmul.f32 %v2054, 2.0
  %v2056 = vsel %vm199, %v2055, %v2054
  %v2057 = vxor.u32 %v2056, 2147483648
  %v2058 = vmul.f32 %v2057, 1.442695
  %v2059 = vpow.pop %v2058
  %v2060 = vadd.f32 %v2059, 1.0
  %v2061 = vrcp.pop %v2060
  %v2062 = vmul.f32 1.0, %v2061
  %v2063 = vmul.f32 %v2062, 2.0
  %v2064 = vsub.f32 %v2063, 1.0
  %v2065 = vsel %vm199, %v2064, %v2062
  %v2066 = vmul.f32 %v2065, %v1796
  %2068 = vrot.lane.b32.xlu0 %v2065, 64
  %v2069 = vpop.permute.xlu0 %2068
  %v2071 = vmul.f32 %v2065, %v2069
  %2073 = vrot.lane.b32.xlu0 %v2071, 32
  %v2074 = vpop.permute.xlu0 %2073
  %v2076 = vadd.f32 %v2066, %v2074
  %v2077 = vtanh.pop %v2076
  %2079 = vrot.lane.b32.xlu0 %v2077, 64
  %v2080 = vpop.permute.xlu0 %2079
  %v2082 = vmul.f32 %v2065, %v2080
  %v2083 = vsel %vm200, %v1976, 0
  %2085 = vmatprep.subr.mxu0 0.0
  %2086 = vmatpush1.msra.mxu0 %v41
  %2087 = vmatprep.subr.mxu0 0.0
  %2088 = vmatpush1.msra.mxu0 %v42
  %2089 = vmatprep.subr.mxu0 0.0
  %2090 = vmatpush1.msra.mxu0 %v43
  %2091 = vmatprep.subr.mxu0 0.0
  %2092 = vmatpush1.msra.mxu0 %v44
  %2093 = vmatprep.subr.mxu0 0.0
  %2094 = vmatpush1.msra.mxu0 0.0
  %2095 = vmatprep.subr.mxu0 0.0
  %2096 = vmatpush1.msra.mxu0 0.0
  %2097 = vmatprep.subr.mxu0 0.0
  %2098 = vmatpush1.msra.mxu0 0.0
  %2099 = vmatprep.subr.mxu0 0.0
  %2100 = vmatpush1.msra.mxu0 0.0
  %2101 = vmatprep.subr.mxu0 0.0
  %2102 = vmatpush1.msra.mxu0 0.0
  %2103 = vmatprep.subr.mxu0 0.0
  %2104 = vmatpush1.msra.mxu0 0.0
  %2105 = vmatprep.subr.mxu0 0.0
  %2106 = vmatpush1.msra.mxu0 0.0
  %2107 = vmatprep.subr.mxu0 0.0
  %2108 = vmatpush1.msra.mxu0 0.0
  %2109 = vmatprep.subr.mxu0 0.0
  %2110 = vmatpush1.msra.mxu0 0.0
  %2111 = vmatprep.subr.mxu0 0.0
  %2112 = vmatpush1.msra.mxu0 0.0
  %2113 = vmatprep.subr.mxu0 0.0
  %2114 = vmatpush1.msra.mxu0 0.0
  %2115 = vmatprep.subr.mxu0 0.0
  %2116 = vmatpush1.msra.mxu0 0.0
  %2117 = vmatprep.subr.mxu0 0.0
  %2118 = vmatpush1.msra.mxu0 0.0
  %2119 = vmatprep.subr.mxu0 0.0
  %2120 = vmatpush1.msra.mxu0 0.0
  %2121 = vmatprep.subr.mxu0 0.0
  %2122 = vmatpush1.msra.mxu0 0.0
  %2123 = vmatprep.subr.mxu0 0.0
  %2124 = vmatpush1.msra.mxu0 0.0
  %2125 = vmatprep.subr.mxu0 0.0
  %2126 = vmatpush1.msra.mxu0 0.0
  %2127 = vmatprep.subr.mxu0 0.0
  %2128 = vmatpush1.msra.mxu0 0.0
  %2129 = vmatprep.subr.mxu0 0.0
  %2130 = vmatpush1.msra.mxu0 0.0
  %2131 = vmatprep.subr.mxu0 0.0
  %2132 = vmatpush1.msra.mxu0 0.0
  %2133 = vmatprep.subr.mxu0 0.0
  %2134 = vmatpush1.msra.mxu0 0.0
  %2135 = vmatprep.subr.mxu0 0.0
  %2136 = vmatpush1.msra.mxu0 0.0
  %2137 = vmatprep.subr.mxu0 0.0
  %2138 = vmatpush1.msra.mxu0 0.0
  %2139 = vmatprep.subr.mxu0 0.0
  %2140 = vmatpush1.msra.mxu0 0.0
  %2141 = vmatprep.subr.mxu0 0.0
  %2142 = vmatpush1.msra.mxu0 0.0
  %2143 = vmatprep.subr.mxu0 0.0
  %2144 = vmatpush1.msra.mxu0 0.0
  %2145 = vmatprep.subr.mxu0 0.0
  %2146 = vmatpush1.msra.mxu0 0.0
  %2147 = vmatprep.subr.mxu0 0.0
  %2148 = vmatpush1.msra.mxu0 0.0
  %2149 = vmatprep.mubr.f32.mxu0 0.0
  %2150 = vmatmul.mubr.f32.gmra.mrb[0].mxu0 %v2083
  %v2151 = vpop.f32.mrb[0].mxu0
  %v2152 = vadd.f32 0.0, %v2151
  %v2153 = vpop.f32.mrb[0].mxu0
  %2154 = vdwg.mxu0
  %2155 = vmatprep.subr.mxu0 0.0
  %2156 = vmatpush1.msra.mxu0 %v33
  %2157 = vmatprep.subr.mxu0 0.0
  %2158 = vmatpush1.msra.mxu0 %v34
  %2159 = vmatprep.subr.mxu0 0.0
  %2160 = vmatpush1.msra.mxu0 %v35
  %2161 = vmatprep.subr.mxu0 0.0
  %2162 = vmatpush1.msra.mxu0 %v36
  %2163 = vmatprep.subr.mxu0 0.0
  %2164 = vmatpush1.msra.mxu0 0.0
  %2165 = vmatprep.subr.mxu0 0.0
  %2166 = vmatpush1.msra.mxu0 0.0
  %2167 = vmatprep.subr.mxu0 0.0
  %2168 = vmatpush1.msra.mxu0 0.0
  %2169 = vmatprep.subr.mxu0 0.0
  %2170 = vmatpush1.msra.mxu0 0.0
  %2171 = vmatprep.subr.mxu0 0.0
  %2172 = vmatpush1.msra.mxu0 0.0
  %2173 = vmatprep.subr.mxu0 0.0
  %2174 = vmatpush1.msra.mxu0 0.0
  %2175 = vmatprep.subr.mxu0 0.0
  %2176 = vmatpush1.msra.mxu0 0.0
  %2177 = vmatprep.subr.mxu0 0.0
  %2178 = vmatpush1.msra.mxu0 0.0
  %2179 = vmatprep.subr.mxu0 0.0
  %2180 = vmatpush1.msra.mxu0 0.0
  %2181 = vmatprep.subr.mxu0 0.0
  %2182 = vmatpush1.msra.mxu0 0.0
  %2183 = vmatprep.subr.mxu0 0.0
  %2184 = vmatpush1.msra.mxu0 0.0
  %2185 = vmatprep.subr.mxu0 0.0
  %2186 = vmatpush1.msra.mxu0 0.0
  %2187 = vmatprep.subr.mxu0 0.0
  %2188 = vmatpush1.msra.mxu0 0.0
  %2189 = vmatprep.subr.mxu0 0.0
  %2190 = vmatpush1.msra.mxu0 0.0
  %2191 = vmatprep.subr.mxu0 0.0
  %2192 = vmatpush1.msra.mxu0 0.0
  %2193 = vmatprep.subr.mxu0 0.0
  %2194 = vmatpush1.msra.mxu0 0.0
  %2195 = vmatprep.subr.mxu0 0.0
  %2196 = vmatpush1.msra.mxu0 0.0
  %2197 = vmatprep.subr.mxu0 0.0
  %2198 = vmatpush1.msra.mxu0 0.0
  %2199 = vmatprep.subr.mxu0 0.0
  %2200 = vmatpush1.msra.mxu0 0.0
  %2201 = vmatprep.subr.mxu0 0.0
  %2202 = vmatpush1.msra.mxu0 0.0
  %2203 = vmatprep.subr.mxu0 0.0
  %2204 = vmatpush1.msra.mxu0 0.0
  %2205 = vmatprep.subr.mxu0 0.0
  %2206 = vmatpush1.msra.mxu0 0.0
  %2207 = vmatprep.subr.mxu0 0.0
  %2208 = vmatpush1.msra.mxu0 0.0
  %2209 = vmatprep.subr.mxu0 0.0
  %2210 = vmatpush1.msra.mxu0 0.0
  %2211 = vmatprep.subr.mxu0 0.0
  %2212 = vmatpush1.msra.mxu0 0.0
  %2213 = vmatprep.subr.mxu0 0.0
  %2214 = vmatpush1.msra.mxu0 0.0
  %2215 = vmatprep.subr.mxu0 0.0
  %2216 = vmatpush1.msra.mxu0 0.0
  %2217 = vmatprep.subr.mxu0 0.0
  %2218 = vmatpush1.msra.mxu0 0.0
  %2219 = vmatprep.mubr.f32.mxu0 0.0
  %2220 = vmatmul.mubr.f32.gmra.mrb[0].mxu0 %v1982
  %v2221 = vpop.f32.mrb[0].mxu0
  %v2222 = vadd.f32 %v2152, %v2221
  %v2223 = vpop.f32.mrb[0].mxu0
  %2224 = vdwg.mxu0
  %v2225 = vadd.f32 %v2222, %v551
  %v2226 = vmul.f32 %v2225, 2.0
  %v2227 = vsel %vm199, %v2226, %v2225
  %v2228 = vxor.u32 %v2227, 2147483648
  %v2229 = vmul.f32 %v2228, 1.442695
  %v2230 = vpow.pop %v2229
  %v2231 = vadd.f32 %v2230, 1.0
  %v2232 = vrcp.pop %v2231
  %v2233 = vmul.f32 1.0, %v2232
  %v2234 = vmul.f32 %v2233, 2.0
  %v2235 = vsub.f32 %v2234, 1.0
  %v2236 = vsel %vm199, %v2235, %v2233
  %v2237 = vmul.f32 %v2236, %v1967
  %2239 = vrot.lane.b32.xlu0 %v2236, 64
  %v2240 = vpop.permute.xlu0 %2239
  %v2242 = vmul.f32 %v2236, %v2240
  %2244 = vrot.lane.b32.xlu0 %v2242, 32
  %v2245 = vpop.permute.xlu0 %2244
  %v2247 = vadd.f32 %v2237, %v2245
  %v2248 = vtanh.pop %v2247
  %2250 = vrot.lane.b32.xlu0 %v2248, 64
  %v2251 = vpop.permute.xlu0 %2250
  %v2253 = vmul.f32 %v2236, %v2251
  %2255 = vrot.lane.b32.xlu0 %v2253, 32
  %v2256 = vpop.permute.xlu0 %2255
  %2258 = vst.msk [vmem:[#allocation2 + $0x10] sm:$0xff] %vm200, %v2256
  %v2259 = vsel %vm200, %v2256, 0
  %2261 = vmatprep.subr.mxu0 0.0
  %2262 = vmatpush1.msra.mxu0 %v41
  %2263 = vmatprep.subr.mxu0 0.0
  %2264 = vmatpush1.msra.mxu0 %v42
  %2265 = vmatprep.subr.mxu0 0.0
  %2266 = vmatpush1.msra.mxu0 %v43
  %2267 = vmatprep.subr.mxu0 0.0
  %2268 = vmatpush1.msra.mxu0 %v44
  %2269 = vmatprep.subr.mxu0 0.0
  %2270 = vmatpush1.msra.mxu0 0.0
  %2271 = vmatprep.subr.mxu0 0.0
  %2272 = vmatpush1.msra.mxu0 0.0
  %2273 = vmatprep.subr.mxu0 0.0
  %2274 = vmatpush1.msra.mxu0 0.0
  %2275 = vmatprep.subr.mxu0 0.0
  %2276 = vmatpush1.msra.mxu0 0.0
  %2277 = vmatprep.subr.mxu0 0.0
  %2278 = vmatpush1.msra.mxu0 0.0
  %2279 = vmatprep.subr.mxu0 0.0
  %2280 = vmatpush1.msra.mxu0 0.0
  %2281 = vmatprep.subr.mxu0 0.0
  %2282 = vmatpush1.msra.mxu0 0.0
  %2283 = vmatprep.subr.mxu0 0.0
  %2284 = vmatpush1.msra.mxu0 0.0
  %2285 = vmatprep.subr.mxu0 0.0
  %2286 = vmatpush1.msra.mxu0 0.0
  %2287 = vmatprep.subr.mxu0 0.0
  %2288 = vmatpush1.msra.mxu0 0.0
  %2289 = vmatprep.subr.mxu0 0.0
  %2290 = vmatpush1.msra.mxu0 0.0
  %2291 = vmatprep.subr.mxu0 0.0
  %2292 = vmatpush1.msra.mxu0 0.0
  %2293 = vmatprep.subr.mxu0 0.0
  %2294 = vmatpush1.msra.mxu0 0.0
  %2295 = vmatprep.subr.mxu0 0.0
  %2296 = vmatpush1.msra.mxu0 0.0
  %2297 = vmatprep.subr.mxu0 0.0
  %2298 = vmatpush1.msra.mxu0 0.0
  %2299 = vmatprep.subr.mxu0 0.0
  %2300 = vmatpush1.msra.mxu0 0.0
  %2301 = vmatprep.subr.mxu0 0.0
  %2302 = vmatpush1.msra.mxu0 0.0
  %2303 = vmatprep.subr.mxu0 0.0
  %2304 = vmatpush1.msra.mxu0 0.0
  %2305 = vmatprep.subr.mxu0 0.0
  %2306 = vmatpush1.msra.mxu0 0.0
  %2307 = vmatprep.subr.mxu0 0.0
  %2308 = vmatpush1.msra.mxu0 0.0
  %2309 = vmatprep.subr.mxu0 0.0
  %2310 = vmatpush1.msra.mxu0 0.0
  %2311 = vmatprep.subr.mxu0 0.0
  %2312 = vmatpush1.msra.mxu0 0.0
  %2313 = vmatprep.subr.mxu0 0.0
  %2314 = vmatpush1.msra.mxu0 0.0
  %2315 = vmatprep.subr.mxu0 0.0
  %2316 = vmatpush1.msra.mxu0 0.0
  %2317 = vmatprep.subr.mxu0 0.0
  %2318 = vmatpush1.msra.mxu0 0.0
  %2319 = vmatprep.subr.mxu0 0.0
  %2320 = vmatpush1.msra.mxu0 0.0
  %2321 = vmatprep.subr.mxu0 0.0
  %2322 = vmatpush1.msra.mxu0 0.0
  %2323 = vmatprep.subr.mxu0 0.0
  %2324 = vmatpush1.msra.mxu0 0.0
  %2325 = vmatprep.mubr.f32.mxu0 0.0
  %2326 = vmatmul.mubr.f32.gmra.mrb[0].mxu0 %v2259
  %v2327 = vpop.f32.mrb[0].mxu0
  %v2328 = vadd.f32 0.0, %v2327
  %v2329 = vpop.f32.mrb[0].mxu0
  %2330 = vdwg.mxu0
  %2332 = vrot.lane.b32.xlu0 %v2082, 32
  %v2333 = vpop.permute.xlu0 %2332
  %v2334 = vsel %vm200, %v2333, 0
  %2336 = vmatprep.subr.mxu0 0.0
  %2337 = vmatpush1.msra.mxu0 %v33
  %2338 = vmatprep.subr.mxu0 0.0
  %2339 = vmatpush1.msra.mxu0 %v34
  %2340 = vmatprep.subr.mxu0 0.0
  %2341 = vmatpush1.msra.mxu0 %v35
  %2342 = vmatprep.subr.mxu0 0.0
  %2343 = vmatpush1.msra.mxu0 %v36
  %2344 = vmatprep.subr.mxu0 0.0
  %2345 = vmatpush1.msra.mxu0 0.0
  %2346 = vmatprep.subr.mxu0 0.0
  %2347 = vmatpush1.msra.mxu0 0.0
  %2348 = vmatprep.subr.mxu0 0.0
  %2349 = vmatpush1.msra.mxu0 0.0
  %2350 = vmatprep.subr.mxu0 0.0
  %2351 = vmatpush1.msra.mxu0 0.0
  %2352 = vmatprep.subr.mxu0 0.0
  %2353 = vmatpush1.msra.mxu0 0.0
  %2354 = vmatprep.subr.mxu0 0.0
  %2355 = vmatpush1.msra.mxu0 0.0
  %2356 = vmatprep.subr.mxu0 0.0
  %2357 = vmatpush1.msra.mxu0 0.0
  %2358 = vmatprep.subr.mxu0 0.0
  %2359 = vmatpush1.msra.mxu0 0.0
  %2360 = vmatprep.subr.mxu0 0.0
  %2361 = vmatpush1.msra.mxu0 0.0
  %2362 = vmatprep.subr.mxu0 0.0
  %2363 = vmatpush1.msra.mxu0 0.0
  %2364 = vmatprep.subr.mxu0 0.0
  %2365 = vmatpush1.msra.mxu0 0.0
  %2366 = vmatprep.subr.mxu0 0.0
  %2367 = vmatpush1.msra.mxu0 0.0
  %2368 = vmatprep.subr.mxu0 0.0
  %2369 = vmatpush1.msra.mxu0 0.0
  %2370 = vmatprep.subr.mxu0 0.0
  %2371 = vmatpush1.msra.mxu0 0.0
  %2372 = vmatprep.subr.mxu0 0.0
  %2373 = vmatpush1.msra.mxu0 0.0
  %2374 = vmatprep.subr.mxu0 0.0
  %2375 = vmatpush1.msra.mxu0 0.0
  %2376 = vmatprep.subr.mxu0 0.0
  %2377 = vmatpush1.msra.mxu0 0.0
  %2378 = vmatprep.subr.mxu0 0.0
  %2379 = vmatpush1.msra.mxu0 0.0
  %2380 = vmatprep.subr.mxu0 0.0
  %2381 = vmatpush1.msra.mxu0 0.0
  %2382 = vmatprep.subr.mxu0 0.0
  %2383 = vmatpush1.msra.mxu0 0.0
  %2384 = vmatprep.subr.mxu0 0.0
  %2385 = vmatpush1.msra.mxu0 0.0
  %2386 = vmatprep.subr.mxu0 0.0
  %2387 = vmatpush1.msra.mxu0 0.0
  %2388 = vmatprep.subr.mxu0 0.0
  %2389 = vmatpush1.msra.mxu0 0.0
  %2390 = vmatprep.subr.mxu0 0.0
  %2391 = vmatpush1.msra.mxu0 0.0
  %2392 = vmatprep.subr.mxu0 0.0
  %2393 = vmatpush1.msra.mxu0 0.0
  %2394 = vmatprep.subr.mxu0 0.0
  %2395 = vmatpush1.msra.mxu0 0.0
  %2396 = vmatprep.subr.mxu0 0.0
  %2397 = vmatpush1.msra.mxu0 0.0
  %2398 = vmatprep.subr.mxu0 0.0
  %2399 = vmatpush1.msra.mxu0 0.0
  %2400 = vmatprep.mubr.f32.mxu0 0.0
  %2401 = vmatmul.mubr.f32.gmra.mrb[0].mxu0 %v2334
  %v2402 = vpop.f32.mrb[0].mxu0
  %v2403 = vadd.f32 %v2328, %v2402
  %v2404 = vpop.f32.mrb[0].mxu0
  %2405 = vdwg.mxu0
  %v2406 = vadd.f32 %v2403, %v551
  %v2407 = vmul.f32 %v2406, 2.0
  %v2408 = vsel %vm199, %v2407, %v2406
  %v2409 = vxor.u32 %v2408, 2147483648
  %v2410 = vmul.f32 %v2409, 1.442695
  %v2411 = vpow.pop %v2410
  %v2412 = vadd.f32 %v2411, 1.0
  %v2413 = vrcp.pop %v2412
  %v2414 = vmul.f32 1.0, %v2413
  %v2415 = vmul.f32 %v2414, 2.0
  %v2416 = vsub.f32 %v2415, 1.0
  %v2417 = vsel %vm199, %v2416, %v2414
  %v2418 = vmul.f32 %v2417, %v2247
  %2420 = vrot.lane.b32.xlu0 %v2417, 64
  %v2421 = vpop.permute.xlu0 %2420
  %v2423 = vmul.f32 %v2417, %v2421
  %2425 = vrot.lane.b32.xlu0 %v2423, 32
  %v2426 = vpop.permute.xlu0 %2425
  %v2428 = vadd.f32 %v2418, %v2426
  %v2429 = vtanh.pop %v2428
  %2431 = vrot.lane.b32.xlu0 %v2429, 64
  %v2432 = vpop.permute.xlu0 %2431
  %v2434 = vmul.f32 %v2417, %v2432
  %2436 = vrot.lane.b32.xlu0 %v2434, 32
  %v2437 = vpop.permute.xlu0 %2436
  %2439 = vst.msk [vmem:[#allocation2 + $0x18] sm:$0xff] %vm200, %v2437
  %v2440 = vld [vmem:[#allocation2] sm:$0xff]
  %v2441 = vld [vmem:[#allocation2 + $0x8] sm:$0xff]
  %v2442 = vld [vmem:[#allocation2 + $0x10] sm:$0xff]
  %v2443 = vld [vmem:[#allocation2 + $0x18] sm:$0xff]
  %v2444 = vld [vmem:[%s7] sm:$0xff]
  %v2445 = vld [vmem:[%s7 + $0x8] sm:$0xff]
  %v2446 = vld [vmem:[%s7 + $0x10] sm:$0xff]
  %v2447 = vld [vmem:[%s7 + $0x18] sm:$0xff]
  %v2448 = vld [vmem:[%s8] sm:$0x1]
  %v2450 = vlaneseq
  %v2451 = vshrl.u32 %v2450, 7
  %v2452 = vsub.s32 0, %v2451
  %v2453 = vrot.slane %v2448, %v2452
  %v2456 = vsel %vm200, %v2440, 0
  %v2459 = vsel %vm200, %v2441, 0
  %v2462 = vsel %vm200, %v2442, 0
  %v2465 = vsel %vm200, %v2443, 0
  %2467 = vmatprep.subr.mxu0 0.0
  %2468 = vmatpush1.msra.mxu0 %v2444
  %2469 = vmatprep.subr.mxu0 0.0
  %2470 = vmatpush1.msra.mxu0 %v2445
  %2471 = vmatprep.subr.mxu0 0.0
  %2472 = vmatpush1.msra.mxu0 %v2446
  %2473 = vmatprep.subr.mxu0 0.0
  %2474 = vmatpush1.msra.mxu0 %v2447
  %2475 = vmatprep.subr.mxu0 0.0
  %2476 = vmatpush1.msra.mxu0 0.0
  %2477 = vmatprep.subr.mxu0 0.0
  %2478 = vmatpush1.msra.mxu0 0.0
  %2479 = vmatprep.subr.mxu0 0.0
  %2480 = vmatpush1.msra.mxu0 0.0
  %2481 = vmatprep.subr.mxu0 0.0
  %2482 = vmatpush1.msra.mxu0 0.0
  %2483 = vmatprep.subr.mxu0 0.0
  %2484 = vmatpush1.msra.mxu0 0.0
  %2485 = vmatprep.subr.mxu0 0.0
  %2486 = vmatpush1.msra.mxu0 0.0
  %2487 = vmatprep.subr.mxu0 0.0
  %2488 = vmatpush1.msra.mxu0 0.0
  %2489 = vmatprep.subr.mxu0 0.0
  %2490 = vmatpush1.msra.mxu0 0.0
  %2491 = vmatprep.subr.mxu0 0.0
  %2492 = vmatpush1.msra.mxu0 0.0
  %2493 = vmatprep.subr.mxu0 0.0
  %2494 = vmatpush1.msra.mxu0 0.0
  %2495 = vmatprep.subr.mxu0 0.0
  %2496 = vmatpush1.msra.mxu0 0.0
  %2497 = vmatprep.subr.mxu0 0.0
  %2498 = vmatpush1.msra.mxu0 0.0
  %2499 = vmatprep.subr.mxu0 0.0
  %2500 = vmatpush1.msra.mxu0 0.0
  %2501 = vmatprep.subr.mxu0 0.0
  %2502 = vmatpush1.msra.mxu0 0.0
  %2503 = vmatprep.subr.mxu0 0.0
  %2504 = vmatpush1.msra.mxu0 0.0
  %2505 = vmatprep.subr.mxu0 0.0
  %2506 = vmatpush1.msra.mxu0 0.0
  %2507 = vmatprep.subr.mxu0 0.0
  %2508 = vmatpush1.msra.mxu0 0.0
  %2509 = vmatprep.subr.mxu0 0.0
  %2510 = vmatpush1.msra.mxu0 0.0
  %2511 = vmatprep.subr.mxu0 0.0
  %2512 = vmatpush1.msra.mxu0 0.0
  %2513 = vmatprep.subr.mxu0 0.0
  %2514 = vmatpush1.msra.mxu0 0.0
  %2515 = vmatprep.subr.mxu0 0.0
  %2516 = vmatpush1.msra.mxu0 0.0
  %2517 = vmatprep.subr.mxu0 0.0
  %2518 = vmatpush1.msra.mxu0 0.0
  %2519 = vmatprep.subr.mxu0 0.0
  %2520 = vmatpush1.msra.mxu0 0.0
  %2521 = vmatprep.subr.mxu0 0.0
  %2522 = vmatpush1.msra.mxu0 0.0
  %2523 = vmatprep.subr.mxu0 0.0
  %2524 = vmatpush1.msra.mxu0 0.0
  %2525 = vmatprep.subr.mxu0 0.0
  %2526 = vmatpush1.msra.mxu0 0.0
  %2527 = vmatprep.subr.mxu0 0.0
  %2528 = vmatpush1.msra.mxu0 0.0
  %2529 = vmatprep.subr.mxu0 0.0
  %2530 = vmatpush1.msra.mxu0 0.0
  %2531 = vmatprep.mubr.f32.mxu0 0.0
  %2532 = vmatmul.mubr.f32.gmra.mrb[0].mxu0 %v2456
  %v2533 = vpop.f32.mrb[0].mxu0
  %v2534 = vadd.f32 %v2453, %v2533
  %v2535 = vpop.f32.mrb[0].mxu0
  %2536 = vmatprep.mubr.f32.mxu0 0.0
  %2537 = vmatmul.mubr.f32.gmra.mrb[0].mxu0 %v2459
  %v2538 = vpop.f32.mrb[0].mxu0
  %v2539 = vadd.f32 %v2453, %v2538
  %v2540 = vpop.f32.mrb[0].mxu0
  %2541 = vmatprep.mubr.f32.mxu0 0.0
  %2542 = vmatmul.mubr.f32.gmra.mrb[0].mxu0 %v2462
  %v2543 = vpop.f32.mrb[0].mxu0
  %v2544 = vadd.f32 %v2453, %v2543
  %v2545 = vpop.f32.mrb[0].mxu0
  %2546 = vmatprep.mubr.f32.mxu0 0.0
  %2547 = vmatmul.mubr.f32.gmra.mrb[0].mxu0 %v2465
  %v2548 = vpop.f32.mrb[0].mxu0
  %v2549 = vadd.f32 %v2453, %v2548
  %v2550 = vpop.f32.mrb[0].mxu0
  %2551 = vdwg.mxu0
  %v2552 = vxor.u32 %v2534, 2147483648
  %v2553 = vxor.u32 %v2539, 2147483648
  %v2554 = vxor.u32 %v2544, 2147483648
  %v2555 = vxor.u32 %v2549, 2147483648
  %v2556 = vmul.f32 %v2552, 1.442695
  %v2557 = vpow.pop %v2556
  %v2558 = vmul.f32 %v2553, 1.442695
  %v2559 = vpow.pop %v2558
  %v2560 = vmul.f32 %v2554, 1.442695
  %v2561 = vpow.pop %v2560
  %v2562 = vmul.f32 %v2555, 1.442695
  %v2563 = vpow.pop %v2562
  %v2564 = vadd.f32 %v2557, 1.0
  %v2565 = vadd.f32 %v2559, 1.0
  %v2566 = vadd.f32 %v2561, 1.0
  %v2567 = vadd.f32 %v2563, 1.0
  %v2568 = vrcp.pop %v2564
  %v2569 = vmul.f32 1.0, %v2568
  %v2570 = vrcp.pop %v2565
  %v2571 = vmul.f32 1.0, %v2570
  %v2572 = vrcp.pop %v2566
  %v2573 = vmul.f32 1.0, %v2572
  %v2574 = vrcp.pop %v2567
  %v2575 = vmul.f32 1.0, %v2574
  %vm2576 = vcmask 15360
  %2577 = vst.msk [vmem:[%s9] sm:$0xff] %vm2576, %v2569
  %2578 = vst.msk [vmem:[%s9 + $0x8] sm:$0xff] %vm2576, %v2571
  %2579 = vst.msk [vmem:[%s9 + $0x10] sm:$0xff] %vm2576, %v2573
  %2580 = vst.msk [vmem:[%s9 + $0x18] sm:$0xff] %vm2576, %v2575
  // Predicated region
  $region38: #{model_lstm_forward.1} parent=0 // pred_check
    _
  $region39: #{model_lstm_forward.1} parent=0 // pred_check_branch
    %2582 = sbr.rel (0) target = $region41
  $region40: #{model_lstm_forward.1} parent=0 // pred_region
    _
  $region41: #{model_lstm_forward.1} parent=0 // pred_fallthru
    _
  // Predicated region
  $region42: #{model_lstm_forward.1} parent=0 // pred_check
    _
  $region43: #{model_lstm_forward.1} parent=0 // pred_check_branch
    %2584 = sbr.rel (0) target = $region45
  $region44: #{model_lstm_forward.1} parent=0 // pred_region
    _
  $region45: #{model_lstm_forward.1} parent=0 // pred_fallthru
    _

</llo_original>
